<compile_context>
chip_gen: v6e
topology: v6e:2x2x1
jax: 0.10.0
libtpu: 0.0.40
codegen_flags: <defaults>
</compile_context>

<pallas_src>
import functools
import math

import jax
import jax.numpy as jnp
from jax import lax
from jax.experimental import pallas as pl
from jax.experimental.pallas import tpu as pltpu


# ----------------------------------------------------------------------------
# Shared slab layouts (used identically by wrapper packing and kernel slicing)
# ----------------------------------------------------------------------------
def _m32_layout(F, H, A, P):
    """Row-height<=max(H,F*A,P) weight slab, lane-concatenated blocks."""
    entries = (("wxT", F * A, F * H), ("wqkv", H, 3 * H), ("wo", H, H),
               ("w1", H, P), ("w2", P, H), ("fw", H, 3 * H))
    offs, c = {}, 0
    for name, r, w in entries:
        offs[name] = (c, r, w)
        c += w
    return entries, offs, c, max(r for _, r, _ in entries)


def _sc_layout(B, T, F):
    """Small selector / mask / decay constants slab."""
    FB, TB = F * B, T * B
    entries = (("mha_mask", FB, FB), ("fin_mask", B, FB), ("featsum", F, FB),
               ("featexp", FB, F), ("featmask", FB, FB), ("selTB", B, TB),
               ("decay", TB, 1))
    offs, c = {}, 0
    for name, r, w in entries:
        offs[name] = (c, r, w)
        c += w
    return entries, offs, c, max(r for _, r, _ in entries)


def _vec_layout(F, H, P):
    """One-row bias / rate vectors stacked into a single slab (one row each)."""
    FH, H3 = F * H, 3 * H
    entries = (("b_r", FH), ("b_z", FH), ("b_in", FH), ("b_hn", FH),
               ("bqkv", H3), ("bo", H), ("b1", P), ("b2", H), ("fb", H3),
               ("rate", F))
    rows = {name: i for i, (name, _) in enumerate(entries)}
    widths = dict(entries)
    return entries, rows, widths, max(w for _, w in entries)


# ----------------------------------------------------------------------------
# Fused kernel: per-feature GRUs + time attention + MHA/DeCov + FFN + final QKV
# ----------------------------------------------------------------------------
def concare_fused_kernel(x_ref, hh_ref, f_ref, vec_ref, m32_ref, sc_ref,
                         out_ref, attn_ref, decov_ref,
                         *, T, B, F, H, NH, P, A):
    f32 = jnp.float32
    FH, FA, TB, FB = F * H, F * A, T * B, F * B
    DK, H3, FH3 = H // NH, 3 * H, 3 * F * H

    def mm(a, b):
        return jnp.dot(a, b, preferred_element_type=f32)

    def mm_t(a, b):  # a @ b.T  (contract the lane axes of both operands)
        return lax.dot_general(a, b, (((1,), (1,)), ((), ())),
                               preferred_element_type=f32)

    # ---- packed-slab views --------------------------------------------------
    _, m32_off, _, _ = _m32_layout(F, H, A, P)
    _, sc_off, _, _ = _sc_layout(B, T, F)
    _, vec_row, vec_wid, _ = _vec_layout(F, H, P)

    def m32(name):
        c, r, w = m32_off[name]
        return m32_ref[0:r, c:c + w]

    def sc(name):
        c, r, w = sc_off[name]
        return sc_ref[0:r, c:c + w]

    def vec(name):
        i = vec_row[name]
        return vec_ref[i:i + 1, 0:vec_wid[name]]

    whh_all = hh_ref[:, 0:FH3]              # (FH, 3FH) fused [r | z | n] blockdiag
    wt_bd = hh_ref[:, FH3:FH3 + FA]         # (FH, F*A)
    wih_all = f_ref[:, 0:FH3]               # (F, 3FH)
    expand = f_ref[:, FH3:FH3 + FH]         # (F, FH) = kron(I_F, ones(1,H))

    b_r, b_z = vec("b_r"), vec("b_z")
    b_in, b_hn = vec("b_in"), vec("b_hn")

    # ---- phase 1: F per-feature GRUs folded onto the lane axis --------------
    gi = mm(x_ref[...], wih_all)            # (T*B, 3FH): all input projections
    h = jnp.zeros((B, FH), f32)
    hs = []
    for t in range(T):                      # T is small -> unrolled recurrence
        lo = t * B
        if t == 0:
            g = jnp.zeros((B, FH3), f32)
        else:
            g = mm(h, whh_all)              # ONE fused hidden->hidden matmul/step
        r = jax.nn.sigmoid(gi[lo:lo + B, 0:FH] + g[:, 0:FH] + b_r)
        z = jax.nn.sigmoid(gi[lo:lo + B, FH:2 * FH] + g[:, FH:2 * FH] + b_z)
        n = jnp.tanh(gi[lo:lo + B, 2 * FH:FH3] + b_in +
                     r * (g[:, 2 * FH:FH3] + b_hn))
        h = (1.0 - z) * n + z * h
        hs.append(h)
    hs_all = jnp.concatenate(hs, axis=0)    # (T*B, FH): packed hidden sequence

    # ---- phase 2: SingleAttention('new', time_aware), all features at once ---
    selTB = sc("selTB")                     # (B, T*B): sums over t per batch row
    decay = sc("decay")                     # (T*B, 1): T - t per stacked row
    rate = vec("rate")                      # (1, F)

    p = mm(mm(h, wt_bd), m32("wxT"))        # (B, FH): q @ Wx^T per feature block
    p_full = jnp.concatenate([p] * T, axis=0)            # (T*B, FH)
    d_all = mm_t(hs_all * p_full, expand)                 # (T*B, F) per-feature dots
    sig = jax.nn.sigmoid(d_all)
    denom = jax.nn.sigmoid(rate) * (jnp.log(2.72 + (1.0 - sig)) * decay)
    e_all = jnp.maximum(sig / denom, 0.0)                  # exact divide (logits)

    e_max = e_all[0:B]
    for t in range(1, T):
        e_max = jnp.maximum(e_max, e_all[t * B:(t + 1) * B])
    w_all = jnp.exp(e_all - jnp.concatenate([e_max] * T, axis=0))
    inv = pl.reciprocal(mm(selTB, w_all), approx=True)     # (B, F) softmax denom
    posi = mm(selTB, mm(w_all, expand) * hs_all) * mm(inv, expand)   # (B, FH)

    # ---- relayout (B, F*H) -> (F*B, H): feature-major rows (f, b) ------------
    posi2 = jnp.concatenate([posi[:, f * H:(f + 1) * H] for f in range(F)],
                            axis=0)                         # (F*B, H)

    # ---- phase 3: MultiHeadedAttention over features (batched over B) --------
    qkv = mm(posi2, m32("wqkv")) + vec("bqkv")             # (F*B, 3H), one matmul
    q, k, v = qkv[:, 0:H], qkv[:, H:2 * H], qkv[:, 2 * H:H3]
    mha_mask = sc("mha_mask")                              # (FB, FB) additive mask
    scale = 1.0 / math.sqrt(DK)
    ctx_heads = []
    for hd in range(NH):
        lo = hd * DK
        s = mm_t(q[:, lo:lo + DK], k[:, lo:lo + DK]) * scale + mha_mask
        mx = jnp.max(s, axis=-1, keepdims=True)
        ex = jnp.exp(s - mx)
        pa = ex * pl.reciprocal(jnp.sum(ex, axis=-1, keepdims=True), approx=True)
        ctx_heads.append(mm(pa, v[:, lo:lo + DK]))         # (FB, DK)
    ctx_all = jnp.concatenate(ctx_heads, axis=1)           # (FB, H) head-major lanes

    # ---- DeCov loss (pre final_linear contexts), batched over features -------
    featsum, featexp, featmask = sc("featsum"), sc("featexp"), sc("featmask")
    xc = ctx_all - mm(featexp, mm(featsum, ctx_all) * (1.0 / B))    # centered
    gram = mm_t(xc, xc)                                    # (FB, FB) batch Gram
    frob2 = jnp.sum(jnp.sum(gram * gram * featmask, axis=-1, keepdims=True),
                    axis=0, keepdims=True)                 # (1, 1)
    colsq = mm(featsum, xc * xc)                           # (F, H)
    diag2 = jnp.sum(jnp.sum(colsq * colsq, axis=-1, keepdims=True),
                    axis=0, keepdims=True)                 # (1, 1)
    decov_ref[...] = (0.5 / float((B - 1) * (B - 1))) * (frob2 - diag2)

    # ---- residual + PositionwiseFeedForward residual --------------------------
    c1 = posi2 + mm(ctx_all, m32("wo")) + vec("bo")        # (F*B, H)
    ff = jnp.maximum(mm(c1, m32("w1")) + vec("b1"), 0.0)   # (F*B, P)
    c2 = c1 + mm(ff, m32("w2")) + vec("b2")                # (F*B, H)

    # ---- FinalAttentionQKV('mul') ---------------------------------------------
    fqkv = mm(c2, m32("fw")) + vec("fb")                   # (F*B, 3H), one matmul
    qf = fqkv[(F - 1) * B:FB, 0:H]                         # last-feature rows (B,H)
    kf, vf = fqkv[:, H:2 * H], fqkv[:, 2 * H:H3]
    e = mm_t(qf, kf) + sc("fin_mask")                      # (B, F*B) masked scores
    mx = jnp.max(e, axis=-1, keepdims=True)
    ex = jnp.exp(e - mx)
    a = ex * pl.reciprocal(jnp.sum(ex, axis=-1, keepdims=True), approx=True)
    out_ref[...] = mm(a, vf)                               # (B, H), one store
    attn_ref[...] = mm(a, featexp)                         # (B, F), one store


# ----------------------------------------------------------------------------
# Wrapper: layout plumbing (block-diagonal folds, gate fusion, slab packing)
# ----------------------------------------------------------------------------
def concare_forward(x, params, *, num_head):
    # x: [B, T, F]; returns (out [B, H], attn [B, F], decov_loss scalar)
    B, T, F = x.shape
    H = params["gru_whh"].shape[-1]
    A = params["attn_wt"].shape[-1]
    P = params["w1"].shape[-1]
    FH, FA, TB, FB, H3 = F * H, F * A, T * B, F * B, 3 * H
    f32 = jnp.float32
    eye = jnp.eye(F, dtype=f32)

    # --- GRU: block-diagonal fold of F per-feature GRUs + gate fusion ---------
    wih, whh = params["gru_wih"], params["gru_whh"]                  # (F,3,H),(F,3,H,H)
    wih_bd = jnp.einsum("pf,fgj->gpfj", eye, wih).reshape(3, F, FH)
    whh_bd = jnp.einsum("pf,fgij->gpifj", eye, whh).reshape(3, FH, FH)
    wih_all = jnp.concatenate([wih_bd[0], wih_bd[1], wih_bd[2]], axis=1)   # (F, 3FH)
    whh_all = jnp.concatenate([whh_bd[0], whh_bd[1], whh_bd[2]], axis=1)   # (FH, 3FH)
    bih, bhh = params["gru_bih"], params["gru_bhh"]
    b_r = (bih[:, 0] + bhh[:, 0]).reshape(1, FH)
    b_z = (bih[:, 1] + bhh[:, 1]).reshape(1, FH)
    b_in = bih[:, 2].reshape(1, FH)
    b_hn = bhh[:, 2].reshape(1, FH)

    # --- SingleAttention('new') block-diagonal fold ----------------------------
    wt_bd = jnp.einsum("pf,fia->pifa", eye, params["attn_wt"]).reshape(FH, FA)
    wx_bd = jnp.einsum("pf,fia->pifa", eye, params["attn_wx"]).reshape(FH, FA)
    wxT_bd = wx_bd.T                                                   # (FA, FH)
    expand = jnp.kron(eye, jnp.ones((1, H), f32))                      # (F, FH)
    rate = params["attn_rate"].reshape(1, F)

    # --- fused projection slabs -------------------------------------------------
    wqkv = jnp.concatenate([params["wq"], params["wk"], params["wv"]], axis=1)
    bqkv = jnp.concatenate([params["bq"], params["bk"], params["bv"]], axis=1)
    fw_all = jnp.concatenate([params["fwq"], params["fwk"], params["fwv"]], axis=1)
    fb_all = jnp.concatenate([params["fbq"], params["fbk"], params["fbv"]], axis=1)

    # --- slab 1/2: big weight slabs (row-height FH and F) ------------------------
    hh_slab = jnp.concatenate([whh_all, wt_bd], axis=1).astype(f32)    # (FH, 3FH+FA)
    f_slab = jnp.concatenate([wih_all, expand], axis=1).astype(f32)    # (F, 4FH)

    # --- slab 3: one-row bias / rate vectors -------------------------------------
    vec_entries, _, _, vec_w = _vec_layout(F, H, P)
    vec_parts = dict(b_r=b_r, b_z=b_z, b_in=b_in, b_hn=b_hn, bqkv=bqkv,
                     bo=params["bo"], b1=params["b1"], b2=params["b2"],
                     fb=fb_all, rate=rate)
    vec_slab = jnp.concatenate(
        [jnp.pad(vec_parts[n].reshape(1, -1).astype(f32),
                 ((0, 0), (0, vec_w - w))) for n, w in vec_entries], axis=0)

    # --- slab 4: 32-row weight slab ----------------------------------------------
    m32_entries, _, _, m32_h = _m32_layout(F, H, A, P)
    m32_parts = dict(wxT=wxT_bd, wqkv=wqkv, wo=params["wo"],
                     w1=params["w1"], w2=params["w2"], fw=fw_all)
    m32_slab = jnp.concatenate(
        [jnp.pad(m32_parts[n].astype(f32), ((0, m32_h - r), (0, 0)))
         for n, r, _ in m32_entries], axis=1)

    # --- slab 5: selectors / masks / decay constants ------------------------------
    NEG = -1e9
    ridx = jnp.arange(FB)
    mha_mask = jnp.where((ridx[:, None] % B) == (ridx[None, :] % B),
                         0.0, NEG).astype(f32)                         # (FB, FB)
    fin_mask = jnp.where(jnp.arange(B)[:, None] == (ridx[None, :] % B),
                         0.0, NEG).astype(f32)                         # (B, FB)
    featsum = jnp.kron(eye, jnp.ones((1, B), f32))                     # (F, FB)
    featexp = featsum.T                                                # (FB, F)
    featmask = (featexp @ featsum).astype(f32)                         # (FB, FB)
    selTB = jnp.kron(jnp.ones((1, T), f32), jnp.eye(B, dtype=f32))     # (B, TB)
    decay = (T - (jnp.arange(TB) // B)).astype(f32).reshape(TB, 1)     # (TB, 1)
    sc_entries, _, _, sc_h = _sc_layout(B, T, F)
    sc_parts = dict(mha_mask=mha_mask, fin_mask=fin_mask, featsum=featsum,
                    featexp=featexp, featmask=featmask, selTB=selTB, decay=decay)
    sc_slab = jnp.concatenate(
        [jnp.pad(sc_parts[n].astype(f32), ((0, sc_h - r), (0, 0)))
         for n, r, _ in sc_entries], axis=1)

    # --- slab 6: the input, rows ordered (t, b) ------------------------------------
    x_tb = jnp.transpose(x, (1, 0, 2)).reshape(TB, F).astype(f32)

    inputs = (x_tb, hh_slab, f_slab, vec_slab, m32_slab, sc_slab)
    vspec = pl.BlockSpec(memory_space=pltpu.MemorySpace.VMEM)
    out, attn, decov = pl.pallas_call(
        functools.partial(concare_fused_kernel,
                          T=T, B=B, F=F, H=H, NH=num_head, P=P, A=A),
        out_shape=(jax.ShapeDtypeStruct((B, H), f32),
                   jax.ShapeDtypeStruct((B, F), f32),
                   jax.ShapeDtypeStruct((1, 1), f32)),
        in_specs=[vspec] * len(inputs),
        out_specs=(vspec, vspec, vspec),
    )(*inputs)
    return out, attn, decov[0, 0]


# ----------------------------------------------------------------------------
# Pure-JAX reference (mirrors the PyTorch semantics) for a correctness check.
# ----------------------------------------------------------------------------
def concare_reference(x, params, num_head):
    B, T, F = x.shape
    H = params["gru_whh"].shape[-1]
    feats = []
    for f in range(F):
        wih, whh = params["gru_wih"][f], params["gru_whh"][f]
        bih, bhh = params["gru_bih"][f], params["gru_bhh"][f]
        h = jnp.zeros((B, H), jnp.float32)
        hs = []
        for t in range(T):
            xt = x[:, t, f][:, None]
            r = jax.nn.sigmoid(xt * wih[0] + bih[0] + h @ whh[0] + bhh[0])
            z = jax.nn.sigmoid(xt * wih[1] + bih[1] + h @ whh[1] + bhh[1])
            n = jnp.tanh(xt * wih[2] + bih[2] + r * (h @ whh[2] + bhh[2]))
            h = (1.0 - z) * n + z * h
            hs.append(h)
        seq = jnp.stack(hs, axis=1)                                 # (B, T, H)
        wt, wx = params["attn_wt"][f], params["attn_wx"][f]
        rate = params["attn_rate"][f, 0, 0]
        q = h @ wt
        k = seq @ wx
        dot = jnp.einsum("ba,bta->bt", q, k)
        decay = jnp.arange(T - 1, -1, -1, dtype=jnp.float32)[None, :] + 1.0
        sig = jax.nn.sigmoid(dot)
        denom = jax.nn.sigmoid(rate) * (jnp.log(2.72 + (1.0 - sig)) * decay)
        e = jnp.maximum(sig / denom, 0.0)
        a = jax.nn.softmax(e, axis=1)
        feats.append(jnp.einsum("bt,bth->bh", a, seq))
    posi = jnp.stack(feats, axis=1)                                  # (B, F, H)

    DK = H // num_head
    q = posi @ params["wq"] + params["bq"]
    k = posi @ params["wk"] + params["bk"]
    v = posi @ params["wv"] + params["bv"]
    split = lambda z: z.reshape(B, F, num_head, DK).transpose(0, 2, 1, 3)
    qh, kh, vh = split(q), split(k), split(v)
    scores = jnp.einsum("bhfd,bhgd->bhfg", qh, kh) / math.sqrt(DK)
    p = jax.nn.softmax(scores, axis=-1)
    ctx = jnp.einsum("bhfg,bhgd->bhfd", p, vh).transpose(0, 2, 1, 3).reshape(B, F, H)

    decov = 0.0
    for i in range(F):
        ci = ctx[:, i, :]
        xc = ci - jnp.mean(ci, axis=0, keepdims=True)
        cov = xc.T @ xc / (B - 1)
        decov += 0.5 * (jnp.sum(cov ** 2) - jnp.sum(jnp.diag(cov) ** 2))

    c1 = posi + (ctx @ params["wo"] + params["bo"])
    ff = jnp.maximum(c1 @ params["w1"] + params["b1"], 0.0)
    c2 = c1 + (ff @ params["w2"] + params["b2"])
    qf = c2[:, -1, :] @ params["fwq"] + params["fbq"]
    kf = c2 @ params["fwk"] + params["fbk"]
    vf = c2 @ params["fwv"] + params["fbv"]
    e = jnp.einsum("bfh,bh->bf", kf, qf)
    a = jax.nn.softmax(e, axis=1)
    out = jnp.einsum("bf,bfh->bh", a, vf)
    return out, a, decov


# ----------------------------------------------------------------------------
# Deterministic synthetic parameters (shapes from the module __init__).
# ----------------------------------------------------------------------------
def init_params(key, F, H, A, P):
    ks = jax.random.split(key, 24)
    rn = lambda k, shp, s=0.2: (jax.random.normal(k, shp) * s).astype(jnp.float32)
    return dict(
        gru_wih=rn(ks[0], (F, 3, H)), gru_whh=rn(ks[1], (F, 3, H, H)),
        gru_bih=rn(ks[2], (F, 3, H), 0.05), gru_bhh=rn(ks[3], (F, 3, H), 0.05),
        attn_wt=rn(ks[4], (F, H, A)), attn_wx=rn(ks[5], (F, H, A)),
        attn_rate=jnp.full((F, 1, 1), 0.8, jnp.float32),
        wq=rn(ks[6], (H, H)), bq=rn(ks[7], (1, H), 0.05),
        wk=rn(ks[8], (H, H)), bk=rn(ks[9], (1, H), 0.05),
        wv=rn(ks[10], (H, H)), bv=rn(ks[11], (1, H), 0.05),
        wo=rn(ks[12], (H, H)), bo=rn(ks[13], (1, H), 0.05),
        w1=rn(ks[14], (H, P)), b1=rn(ks[15], (1, P), 0.05),
        w2=rn(ks[16], (P, H)), b2=rn(ks[17], (1, H), 0.05),
        fwq=rn(ks[18], (H, H)), fbq=rn(ks[19], (1, H), 0.05),
        fwk=rn(ks[20], (H, H)), fbk=rn(ks[21], (1, H), 0.05),
        fwv=rn(ks[22], (H, H)), fbv=rn(ks[23], (1, H), 0.05),
    )


if __name__ == "__main__":
    B, T, F = 2, 8, 4            # batch, sequence len, lab_dim
    H, NH, P, A = 32, 4, 16, 8   # hidden_dim, num_head, pe_hidden, SingleAttention hidden

    key = jax.random.PRNGKey(0)
    kx, kp = jax.random.split(key)
    x = jax.random.normal(kx, (B, T, F), dtype=jnp.float32)
    params = init_params(kp, F, H, A, P)

    fwd = jax.jit(functools.partial(concare_forward, num_head=NH))
    out, attn, decov = fwd(x, params)
    jax.block_until_ready((out, attn, decov))

    ref_out, ref_attn, ref_decov = concare_reference(x, params, NH)
    assert out.shape == (B, H) and attn.shape == (B, F)
    # Tolerances cover the EUP approximate reciprocals used in the softmaxes.
    assert jnp.allclose(out, ref_out, rtol=2e-2, atol=2e-2), "output mismatch"
    assert jnp.allclose(attn, ref_attn, rtol=2e-2, atol=2e-2), "attention mismatch"
    assert jnp.allclose(decov, ref_decov, rtol=2e-2, atol=2e-2), "decov loss mismatch"

    print("KERNEL_OK")
</pallas_src>

<mosaic_0001>
module attributes {stable_mosaic.version = 11 : i64} {
  func.func @concare_fused_kernel(%arg0: memref<16x4xf32, #tpu.memory_space<vmem>>, %arg1: memref<128x416xf32, #tpu.memory_space<vmem>>, %arg2: memref<4x512xf32, #tpu.memory_space<vmem>>, %arg3: memref<10x128xf32, #tpu.memory_space<vmem>>, %arg4: memref<32x400xf32, #tpu.memory_space<vmem>>, %arg5: memref<16x53xf32, #tpu.memory_space<vmem>>, %arg6: memref<2x32xf32, #tpu.memory_space<vmem>>, %arg7: memref<2x4xf32, #tpu.memory_space<vmem>>, %arg8: memref<1x1xf32, #tpu.memory_space<vmem>>) attributes {dimension_semantics = [], scalar_prefetch = 0 : i64, scratch_operands = 0 : i64, tpu.core_type = #tpu.core_type<tc>} {
    %c0 = arith.constant 0 : index
    %c0_0 = arith.constant 0 : index
    %0 = vector.load %arg1[%c0, %c0_0] : memref<128x416xf32, #tpu.memory_space<vmem>>, vector<128x384xf32>
    %c0_1 = arith.constant 0 : index
    %c384 = arith.constant 384 : index
    %1 = vector.load %arg1[%c0_1, %c384] : memref<128x416xf32, #tpu.memory_space<vmem>>, vector<128x32xf32>
    %c0_2 = arith.constant 0 : index
    %c0_3 = arith.constant 0 : index
    %2 = vector.load %arg2[%c0_2, %c0_3] : memref<4x512xf32, #tpu.memory_space<vmem>>, vector<4x384xf32>
    %c0_4 = arith.constant 0 : index
    %c384_5 = arith.constant 384 : index
    %3 = vector.load %arg2[%c0_4, %c384_5] : memref<4x512xf32, #tpu.memory_space<vmem>>, vector<4x128xf32>
    %c0_6 = arith.constant 0 : index
    %c0_7 = arith.constant 0 : index
    %4 = vector.load %arg3[%c0_6, %c0_7] : memref<10x128xf32, #tpu.memory_space<vmem>>, vector<1x128xf32>
    %c1 = arith.constant 1 : index
    %c0_8 = arith.constant 0 : index
    %5 = vector.load %arg3[%c1, %c0_8] : memref<10x128xf32, #tpu.memory_space<vmem>>, vector<1x128xf32>
    %c2 = arith.constant 2 : index
    %c0_9 = arith.constant 0 : index
    %6 = vector.load %arg3[%c2, %c0_9] : memref<10x128xf32, #tpu.memory_space<vmem>>, vector<1x128xf32>
    %c3 = arith.constant 3 : index
    %c0_10 = arith.constant 0 : index
    %7 = vector.load %arg3[%c3, %c0_10] : memref<10x128xf32, #tpu.memory_space<vmem>>, vector<1x128xf32>
    %c0_11 = arith.constant 0 : index
    %c0_12 = arith.constant 0 : index
    %8 = vector.load %arg0[%c0_11, %c0_12] : memref<16x4xf32, #tpu.memory_space<vmem>>, vector<16x4xf32>
    %cst = arith.constant dense<0.000000e+00> : vector<16x384xf32>
    %9 = tpu.matmul %8, %2, %cst {dimension_numbers = #tpu.dot_dimension_numbers<[1], [0], [0], [1], [0, 0, 1, 1], [], []>} : vector<16x4xf32>, vector<4x384xf32>, vector<16x384xf32> -> vector<16x384xf32>
    %cst_13 = arith.constant 0.000000e+00 : f32
    %10 = vector.broadcast %cst_13 : f32 to vector<2x128xf32>
    %cst_14 = arith.constant 0.000000e+00 : f32
    %11 = vector.broadcast %cst_14 : f32 to vector<2x384xf32>
    %12 = vector.extract_strided_slice %9 {offsets = [0, 0], sizes = [2, 128], strides = [1, 1]} : vector<16x384xf32> to vector<2x128xf32>
    %13 = vector.extract_strided_slice %11 {offsets = [0, 0], sizes = [2, 128], strides = [1, 1]} : vector<2x384xf32> to vector<2x128xf32>
    %14 = arith.addf %12, %13 : vector<2x128xf32>
    %15 = vector.broadcast %4 : vector<1x128xf32> to vector<2x128xf32>
    %16 = arith.addf %14, %15 : vector<2x128xf32>
    %17 = arith.negf %16 : vector<2x128xf32>
    %18 = math.exp %17 : vector<2x128xf32>
    %cst_15 = arith.constant 1.000000e+00 : f32
    %19 = vector.broadcast %cst_15 : f32 to vector<2x128xf32>
    %20 = arith.addf %19, %18 : vector<2x128xf32>
    %21 = arith.divf %19, %20 : vector<2x128xf32>
    %22 = vector.extract_strided_slice %9 {offsets = [0, 128], sizes = [2, 128], strides = [1, 1]} : vector<16x384xf32> to vector<2x128xf32>
    %23 = vector.extract_strided_slice %11 {offsets = [0, 128], sizes = [2, 128], strides = [1, 1]} : vector<2x384xf32> to vector<2x128xf32>
    %24 = arith.addf %22, %23 : vector<2x128xf32>
    %25 = vector.broadcast %5 : vector<1x128xf32> to vector<2x128xf32>
    %26 = arith.addf %24, %25 : vector<2x128xf32>
    %27 = arith.negf %26 : vector<2x128xf32>
    %28 = math.exp %27 : vector<2x128xf32>
    %cst_16 = arith.constant 1.000000e+00 : f32
    %29 = vector.broadcast %cst_16 : f32 to vector<2x128xf32>
    %30 = arith.addf %29, %28 : vector<2x128xf32>
    %31 = arith.divf %29, %30 : vector<2x128xf32>
    %32 = vector.extract_strided_slice %9 {offsets = [0, 256], sizes = [2, 128], strides = [1, 1]} : vector<16x384xf32> to vector<2x128xf32>
    %33 = vector.broadcast %6 : vector<1x128xf32> to vector<2x128xf32>
    %34 = arith.addf %32, %33 : vector<2x128xf32>
    %35 = vector.extract_strided_slice %11 {offsets = [0, 256], sizes = [2, 128], strides = [1, 1]} : vector<2x384xf32> to vector<2x128xf32>
    %36 = vector.broadcast %7 : vector<1x128xf32> to vector<2x128xf32>
    %37 = arith.addf %35, %36 : vector<2x128xf32>
    %38 = arith.mulf %21, %37 : vector<2x128xf32>
    %39 = arith.addf %34, %38 : vector<2x128xf32>
    %40 = math.tanh %39 : vector<2x128xf32>
    %cst_17 = arith.constant 1.000000e+00 : f32
    %41 = vector.broadcast %cst_17 : f32 to vector<2x128xf32>
    %42 = arith.subf %41, %31 : vector<2x128xf32>
    %43 = arith.mulf %42, %40 : vector<2x128xf32>
    %44 = arith.mulf %31, %10 : vector<2x128xf32>
    %45 = arith.addf %43, %44 : vector<2x128xf32>
    %cst_18 = arith.constant dense<0.000000e+00> : vector<2x384xf32>
    %46 = tpu.matmul %45, %0, %cst_18 {dimension_numbers = #tpu.dot_dimension_numbers<[1], [0], [0], [1], [0, 0, 1, 1], [], []>} : vector<2x128xf32>, vector<128x384xf32>, vector<2x384xf32> -> vector<2x384xf32>
    %47 = vector.extract_strided_slice %9 {offsets = [2, 0], sizes = [2, 128], strides = [1, 1]} : vector<16x384xf32> to vector<2x128xf32>
    %48 = vector.extract_strided_slice %46 {offsets = [0, 0], sizes = [2, 128], strides = [1, 1]} : vector<2x384xf32> to vector<2x128xf32>
    %49 = arith.addf %47, %48 : vector<2x128xf32>
    %50 = vector.broadcast %4 : vector<1x128xf32> to vector<2x128xf32>
    %51 = arith.addf %49, %50 : vector<2x128xf32>
    %52 = arith.negf %51 : vector<2x128xf32>
    %53 = math.exp %52 : vector<2x128xf32>
    %cst_19 = arith.constant 1.000000e+00 : f32
    %54 = vector.broadcast %cst_19 : f32 to vector<2x128xf32>
    %55 = arith.addf %54, %53 : vector<2x128xf32>
    %56 = arith.divf %54, %55 : vector<2x128xf32>
    %57 = vector.extract_strided_slice %9 {offsets = [2, 128], sizes = [2, 128], strides = [1, 1]} : vector<16x384xf32> to vector<2x128xf32>
    %58 = vector.extract_strided_slice %46 {offsets = [0, 128], sizes = [2, 128], strides = [1, 1]} : vector<2x384xf32> to vector<2x128xf32>
    %59 = arith.addf %57, %58 : vector<2x128xf32>
    %60 = vector.broadcast %5 : vector<1x128xf32> to vector<2x128xf32>
    %61 = arith.addf %59, %60 : vector<2x128xf32>
    %62 = arith.negf %61 : vector<2x128xf32>
    %63 = math.exp %62 : vector<2x128xf32>
    %cst_20 = arith.constant 1.000000e+00 : f32
    %64 = vector.broadcast %cst_20 : f32 to vector<2x128xf32>
    %65 = arith.addf %64, %63 : vector<2x128xf32>
    %66 = arith.divf %64, %65 : vector<2x128xf32>
    %67 = vector.extract_strided_slice %9 {offsets = [2, 256], sizes = [2, 128], strides = [1, 1]} : vector<16x384xf32> to vector<2x128xf32>
    %68 = vector.broadcast %6 : vector<1x128xf32> to vector<2x128xf32>
    %69 = arith.addf %67, %68 : vector<2x128xf32>
    %70 = vector.extract_strided_slice %46 {offsets = [0, 256], sizes = [2, 128], strides = [1, 1]} : vector<2x384xf32> to vector<2x128xf32>
    %71 = vector.broadcast %7 : vector<1x128xf32> to vector<2x128xf32>
    %72 = arith.addf %70, %71 : vector<2x128xf32>
    %73 = arith.mulf %56, %72 : vector<2x128xf32>
    %74 = arith.addf %69, %73 : vector<2x128xf32>
    %75 = math.tanh %74 : vector<2x128xf32>
    %cst_21 = arith.constant 1.000000e+00 : f32
    %76 = vector.broadcast %cst_21 : f32 to vector<2x128xf32>
    %77 = arith.subf %76, %66 : vector<2x128xf32>
    %78 = arith.mulf %77, %75 : vector<2x128xf32>
    %79 = arith.mulf %66, %45 : vector<2x128xf32>
    %80 = arith.addf %78, %79 : vector<2x128xf32>
    %cst_22 = arith.constant dense<0.000000e+00> : vector<2x384xf32>
    %81 = tpu.matmul %80, %0, %cst_22 {dimension_numbers = #tpu.dot_dimension_numbers<[1], [0], [0], [1], [0, 0, 1, 1], [], []>} : vector<2x128xf32>, vector<128x384xf32>, vector<2x384xf32> -> vector<2x384xf32>
    %82 = vector.extract_strided_slice %9 {offsets = [4, 0], sizes = [2, 128], strides = [1, 1]} : vector<16x384xf32> to vector<2x128xf32>
    %83 = vector.extract_strided_slice %81 {offsets = [0, 0], sizes = [2, 128], strides = [1, 1]} : vector<2x384xf32> to vector<2x128xf32>
    %84 = arith.addf %82, %83 : vector<2x128xf32>
    %85 = vector.broadcast %4 : vector<1x128xf32> to vector<2x128xf32>
    %86 = arith.addf %84, %85 : vector<2x128xf32>
    %87 = arith.negf %86 : vector<2x128xf32>
    %88 = math.exp %87 : vector<2x128xf32>
    %cst_23 = arith.constant 1.000000e+00 : f32
    %89 = vector.broadcast %cst_23 : f32 to vector<2x128xf32>
    %90 = arith.addf %89, %88 : vector<2x128xf32>
    %91 = arith.divf %89, %90 : vector<2x128xf32>
    %92 = vector.extract_strided_slice %9 {offsets = [4, 128], sizes = [2, 128], strides = [1, 1]} : vector<16x384xf32> to vector<2x128xf32>
    %93 = vector.extract_strided_slice %81 {offsets = [0, 128], sizes = [2, 128], strides = [1, 1]} : vector<2x384xf32> to vector<2x128xf32>
    %94 = arith.addf %92, %93 : vector<2x128xf32>
    %95 = vector.broadcast %5 : vector<1x128xf32> to vector<2x128xf32>
    %96 = arith.addf %94, %95 : vector<2x128xf32>
    %97 = arith.negf %96 : vector<2x128xf32>
    %98 = math.exp %97 : vector<2x128xf32>
    %cst_24 = arith.constant 1.000000e+00 : f32
    %99 = vector.broadcast %cst_24 : f32 to vector<2x128xf32>
    %100 = arith.addf %99, %98 : vector<2x128xf32>
    %101 = arith.divf %99, %100 : vector<2x128xf32>
    %102 = vector.extract_strided_slice %9 {offsets = [4, 256], sizes = [2, 128], strides = [1, 1]} : vector<16x384xf32> to vector<2x128xf32>
    %103 = vector.broadcast %6 : vector<1x128xf32> to vector<2x128xf32>
    %104 = arith.addf %102, %103 : vector<2x128xf32>
    %105 = vector.extract_strided_slice %81 {offsets = [0, 256], sizes = [2, 128], strides = [1, 1]} : vector<2x384xf32> to vector<2x128xf32>
    %106 = vector.broadcast %7 : vector<1x128xf32> to vector<2x128xf32>
    %107 = arith.addf %105, %106 : vector<2x128xf32>
    %108 = arith.mulf %91, %107 : vector<2x128xf32>
    %109 = arith.addf %104, %108 : vector<2x128xf32>
    %110 = math.tanh %109 : vector<2x128xf32>
    %cst_25 = arith.constant 1.000000e+00 : f32
    %111 = vector.broadcast %cst_25 : f32 to vector<2x128xf32>
    %112 = arith.subf %111, %101 : vector<2x128xf32>
    %113 = arith.mulf %112, %110 : vector<2x128xf32>
    %114 = arith.mulf %101, %80 : vector<2x128xf32>
    %115 = arith.addf %113, %114 : vector<2x128xf32>
    %cst_26 = arith.constant dense<0.000000e+00> : vector<2x384xf32>
    %116 = tpu.matmul %115, %0, %cst_26 {dimension_numbers = #tpu.dot_dimension_numbers<[1], [0], [0], [1], [0, 0, 1, 1], [], []>} : vector<2x128xf32>, vector<128x384xf32>, vector<2x384xf32> -> vector<2x384xf32>
    %117 = vector.extract_strided_slice %9 {offsets = [6, 0], sizes = [2, 128], strides = [1, 1]} : vector<16x384xf32> to vector<2x128xf32>
    %118 = vector.extract_strided_slice %116 {offsets = [0, 0], sizes = [2, 128], strides = [1, 1]} : vector<2x384xf32> to vector<2x128xf32>
    %119 = arith.addf %117, %118 : vector<2x128xf32>
    %120 = vector.broadcast %4 : vector<1x128xf32> to vector<2x128xf32>
    %121 = arith.addf %119, %120 : vector<2x128xf32>
    %122 = arith.negf %121 : vector<2x128xf32>
    %123 = math.exp %122 : vector<2x128xf32>
    %cst_27 = arith.constant 1.000000e+00 : f32
    %124 = vector.broadcast %cst_27 : f32 to vector<2x128xf32>
    %125 = arith.addf %124, %123 : vector<2x128xf32>
    %126 = arith.divf %124, %125 : vector<2x128xf32>
    %127 = vector.extract_strided_slice %9 {offsets = [6, 128], sizes = [2, 128], strides = [1, 1]} : vector<16x384xf32> to vector<2x128xf32>
    %128 = vector.extract_strided_slice %116 {offsets = [0, 128], sizes = [2, 128], strides = [1, 1]} : vector<2x384xf32> to vector<2x128xf32>
    %129 = arith.addf %127, %128 : vector<2x128xf32>
    %130 = vector.broadcast %5 : vector<1x128xf32> to vector<2x128xf32>
    %131 = arith.addf %129, %130 : vector<2x128xf32>
    %132 = arith.negf %131 : vector<2x128xf32>
    %133 = math.exp %132 : vector<2x128xf32>
    %cst_28 = arith.constant 1.000000e+00 : f32
    %134 = vector.broadcast %cst_28 : f32 to vector<2x128xf32>
    %135 = arith.addf %134, %133 : vector<2x128xf32>
    %136 = arith.divf %134, %135 : vector<2x128xf32>
    %137 = vector.extract_strided_slice %9 {offsets = [6, 256], sizes = [2, 128], strides = [1, 1]} : vector<16x384xf32> to vector<2x128xf32>
    %138 = vector.broadcast %6 : vector<1x128xf32> to vector<2x128xf32>
    %139 = arith.addf %137, %138 : vector<2x128xf32>
    %140 = vector.extract_strided_slice %116 {offsets = [0, 256], sizes = [2, 128], strides = [1, 1]} : vector<2x384xf32> to vector<2x128xf32>
    %141 = vector.broadcast %7 : vector<1x128xf32> to vector<2x128xf32>
    %142 = arith.addf %140, %141 : vector<2x128xf32>
    %143 = arith.mulf %126, %142 : vector<2x128xf32>
    %144 = arith.addf %139, %143 : vector<2x128xf32>
    %145 = math.tanh %144 : vector<2x128xf32>
    %cst_29 = arith.constant 1.000000e+00 : f32
    %146 = vector.broadcast %cst_29 : f32 to vector<2x128xf32>
    %147 = arith.subf %146, %136 : vector<2x128xf32>
    %148 = arith.mulf %147, %145 : vector<2x128xf32>
    %149 = arith.mulf %136, %115 : vector<2x128xf32>
    %150 = arith.addf %148, %149 : vector<2x128xf32>
    %cst_30 = arith.constant dense<0.000000e+00> : vector<2x384xf32>
    %151 = tpu.matmul %150, %0, %cst_30 {dimension_numbers = #tpu.dot_dimension_numbers<[1], [0], [0], [1], [0, 0, 1, 1], [], []>} : vector<2x128xf32>, vector<128x384xf32>, vector<2x384xf32> -> vector<2x384xf32>
    %152 = vector.extract_strided_slice %9 {offsets = [8, 0], sizes = [2, 128], strides = [1, 1]} : vector<16x384xf32> to vector<2x128xf32>
    %153 = vector.extract_strided_slice %151 {offsets = [0, 0], sizes = [2, 128], strides = [1, 1]} : vector<2x384xf32> to vector<2x128xf32>
    %154 = arith.addf %152, %153 : vector<2x128xf32>
    %155 = vector.broadcast %4 : vector<1x128xf32> to vector<2x128xf32>
    %156 = arith.addf %154, %155 : vector<2x128xf32>
    %157 = arith.negf %156 : vector<2x128xf32>
    %158 = math.exp %157 : vector<2x128xf32>
    %cst_31 = arith.constant 1.000000e+00 : f32
    %159 = vector.broadcast %cst_31 : f32 to vector<2x128xf32>
    %160 = arith.addf %159, %158 : vector<2x128xf32>
    %161 = arith.divf %159, %160 : vector<2x128xf32>
    %162 = vector.extract_strided_slice %9 {offsets = [8, 128], sizes = [2, 128], strides = [1, 1]} : vector<16x384xf32> to vector<2x128xf32>
    %163 = vector.extract_strided_slice %151 {offsets = [0, 128], sizes = [2, 128], strides = [1, 1]} : vector<2x384xf32> to vector<2x128xf32>
    %164 = arith.addf %162, %163 : vector<2x128xf32>
    %165 = vector.broadcast %5 : vector<1x128xf32> to vector<2x128xf32>
    %166 = arith.addf %164, %165 : vector<2x128xf32>
    %167 = arith.negf %166 : vector<2x128xf32>
    %168 = math.exp %167 : vector<2x128xf32>
    %cst_32 = arith.constant 1.000000e+00 : f32
    %169 = vector.broadcast %cst_32 : f32 to vector<2x128xf32>
    %170 = arith.addf %169, %168 : vector<2x128xf32>
    %171 = arith.divf %169, %170 : vector<2x128xf32>
    %172 = vector.extract_strided_slice %9 {offsets = [8, 256], sizes = [2, 128], strides = [1, 1]} : vector<16x384xf32> to vector<2x128xf32>
    %173 = vector.broadcast %6 : vector<1x128xf32> to vector<2x128xf32>
    %174 = arith.addf %172, %173 : vector<2x128xf32>
    %175 = vector.extract_strided_slice %151 {offsets = [0, 256], sizes = [2, 128], strides = [1, 1]} : vector<2x384xf32> to vector<2x128xf32>
    %176 = vector.broadcast %7 : vector<1x128xf32> to vector<2x128xf32>
    %177 = arith.addf %175, %176 : vector<2x128xf32>
    %178 = arith.mulf %161, %177 : vector<2x128xf32>
    %179 = arith.addf %174, %178 : vector<2x128xf32>
    %180 = math.tanh %179 : vector<2x128xf32>
    %cst_33 = arith.constant 1.000000e+00 : f32
    %181 = vector.broadcast %cst_33 : f32 to vector<2x128xf32>
    %182 = arith.subf %181, %171 : vector<2x128xf32>
    %183 = arith.mulf %182, %180 : vector<2x128xf32>
    %184 = arith.mulf %171, %150 : vector<2x128xf32>
    %185 = arith.addf %183, %184 : vector<2x128xf32>
    %cst_34 = arith.constant dense<0.000000e+00> : vector<2x384xf32>
    %186 = tpu.matmul %185, %0, %cst_34 {dimension_numbers = #tpu.dot_dimension_numbers<[1], [0], [0], [1], [0, 0, 1, 1], [], []>} : vector<2x128xf32>, vector<128x384xf32>, vector<2x384xf32> -> vector<2x384xf32>
    %187 = vector.extract_strided_slice %9 {offsets = [10, 0], sizes = [2, 128], strides = [1, 1]} : vector<16x384xf32> to vector<2x128xf32>
    %188 = vector.extract_strided_slice %186 {offsets = [0, 0], sizes = [2, 128], strides = [1, 1]} : vector<2x384xf32> to vector<2x128xf32>
    %189 = arith.addf %187, %188 : vector<2x128xf32>
    %190 = vector.broadcast %4 : vector<1x128xf32> to vector<2x128xf32>
    %191 = arith.addf %189, %190 : vector<2x128xf32>
    %192 = arith.negf %191 : vector<2x128xf32>
    %193 = math.exp %192 : vector<2x128xf32>
    %cst_35 = arith.constant 1.000000e+00 : f32
    %194 = vector.broadcast %cst_35 : f32 to vector<2x128xf32>
    %195 = arith.addf %194, %193 : vector<2x128xf32>
    %196 = arith.divf %194, %195 : vector<2x128xf32>
    %197 = vector.extract_strided_slice %9 {offsets = [10, 128], sizes = [2, 128], strides = [1, 1]} : vector<16x384xf32> to vector<2x128xf32>
    %198 = vector.extract_strided_slice %186 {offsets = [0, 128], sizes = [2, 128], strides = [1, 1]} : vector<2x384xf32> to vector<2x128xf32>
    %199 = arith.addf %197, %198 : vector<2x128xf32>
    %200 = vector.broadcast %5 : vector<1x128xf32> to vector<2x128xf32>
    %201 = arith.addf %199, %200 : vector<2x128xf32>
    %202 = arith.negf %201 : vector<2x128xf32>
    %203 = math.exp %202 : vector<2x128xf32>
    %cst_36 = arith.constant 1.000000e+00 : f32
    %204 = vector.broadcast %cst_36 : f32 to vector<2x128xf32>
    %205 = arith.addf %204, %203 : vector<2x128xf32>
    %206 = arith.divf %204, %205 : vector<2x128xf32>
    %207 = vector.extract_strided_slice %9 {offsets = [10, 256], sizes = [2, 128], strides = [1, 1]} : vector<16x384xf32> to vector<2x128xf32>
    %208 = vector.broadcast %6 : vector<1x128xf32> to vector<2x128xf32>
    %209 = arith.addf %207, %208 : vector<2x128xf32>
    %210 = vector.extract_strided_slice %186 {offsets = [0, 256], sizes = [2, 128], strides = [1, 1]} : vector<2x384xf32> to vector<2x128xf32>
    %211 = vector.broadcast %7 : vector<1x128xf32> to vector<2x128xf32>
    %212 = arith.addf %210, %211 : vector<2x128xf32>
    %213 = arith.mulf %196, %212 : vector<2x128xf32>
    %214 = arith.addf %209, %213 : vector<2x128xf32>
    %215 = math.tanh %214 : vector<2x128xf32>
    %cst_37 = arith.constant 1.000000e+00 : f32
    %216 = vector.broadcast %cst_37 : f32 to vector<2x128xf32>
    %217 = arith.subf %216, %206 : vector<2x128xf32>
    %218 = arith.mulf %217, %215 : vector<2x128xf32>
    %219 = arith.mulf %206, %185 : vector<2x128xf32>
    %220 = arith.addf %218, %219 : vector<2x128xf32>
    %cst_38 = arith.constant dense<0.000000e+00> : vector<2x384xf32>
    %221 = tpu.matmul %220, %0, %cst_38 {dimension_numbers = #tpu.dot_dimension_numbers<[1], [0], [0], [1], [0, 0, 1, 1], [], []>} : vector<2x128xf32>, vector<128x384xf32>, vector<2x384xf32> -> vector<2x384xf32>
    %222 = vector.extract_strided_slice %9 {offsets = [12, 0], sizes = [2, 128], strides = [1, 1]} : vector<16x384xf32> to vector<2x128xf32>
    %223 = vector.extract_strided_slice %221 {offsets = [0, 0], sizes = [2, 128], strides = [1, 1]} : vector<2x384xf32> to vector<2x128xf32>
    %224 = arith.addf %222, %223 : vector<2x128xf32>
    %225 = vector.broadcast %4 : vector<1x128xf32> to vector<2x128xf32>
    %226 = arith.addf %224, %225 : vector<2x128xf32>
    %227 = arith.negf %226 : vector<2x128xf32>
    %228 = math.exp %227 : vector<2x128xf32>
    %cst_39 = arith.constant 1.000000e+00 : f32
    %229 = vector.broadcast %cst_39 : f32 to vector<2x128xf32>
    %230 = arith.addf %229, %228 : vector<2x128xf32>
    %231 = arith.divf %229, %230 : vector<2x128xf32>
    %232 = vector.extract_strided_slice %9 {offsets = [12, 128], sizes = [2, 128], strides = [1, 1]} : vector<16x384xf32> to vector<2x128xf32>
    %233 = vector.extract_strided_slice %221 {offsets = [0, 128], sizes = [2, 128], strides = [1, 1]} : vector<2x384xf32> to vector<2x128xf32>
    %234 = arith.addf %232, %233 : vector<2x128xf32>
    %235 = vector.broadcast %5 : vector<1x128xf32> to vector<2x128xf32>
    %236 = arith.addf %234, %235 : vector<2x128xf32>
    %237 = arith.negf %236 : vector<2x128xf32>
    %238 = math.exp %237 : vector<2x128xf32>
    %cst_40 = arith.constant 1.000000e+00 : f32
    %239 = vector.broadcast %cst_40 : f32 to vector<2x128xf32>
    %240 = arith.addf %239, %238 : vector<2x128xf32>
    %241 = arith.divf %239, %240 : vector<2x128xf32>
    %242 = vector.extract_strided_slice %9 {offsets = [12, 256], sizes = [2, 128], strides = [1, 1]} : vector<16x384xf32> to vector<2x128xf32>
    %243 = vector.broadcast %6 : vector<1x128xf32> to vector<2x128xf32>
    %244 = arith.addf %242, %243 : vector<2x128xf32>
    %245 = vector.extract_strided_slice %221 {offsets = [0, 256], sizes = [2, 128], strides = [1, 1]} : vector<2x384xf32> to vector<2x128xf32>
    %246 = vector.broadcast %7 : vector<1x128xf32> to vector<2x128xf32>
    %247 = arith.addf %245, %246 : vector<2x128xf32>
    %248 = arith.mulf %231, %247 : vector<2x128xf32>
    %249 = arith.addf %244, %248 : vector<2x128xf32>
    %250 = math.tanh %249 : vector<2x128xf32>
    %cst_41 = arith.constant 1.000000e+00 : f32
    %251 = vector.broadcast %cst_41 : f32 to vector<2x128xf32>
    %252 = arith.subf %251, %241 : vector<2x128xf32>
    %253 = arith.mulf %252, %250 : vector<2x128xf32>
    %254 = arith.mulf %241, %220 : vector<2x128xf32>
    %255 = arith.addf %253, %254 : vector<2x128xf32>
    %cst_42 = arith.constant dense<0.000000e+00> : vector<2x384xf32>
    %256 = tpu.matmul %255, %0, %cst_42 {dimension_numbers = #tpu.dot_dimension_numbers<[1], [0], [0], [1], [0, 0, 1, 1], [], []>} : vector<2x128xf32>, vector<128x384xf32>, vector<2x384xf32> -> vector<2x384xf32>
    %257 = vector.extract_strided_slice %9 {offsets = [14, 0], sizes = [2, 128], strides = [1, 1]} : vector<16x384xf32> to vector<2x128xf32>
    %258 = vector.extract_strided_slice %256 {offsets = [0, 0], sizes = [2, 128], strides = [1, 1]} : vector<2x384xf32> to vector<2x128xf32>
    %259 = arith.addf %257, %258 : vector<2x128xf32>
    %260 = vector.broadcast %4 : vector<1x128xf32> to vector<2x128xf32>
    %261 = arith.addf %259, %260 : vector<2x128xf32>
    %262 = arith.negf %261 : vector<2x128xf32>
    %263 = math.exp %262 : vector<2x128xf32>
    %cst_43 = arith.constant 1.000000e+00 : f32
    %264 = vector.broadcast %cst_43 : f32 to vector<2x128xf32>
    %265 = arith.addf %264, %263 : vector<2x128xf32>
    %266 = arith.divf %264, %265 : vector<2x128xf32>
    %267 = vector.extract_strided_slice %9 {offsets = [14, 128], sizes = [2, 128], strides = [1, 1]} : vector<16x384xf32> to vector<2x128xf32>
    %268 = vector.extract_strided_slice %256 {offsets = [0, 128], sizes = [2, 128], strides = [1, 1]} : vector<2x384xf32> to vector<2x128xf32>
    %269 = arith.addf %267, %268 : vector<2x128xf32>
    %270 = vector.broadcast %5 : vector<1x128xf32> to vector<2x128xf32>
    %271 = arith.addf %269, %270 : vector<2x128xf32>
    %272 = arith.negf %271 : vector<2x128xf32>
    %273 = math.exp %272 : vector<2x128xf32>
    %cst_44 = arith.constant 1.000000e+00 : f32
    %274 = vector.broadcast %cst_44 : f32 to vector<2x128xf32>
    %275 = arith.addf %274, %273 : vector<2x128xf32>
    %276 = arith.divf %274, %275 : vector<2x128xf32>
    %277 = vector.extract_strided_slice %9 {offsets = [14, 256], sizes = [2, 128], strides = [1, 1]} : vector<16x384xf32> to vector<2x128xf32>
    %278 = vector.broadcast %6 : vector<1x128xf32> to vector<2x128xf32>
    %279 = arith.addf %277, %278 : vector<2x128xf32>
    %280 = vector.extract_strided_slice %256 {offsets = [0, 256], sizes = [2, 128], strides = [1, 1]} : vector<2x384xf32> to vector<2x128xf32>
    %281 = vector.broadcast %7 : vector<1x128xf32> to vector<2x128xf32>
    %282 = arith.addf %280, %281 : vector<2x128xf32>
    %283 = arith.mulf %266, %282 : vector<2x128xf32>
    %284 = arith.addf %279, %283 : vector<2x128xf32>
    %285 = math.tanh %284 : vector<2x128xf32>
    %cst_45 = arith.constant 1.000000e+00 : f32
    %286 = vector.broadcast %cst_45 : f32 to vector<2x128xf32>
    %287 = arith.subf %286, %276 : vector<2x128xf32>
    %288 = arith.mulf %287, %285 : vector<2x128xf32>
    %289 = arith.mulf %276, %255 : vector<2x128xf32>
    %290 = arith.addf %288, %289 : vector<2x128xf32>
    %291 = tpu.concatenate %45, %80, %115, %150, %185, %220, %255, %290 in 0 : vector<2x128xf32>, vector<2x128xf32>, vector<2x128xf32>, vector<2x128xf32>, vector<2x128xf32>, vector<2x128xf32>, vector<2x128xf32>, vector<2x128xf32> -> vector<16x128xf32>
    %c0_46 = arith.constant 0 : index
    %c36 = arith.constant 36 : index
    %292 = vector.load %arg5[%c0_46, %c36] : memref<16x53xf32, #tpu.memory_space<vmem>>, vector<2x16xf32>
    %c0_47 = arith.constant 0 : index
    %c52 = arith.constant 52 : index
    %293 = vector.load %arg5[%c0_47, %c52] : memref<16x53xf32, #tpu.memory_space<vmem>>, vector<16x1xf32>
    %c9 = arith.constant 9 : index
    %c0_48 = arith.constant 0 : index
    %294 = vector.load %arg3[%c9, %c0_48] : memref<10x128xf32, #tpu.memory_space<vmem>>, vector<1x4xf32>
    %cst_49 = arith.constant dense<0.000000e+00> : vector<2x32xf32>
    %295 = tpu.matmul %290, %1, %cst_49 {dimension_numbers = #tpu.dot_dimension_numbers<[1], [0], [0], [1], [0, 0, 1, 1], [], []>} : vector<2x128xf32>, vector<128x32xf32>, vector<2x32xf32> -> vector<2x32xf32>
    %c0_50 = arith.constant 0 : index
    %c0_51 = arith.constant 0 : index
    %296 = vector.load %arg4[%c0_50, %c0_51] : memref<32x400xf32, #tpu.memory_space<vmem>>, vector<32x128xf32>
    %cst_52 = arith.constant dense<0.000000e+00> : vector<2x128xf32>
    %297 = tpu.matmul %295, %296, %cst_52 {dimension_numbers = #tpu.dot_dimension_numbers<[1], [0], [0], [1], [0, 0, 1, 1], [], []>} : vector<2x32xf32>, vector<32x128xf32>, vector<2x128xf32> -> vector<2x128xf32>
    %298 = tpu.concatenate %297, %297, %297, %297, %297, %297, %297, %297 in 0 : vector<2x128xf32>, vector<2x128xf32>, vector<2x128xf32>, vector<2x128xf32>, vector<2x128xf32>, vector<2x128xf32>, vector<2x128xf32>, vector<2x128xf32> -> vector<16x128xf32>
    %299 = arith.mulf %291, %298 : vector<16x128xf32>
    %cst_53 = arith.constant dense<0.000000e+00> : vector<16x4xf32>
    %300 = tpu.matmul %299, %3, %cst_53 {dimension_numbers = #tpu.dot_dimension_numbers<[1], [1], [0], [0], [0, 0, 1, 0], [], []>} : vector<16x128xf32>, vector<4x128xf32>, vector<16x4xf32> -> vector<16x4xf32>
    %301 = arith.negf %300 : vector<16x4xf32>
    %302 = math.exp %301 : vector<16x4xf32>
    %cst_54 = arith.constant 1.000000e+00 : f32
    %303 = vector.broadcast %cst_54 : f32 to vector<16x4xf32>
    %304 = arith.addf %303, %302 : vector<16x4xf32>
    %305 = arith.divf %303, %304 : vector<16x4xf32>
    %306 = arith.negf %294 : vector<1x4xf32>
    %307 = math.exp %306 : vector<1x4xf32>
    %cst_55 = arith.constant 1.000000e+00 : f32
    %308 = vector.broadcast %cst_55 : f32 to vector<1x4xf32>
    %309 = arith.addf %308, %307 : vector<1x4xf32>
    %310 = arith.divf %308, %309 : vector<1x4xf32>
    %cst_56 = arith.constant 1.000000e+00 : f32
    %311 = vector.broadcast %cst_56 : f32 to vector<16x4xf32>
    %312 = arith.subf %311, %305 : vector<16x4xf32>
    %cst_57 = arith.constant 2.720000e+00 : f32
    %313 = vector.broadcast %cst_57 : f32 to vector<16x4xf32>
    %314 = arith.addf %313, %312 : vector<16x4xf32>
    %315 = math.log %314 : vector<16x4xf32>
    %316 = vector.broadcast %293 : vector<16x1xf32> to vector<16x4xf32>
    %317 = arith.mulf %315, %316 : vector<16x4xf32>
    %318 = vector.broadcast %310 : vector<1x4xf32> to vector<16x4xf32>
    %319 = arith.mulf %318, %317 : vector<16x4xf32>
    %320 = arith.divf %305, %319 : vector<16x4xf32>
    %cst_58 = arith.constant 0.000000e+00 : f32
    %321 = vector.broadcast %cst_58 : f32 to vector<16x4xf32>
    %322 = arith.maximumf %320, %321 : vector<16x4xf32>
    %323 = vector.extract_strided_slice %322 {offsets = [0, 0], sizes = [2, 4], strides = [1, 1]} : vector<16x4xf32> to vector<2x4xf32>
    %324 = vector.extract_strided_slice %322 {offsets = [2, 0], sizes = [2, 4], strides = [1, 1]} : vector<16x4xf32> to vector<2x4xf32>
    %325 = arith.maximumf %323, %324 : vector<2x4xf32>
    %326 = vector.extract_strided_slice %322 {offsets = [4, 0], sizes = [2, 4], strides = [1, 1]} : vector<16x4xf32> to vector<2x4xf32>
    %327 = arith.maximumf %325, %326 : vector<2x4xf32>
    %328 = vector.extract_strided_slice %322 {offsets = [6, 0], sizes = [2, 4], strides = [1, 1]} : vector<16x4xf32> to vector<2x4xf32>
    %329 = arith.maximumf %327, %328 : vector<2x4xf32>
    %330 = vector.extract_strided_slice %322 {offsets = [8, 0], sizes = [2, 4], strides = [1, 1]} : vector<16x4xf32> to vector<2x4xf32>
    %331 = arith.maximumf %329, %330 : vector<2x4xf32>
    %332 = vector.extract_strided_slice %322 {offsets = [10, 0], sizes = [2, 4], strides = [1, 1]} : vector<16x4xf32> to vector<2x4xf32>
    %333 = arith.maximumf %331, %332 : vector<2x4xf32>
    %334 = vector.extract_strided_slice %322 {offsets = [12, 0], sizes = [2, 4], strides = [1, 1]} : vector<16x4xf32> to vector<2x4xf32>
    %335 = arith.maximumf %333, %334 : vector<2x4xf32>
    %336 = vector.extract_strided_slice %322 {offsets = [14, 0], sizes = [2, 4], strides = [1, 1]} : vector<16x4xf32> to vector<2x4xf32>
    %337 = arith.maximumf %335, %336 : vector<2x4xf32>
    %338 = tpu.concatenate %337, %337, %337, %337, %337, %337, %337, %337 in 0 : vector<2x4xf32>, vector<2x4xf32>, vector<2x4xf32>, vector<2x4xf32>, vector<2x4xf32>, vector<2x4xf32>, vector<2x4xf32>, vector<2x4xf32> -> vector<16x4xf32>
    %339 = arith.subf %322, %338 : vector<16x4xf32>
    %340 = math.exp %339 : vector<16x4xf32>
    %cst_59 = arith.constant dense<0.000000e+00> : vector<2x4xf32>
    %341 = tpu.matmul %292, %340, %cst_59 {dimension_numbers = #tpu.dot_dimension_numbers<[1], [0], [0], [1], [0, 0, 1, 1], [], []>} : vector<2x16xf32>, vector<16x4xf32>, vector<2x4xf32> -> vector<2x4xf32>
    %342 = tpu.reciprocal %341 {approx = true} : vector<2x4xf32> -> vector<2x4xf32>
    %cst_60 = arith.constant dense<0.000000e+00> : vector<16x128xf32>
    %343 = tpu.matmul %340, %3, %cst_60 {dimension_numbers = #tpu.dot_dimension_numbers<[1], [0], [0], [1], [0, 0, 1, 1], [], []>} : vector<16x4xf32>, vector<4x128xf32>, vector<16x128xf32> -> vector<16x128xf32>
    %344 = arith.mulf %343, %291 : vector<16x128xf32>
    %cst_61 = arith.constant dense<0.000000e+00> : vector<2x128xf32>
    %345 = tpu.matmul %292, %344, %cst_61 {dimension_numbers = #tpu.dot_dimension_numbers<[1], [0], [0], [1], [0, 0, 1, 1], [], []>} : vector<2x16xf32>, vector<16x128xf32>, vector<2x128xf32> -> vector<2x128xf32>
    %cst_62 = arith.constant dense<0.000000e+00> : vector<2x128xf32>
    %346 = tpu.matmul %342, %3, %cst_62 {dimension_numbers = #tpu.dot_dimension_numbers<[1], [0], [0], [1], [0, 0, 1, 1], [], []>} : vector<2x4xf32>, vector<4x128xf32>, vector<2x128xf32> -> vector<2x128xf32>
    %347 = arith.mulf %345, %346 : vector<2x128xf32>
    %348 = vector.extract_strided_slice %347 {offsets = [0, 0], sizes = [2, 32], strides = [1, 1]} : vector<2x128xf32> to vector<2x32xf32>
    %349 = vector.extract_strided_slice %347 {offsets = [0, 32], sizes = [2, 32], strides = [1, 1]} : vector<2x128xf32> to vector<2x32xf32>
    %350 = vector.extract_strided_slice %347 {offsets = [0, 64], sizes = [2, 32], strides = [1, 1]} : vector<2x128xf32> to vector<2x32xf32>
    %351 = vector.extract_strided_slice %347 {offsets = [0, 96], sizes = [2, 32], strides = [1, 1]} : vector<2x128xf32> to vector<2x32xf32>
    %352 = tpu.concatenate %348, %349, %350, %351 in 0 : vector<2x32xf32>, vector<2x32xf32>, vector<2x32xf32>, vector<2x32xf32> -> vector<8x32xf32>
    %c0_63 = arith.constant 0 : index
    %c128 = arith.constant 128 : index
    %353 = vector.load %arg4[%c0_63, %c128] : memref<32x400xf32, #tpu.memory_space<vmem>>, vector<32x96xf32>
    %cst_64 = arith.constant dense<0.000000e+00> : vector<8x96xf32>
    %354 = tpu.matmul %352, %353, %cst_64 {dimension_numbers = #tpu.dot_dimension_numbers<[1], [0], [0], [1], [0, 0, 1, 1], [], []>} : vector<8x32xf32>, vector<32x96xf32>, vector<8x96xf32> -> vector<8x96xf32>
    %c4 = arith.constant 4 : index
    %c0_65 = arith.constant 0 : index
    %355 = vector.load %arg3[%c4, %c0_65] : memref<10x128xf32, #tpu.memory_space<vmem>>, vector<1x96xf32>
    %356 = vector.broadcast %355 : vector<1x96xf32> to vector<8x96xf32>
    %357 = arith.addf %354, %356 : vector<8x96xf32>
    %358 = vector.extract_strided_slice %357 {offsets = [0, 0], sizes = [8, 32], strides = [1, 1]} : vector<8x96xf32> to vector<8x32xf32>
    %359 = vector.extract_strided_slice %357 {offsets = [0, 32], sizes = [8, 32], strides = [1, 1]} : vector<8x96xf32> to vector<8x32xf32>
    %360 = vector.extract_strided_slice %357 {offsets = [0, 64], sizes = [8, 32], strides = [1, 1]} : vector<8x96xf32> to vector<8x32xf32>
    %c0_66 = arith.constant 0 : index
    %c0_67 = arith.constant 0 : index
    %361 = vector.load %arg5[%c0_66, %c0_67] : memref<16x53xf32, #tpu.memory_space<vmem>>, vector<8x8xf32>
    %362 = vector.extract_strided_slice %358 {offsets = [0, 0], sizes = [8, 8], strides = [1, 1]} : vector<8x32xf32> to vector<8x8xf32>
    %363 = vector.extract_strided_slice %359 {offsets = [0, 0], sizes = [8, 8], strides = [1, 1]} : vector<8x32xf32> to vector<8x8xf32>
    %cst_68 = arith.constant dense<0.000000e+00> : vector<8x8xf32>
    %364 = tpu.matmul %362, %363, %cst_68 {dimension_numbers = #tpu.dot_dimension_numbers<[1], [1], [0], [0], [0, 0, 1, 0], [], []>} : vector<8x8xf32>, vector<8x8xf32>, vector<8x8xf32> -> vector<8x8xf32>
    %cst_69 = arith.constant 0.353553385 : f32
    %365 = vector.broadcast %cst_69 : f32 to vector<8x8xf32>
    %366 = arith.mulf %364, %365 : vector<8x8xf32>
    %367 = arith.addf %366, %361 : vector<8x8xf32>
    %cst_70 = arith.constant dense<0xFF800000> : vector<8xf32>
    %368 = vector.multi_reduction <maximumf>, %367, %cst_70 [1] : vector<8x8xf32> to vector<8xf32>
    %369 = vector.shape_cast %368 : vector<8xf32> to vector<8x1xf32>
    %370 = vector.broadcast %369 : vector<8x1xf32> to vector<8x8xf32>
    %371 = arith.subf %367, %370 : vector<8x8xf32>
    %372 = math.exp %371 : vector<8x8xf32>
    %cst_71 = arith.constant dense<0.000000e+00> : vector<8xf32>
    %373 = vector.multi_reduction <add>, %372, %cst_71 [1] : vector<8x8xf32> to vector<8xf32>
    %374 = vector.shape_cast %373 : vector<8xf32> to vector<8x1xf32>
    %375 = tpu.reciprocal %374 {approx = true} : vector<8x1xf32> -> vector<8x1xf32>
    %376 = vector.broadcast %375 : vector<8x1xf32> to vector<8x8xf32>
    %377 = arith.mulf %372, %376 : vector<8x8xf32>
    %378 = vector.extract_strided_slice %360 {offsets = [0, 0], sizes = [8, 8], strides = [1, 1]} : vector<8x32xf32> to vector<8x8xf32>
    %cst_72 = arith.constant dense<0.000000e+00> : vector<8x8xf32>
    %379 = tpu.matmul %377, %378, %cst_72 {dimension_numbers = #tpu.dot_dimension_numbers<[1], [0], [0], [1], [0, 0, 1, 1], [], []>} : vector<8x8xf32>, vector<8x8xf32>, vector<8x8xf32> -> vector<8x8xf32>
    %380 = vector.extract_strided_slice %358 {offsets = [0, 8], sizes = [8, 8], strides = [1, 1]} : vector<8x32xf32> to vector<8x8xf32>
    %381 = vector.extract_strided_slice %359 {offsets = [0, 8], sizes = [8, 8], strides = [1, 1]} : vector<8x32xf32> to vector<8x8xf32>
    %cst_73 = arith.constant dense<0.000000e+00> : vector<8x8xf32>
    %382 = tpu.matmul %380, %381, %cst_73 {dimension_numbers = #tpu.dot_dimension_numbers<[1], [1], [0], [0], [0, 0, 1, 0], [], []>} : vector<8x8xf32>, vector<8x8xf32>, vector<8x8xf32> -> vector<8x8xf32>
    %cst_74 = arith.constant 0.353553385 : f32
    %383 = vector.broadcast %cst_74 : f32 to vector<8x8xf32>
    %384 = arith.mulf %382, %383 : vector<8x8xf32>
    %385 = arith.addf %384, %361 : vector<8x8xf32>
    %cst_75 = arith.constant dense<0xFF800000> : vector<8xf32>
    %386 = vector.multi_reduction <maximumf>, %385, %cst_75 [1] : vector<8x8xf32> to vector<8xf32>
    %387 = vector.shape_cast %386 : vector<8xf32> to vector<8x1xf32>
    %388 = vector.broadcast %387 : vector<8x1xf32> to vector<8x8xf32>
    %389 = arith.subf %385, %388 : vector<8x8xf32>
    %390 = math.exp %389 : vector<8x8xf32>
    %cst_76 = arith.constant dense<0.000000e+00> : vector<8xf32>
    %391 = vector.multi_reduction <add>, %390, %cst_76 [1] : vector<8x8xf32> to vector<8xf32>
    %392 = vector.shape_cast %391 : vector<8xf32> to vector<8x1xf32>
    %393 = tpu.reciprocal %392 {approx = true} : vector<8x1xf32> -> vector<8x1xf32>
    %394 = vector.broadcast %393 : vector<8x1xf32> to vector<8x8xf32>
    %395 = arith.mulf %390, %394 : vector<8x8xf32>
    %396 = vector.extract_strided_slice %360 {offsets = [0, 8], sizes = [8, 8], strides = [1, 1]} : vector<8x32xf32> to vector<8x8xf32>
    %cst_77 = arith.constant dense<0.000000e+00> : vector<8x8xf32>
    %397 = tpu.matmul %395, %396, %cst_77 {dimension_numbers = #tpu.dot_dimension_numbers<[1], [0], [0], [1], [0, 0, 1, 1], [], []>} : vector<8x8xf32>, vector<8x8xf32>, vector<8x8xf32> -> vector<8x8xf32>
    %398 = vector.extract_strided_slice %358 {offsets = [0, 16], sizes = [8, 8], strides = [1, 1]} : vector<8x32xf32> to vector<8x8xf32>
    %399 = vector.extract_strided_slice %359 {offsets = [0, 16], sizes = [8, 8], strides = [1, 1]} : vector<8x32xf32> to vector<8x8xf32>
    %cst_78 = arith.constant dense<0.000000e+00> : vector<8x8xf32>
    %400 = tpu.matmul %398, %399, %cst_78 {dimension_numbers = #tpu.dot_dimension_numbers<[1], [1], [0], [0], [0, 0, 1, 0], [], []>} : vector<8x8xf32>, vector<8x8xf32>, vector<8x8xf32> -> vector<8x8xf32>
    %cst_79 = arith.constant 0.353553385 : f32
    %401 = vector.broadcast %cst_79 : f32 to vector<8x8xf32>
    %402 = arith.mulf %400, %401 : vector<8x8xf32>
    %403 = arith.addf %402, %361 : vector<8x8xf32>
    %cst_80 = arith.constant dense<0xFF800000> : vector<8xf32>
    %404 = vector.multi_reduction <maximumf>, %403, %cst_80 [1] : vector<8x8xf32> to vector<8xf32>
    %405 = vector.shape_cast %404 : vector<8xf32> to vector<8x1xf32>
    %406 = vector.broadcast %405 : vector<8x1xf32> to vector<8x8xf32>
    %407 = arith.subf %403, %406 : vector<8x8xf32>
    %408 = math.exp %407 : vector<8x8xf32>
    %cst_81 = arith.constant dense<0.000000e+00> : vector<8xf32>
    %409 = vector.multi_reduction <add>, %408, %cst_81 [1] : vector<8x8xf32> to vector<8xf32>
    %410 = vector.shape_cast %409 : vector<8xf32> to vector<8x1xf32>
    %411 = tpu.reciprocal %410 {approx = true} : vector<8x1xf32> -> vector<8x1xf32>
    %412 = vector.broadcast %411 : vector<8x1xf32> to vector<8x8xf32>
    %413 = arith.mulf %408, %412 : vector<8x8xf32>
    %414 = vector.extract_strided_slice %360 {offsets = [0, 16], sizes = [8, 8], strides = [1, 1]} : vector<8x32xf32> to vector<8x8xf32>
    %cst_82 = arith.constant dense<0.000000e+00> : vector<8x8xf32>
    %415 = tpu.matmul %413, %414, %cst_82 {dimension_numbers = #tpu.dot_dimension_numbers<[1], [0], [0], [1], [0, 0, 1, 1], [], []>} : vector<8x8xf32>, vector<8x8xf32>, vector<8x8xf32> -> vector<8x8xf32>
    %416 = vector.extract_strided_slice %358 {offsets = [0, 24], sizes = [8, 8], strides = [1, 1]} : vector<8x32xf32> to vector<8x8xf32>
    %417 = vector.extract_strided_slice %359 {offsets = [0, 24], sizes = [8, 8], strides = [1, 1]} : vector<8x32xf32> to vector<8x8xf32>
    %cst_83 = arith.constant dense<0.000000e+00> : vector<8x8xf32>
    %418 = tpu.matmul %416, %417, %cst_83 {dimension_numbers = #tpu.dot_dimension_numbers<[1], [1], [0], [0], [0, 0, 1, 0], [], []>} : vector<8x8xf32>, vector<8x8xf32>, vector<8x8xf32> -> vector<8x8xf32>
    %cst_84 = arith.constant 0.353553385 : f32
    %419 = vector.broadcast %cst_84 : f32 to vector<8x8xf32>
    %420 = arith.mulf %418, %419 : vector<8x8xf32>
    %421 = arith.addf %420, %361 : vector<8x8xf32>
    %cst_85 = arith.constant dense<0xFF800000> : vector<8xf32>
    %422 = vector.multi_reduction <maximumf>, %421, %cst_85 [1] : vector<8x8xf32> to vector<8xf32>
    %423 = vector.shape_cast %422 : vector<8xf32> to vector<8x1xf32>
    %424 = vector.broadcast %423 : vector<8x1xf32> to vector<8x8xf32>
    %425 = arith.subf %421, %424 : vector<8x8xf32>
    %426 = math.exp %425 : vector<8x8xf32>
    %cst_86 = arith.constant dense<0.000000e+00> : vector<8xf32>
    %427 = vector.multi_reduction <add>, %426, %cst_86 [1] : vector<8x8xf32> to vector<8xf32>
    %428 = vector.shape_cast %427 : vector<8xf32> to vector<8x1xf32>
    %429 = tpu.reciprocal %428 {approx = true} : vector<8x1xf32> -> vector<8x1xf32>
    %430 = vector.broadcast %429 : vector<8x1xf32> to vector<8x8xf32>
    %431 = arith.mulf %426, %430 : vector<8x8xf32>
    %432 = vector.extract_strided_slice %360 {offsets = [0, 24], sizes = [8, 8], strides = [1, 1]} : vector<8x32xf32> to vector<8x8xf32>
    %cst_87 = arith.constant dense<0.000000e+00> : vector<8x8xf32>
    %433 = tpu.matmul %431, %432, %cst_87 {dimension_numbers = #tpu.dot_dimension_numbers<[1], [0], [0], [1], [0, 0, 1, 1], [], []>} : vector<8x8xf32>, vector<8x8xf32>, vector<8x8xf32> -> vector<8x8xf32>
    %434 = tpu.concatenate %379, %397, %415, %433 in 1 : vector<8x8xf32>, vector<8x8xf32>, vector<8x8xf32>, vector<8x8xf32> -> vector<8x32xf32>
    %c0_88 = arith.constant 0 : index
    %c16 = arith.constant 16 : index
    %435 = vector.load %arg5[%c0_88, %c16] : memref<16x53xf32, #tpu.memory_space<vmem>>, vector<4x8xf32>
    %c0_89 = arith.constant 0 : index
    %c24 = arith.constant 24 : index
    %436 = vector.load %arg5[%c0_89, %c24] : memref<16x53xf32, #tpu.memory_space<vmem>>, vector<8x4xf32>
    %c0_90 = arith.constant 0 : index
    %c28 = arith.constant 28 : index
    %437 = vector.load %arg5[%c0_90, %c28] : memref<16x53xf32, #tpu.memory_space<vmem>>, vector<8x8xf32>
    %cst_91 = arith.constant dense<0.000000e+00> : vector<4x32xf32>
    %438 = tpu.matmul %435, %434, %cst_91 {dimension_numbers = #tpu.dot_dimension_numbers<[1], [0], [0], [1], [0, 0, 1, 1], [], []>} : vector<4x8xf32>, vector<8x32xf32>, vector<4x32xf32> -> vector<4x32xf32>
    %cst_92 = arith.constant 5.000000e-01 : f32
    %439 = vector.broadcast %cst_92 : f32 to vector<4x32xf32>
    %440 = arith.mulf %438, %439 : vector<4x32xf32>
    %cst_93 = arith.constant dense<0.000000e+00> : vector<8x32xf32>
    %441 = tpu.matmul %436, %440, %cst_93 {dimension_numbers = #tpu.dot_dimension_numbers<[1], [0], [0], [1], [0, 0, 1, 1], [], []>} : vector<8x4xf32>, vector<4x32xf32>, vector<8x32xf32> -> vector<8x32xf32>
    %442 = arith.subf %434, %441 : vector<8x32xf32>
    %cst_94 = arith.constant dense<0.000000e+00> : vector<8x8xf32>
    %443 = tpu.matmul %442, %442, %cst_94 {dimension_numbers = #tpu.dot_dimension_numbers<[1], [1], [0], [0], [0, 0, 1, 0], [], []>} : vector<8x32xf32>, vector<8x32xf32>, vector<8x8xf32> -> vector<8x8xf32>
    %444 = arith.mulf %443, %443 : vector<8x8xf32>
    %445 = arith.mulf %444, %437 : vector<8x8xf32>
    %cst_95 = arith.constant dense<0.000000e+00> : vector<8xf32>
    %446 = vector.multi_reduction <add>, %445, %cst_95 [1] : vector<8x8xf32> to vector<8xf32>
    %447 = vector.shape_cast %446 : vector<8xf32> to vector<8x1xf32>
    %cst_96 = arith.constant dense<0.000000e+00> : vector<1xf32>
    %448 = vector.multi_reduction <add>, %447, %cst_96 [0] : vector<8x1xf32> to vector<1xf32>
    %449 = vector.shape_cast %448 : vector<1xf32> to vector<1x1xf32>
    %450 = arith.mulf %442, %442 : vector<8x32xf32>
    %cst_97 = arith.constant dense<0.000000e+00> : vector<4x32xf32>
    %451 = tpu.matmul %435, %450, %cst_97 {dimension_numbers = #tpu.dot_dimension_numbers<[1], [0], [0], [1], [0, 0, 1, 1], [], []>} : vector<4x8xf32>, vector<8x32xf32>, vector<4x32xf32> -> vector<4x32xf32>
    %452 = arith.mulf %451, %451 : vector<4x32xf32>
    %cst_98 = arith.constant dense<0.000000e+00> : vector<4xf32>
    %453 = vector.multi_reduction <add>, %452, %cst_98 [1] : vector<4x32xf32> to vector<4xf32>
    %454 = vector.shape_cast %453 : vector<4xf32> to vector<4x1xf32>
    %cst_99 = arith.constant dense<0.000000e+00> : vector<1xf32>
    %455 = vector.multi_reduction <add>, %454, %cst_99 [0] : vector<4x1xf32> to vector<1xf32>
    %456 = vector.shape_cast %455 : vector<1xf32> to vector<1x1xf32>
    %457 = arith.subf %449, %456 : vector<1x1xf32>
    %cst_100 = arith.constant 5.000000e-01 : f32
    %458 = vector.broadcast %cst_100 : f32 to vector<1x1xf32>
    %459 = arith.mulf %458, %457 : vector<1x1xf32>
    %c0_101 = arith.constant 0 : index
    %c0_102 = arith.constant 0 : index
    %460 = vector.load %arg8[%c0_101, %c0_102] : memref<1x1xf32, #tpu.memory_space<vmem>>, vector<1x1xf32>
    tpu.vector_store %arg8[%c0_101, %c0_102], %459 {strides = array<i32>} : memref<1x1xf32, #tpu.memory_space<vmem>>, vector<1x1xf32>,
    %c0_103 = arith.constant 0 : index
    %c224 = arith.constant 224 : index
    %461 = vector.load %arg4[%c0_103, %c224] : memref<32x400xf32, #tpu.memory_space<vmem>>, vector<32x32xf32>
    %cst_104 = arith.constant dense<0.000000e+00> : vector<8x32xf32>
    %462 = tpu.matmul %434, %461, %cst_104 {dimension_numbers = #tpu.dot_dimension_numbers<[1], [0], [0], [1], [0, 0, 1, 1], [], []>} : vector<8x32xf32>, vector<32x32xf32>, vector<8x32xf32> -> vector<8x32xf32>
    %463 = arith.addf %352, %462 : vector<8x32xf32>
    %c5 = arith.constant 5 : index
    %c0_105 = arith.constant 0 : index
    %464 = vector.load %arg3[%c5, %c0_105] : memref<10x128xf32, #tpu.memory_space<vmem>>, vector<1x32xf32>
    %465 = vector.broadcast %464 : vector<1x32xf32> to vector<8x32xf32>
    %466 = arith.addf %463, %465 : vector<8x32xf32>
    %c0_106 = arith.constant 0 : index
    %c256 = arith.constant 256 : index
    %467 = vector.load %arg4[%c0_106, %c256] : memref<32x400xf32, #tpu.memory_space<vmem>>, vector<32x16xf32>
    %cst_107 = arith.constant dense<0.000000e+00> : vector<8x16xf32>
    %468 = tpu.matmul %466, %467, %cst_107 {dimension_numbers = #tpu.dot_dimension_numbers<[1], [0], [0], [1], [0, 0, 1, 1], [], []>} : vector<8x32xf32>, vector<32x16xf32>, vector<8x16xf32> -> vector<8x16xf32>
    %c6 = arith.constant 6 : index
    %c0_108 = arith.constant 0 : index
    %469 = vector.load %arg3[%c6, %c0_108] : memref<10x128xf32, #tpu.memory_space<vmem>>, vector<1x16xf32>
    %470 = vector.broadcast %469 : vector<1x16xf32> to vector<8x16xf32>
    %471 = arith.addf %468, %470 : vector<8x16xf32>
    %cst_109 = arith.constant 0.000000e+00 : f32
    %472 = vector.broadcast %cst_109 : f32 to vector<8x16xf32>
    %473 = arith.maximumf %471, %472 : vector<8x16xf32>
    %c0_110 = arith.constant 0 : index
    %c272 = arith.constant 272 : index
    %474 = vector.load %arg4[%c0_110, %c272] : memref<32x400xf32, #tpu.memory_space<vmem>>, vector<16x32xf32>
    %cst_111 = arith.constant dense<0.000000e+00> : vector<8x32xf32>
    %475 = tpu.matmul %473, %474, %cst_111 {dimension_numbers = #tpu.dot_dimension_numbers<[1], [0], [0], [1], [0, 0, 1, 1], [], []>} : vector<8x16xf32>, vector<16x32xf32>, vector<8x32xf32> -> vector<8x32xf32>
    %476 = arith.addf %466, %475 : vector<8x32xf32>
    %c7 = arith.constant 7 : index
    %c0_112 = arith.constant 0 : index
    %477 = vector.load %arg3[%c7, %c0_112] : memref<10x128xf32, #tpu.memory_space<vmem>>, vector<1x32xf32>
    %478 = vector.broadcast %477 : vector<1x32xf32> to vector<8x32xf32>
    %479 = arith.addf %476, %478 : vector<8x32xf32>
    %c0_113 = arith.constant 0 : index
    %c304 = arith.constant 304 : index
    %480 = vector.load %arg4[%c0_113, %c304] : memref<32x400xf32, #tpu.memory_space<vmem>>, vector<32x96xf32>
    %cst_114 = arith.constant dense<0.000000e+00> : vector<8x96xf32>
    %481 = tpu.matmul %479, %480, %cst_114 {dimension_numbers = #tpu.dot_dimension_numbers<[1], [0], [0], [1], [0, 0, 1, 1], [], []>} : vector<8x32xf32>, vector<32x96xf32>, vector<8x96xf32> -> vector<8x96xf32>
    %c8 = arith.constant 8 : index
    %c0_115 = arith.constant 0 : index
    %482 = vector.load %arg3[%c8, %c0_115] : memref<10x128xf32, #tpu.memory_space<vmem>>, vector<1x96xf32>
    %483 = vector.broadcast %482 : vector<1x96xf32> to vector<8x96xf32>
    %484 = arith.addf %481, %483 : vector<8x96xf32>
    %485 = vector.extract_strided_slice %484 {offsets = [6, 0], sizes = [2, 32], strides = [1, 1]} : vector<8x96xf32> to vector<2x32xf32>
    %486 = vector.extract_strided_slice %484 {offsets = [0, 32], sizes = [8, 32], strides = [1, 1]} : vector<8x96xf32> to vector<8x32xf32>
    %487 = vector.extract_strided_slice %484 {offsets = [0, 64], sizes = [8, 32], strides = [1, 1]} : vector<8x96xf32> to vector<8x32xf32>
    %cst_116 = arith.constant dense<0.000000e+00> : vector<2x8xf32>
    %488 = tpu.matmul %485, %486, %cst_116 {dimension_numbers = #tpu.dot_dimension_numbers<[1], [1], [0], [0], [0, 0, 1, 0], [], []>} : vector<2x32xf32>, vector<8x32xf32>, vector<2x8xf32> -> vector<2x8xf32>
    %c0_117 = arith.constant 0 : index
    %c8_118 = arith.constant 8 : index
    %489 = vector.load %arg5[%c0_117, %c8_118] : memref<16x53xf32, #tpu.memory_space<vmem>>, vector<2x8xf32>
    %490 = arith.addf %488, %489 : vector<2x8xf32>
    %cst_119 = arith.constant dense<0xFF800000> : vector<2xf32>
    %491 = vector.multi_reduction <maximumf>, %490, %cst_119 [1] : vector<2x8xf32> to vector<2xf32>
    %492 = vector.shape_cast %491 : vector<2xf32> to vector<2x1xf32>
    %493 = vector.broadcast %492 : vector<2x1xf32> to vector<2x8xf32>
    %494 = arith.subf %490, %493 : vector<2x8xf32>
    %495 = math.exp %494 : vector<2x8xf32>
    %cst_120 = arith.constant dense<0.000000e+00> : vector<2xf32>
    %496 = vector.multi_reduction <add>, %495, %cst_120 [1] : vector<2x8xf32> to vector<2xf32>
    %497 = vector.shape_cast %496 : vector<2xf32> to vector<2x1xf32>
    %498 = tpu.reciprocal %497 {approx = true} : vector<2x1xf32> -> vector<2x1xf32>
    %499 = vector.broadcast %498 : vector<2x1xf32> to vector<2x8xf32>
    %500 = arith.mulf %495, %499 : vector<2x8xf32>
    %cst_121 = arith.constant dense<0.000000e+00> : vector<2x32xf32>
    %501 = tpu.matmul %500, %487, %cst_121 {dimension_numbers = #tpu.dot_dimension_numbers<[1], [0], [0], [1], [0, 0, 1, 1], [], []>} : vector<2x8xf32>, vector<8x32xf32>, vector<2x32xf32> -> vector<2x32xf32>
    %c0_122 = arith.constant 0 : index
    %c0_123 = arith.constant 0 : index
    %502 = vector.load %arg6[%c0_122, %c0_123] : memref<2x32xf32, #tpu.memory_space<vmem>>, vector<2x32xf32>
    tpu.vector_store %arg6[%c0_122, %c0_123], %501 {strides = array<i32>} : memref<2x32xf32, #tpu.memory_space<vmem>>, vector<2x32xf32>,
    %cst_124 = arith.constant dense<0.000000e+00> : vector<2x4xf32>
    %503 = tpu.matmul %500, %436, %cst_124 {dimension_numbers = #tpu.dot_dimension_numbers<[1], [0], [0], [1], [0, 0, 1, 1], [], []>} : vector<2x8xf32>, vector<8x4xf32>, vector<2x4xf32> -> vector<2x4xf32>
    %c0_125 = arith.constant 0 : index
    %c0_126 = arith.constant 0 : index
    %504 = vector.load %arg7[%c0_125, %c0_126] : memref<2x4xf32, #tpu.memory_space<vmem>>, vector<2x4xf32>
    tpu.vector_store %arg7[%c0_125, %c0_126], %503 {strides = array<i32>} : memref<2x4xf32, #tpu.memory_space<vmem>>, vector<2x4xf32>,
    return
  }
}

</mosaic_0001>

<llo_original>
// kernel: squeeze.16
$region0: #{squeeze.16}
  %s0 = inlined_call_operand.vmem [shape: f32[1,4,32,4,32], index: 0, kind: input, shape index: {}]
  %s1 = inlined_call_operand.vmem [shape: f32[128,128], index: 1, kind: output, shape index: {}]
  $region1: #{squeeze.16} parent=0
    #allocation0 [shape = 'u8[524288]{0}', space=vmem, size = 0x80000, scoped, tag = 'scoped mem for input reshape']
    %s3 = sshll.u32 1, 4
    %s4 = ssub.s32 %s3, 1
    %s5 = smul.addr 4, 127
    %s6 = scalar_lea.vmem %s0, %s5
    %v7 = vld [vmem:[%s6] sm:%s4]
    %s8 = scalar_lea.vmem [#allocation0], 1016
    %9 = vst [vmem:[%s8] sm:%s4] %v7
    %s10 = smul.addr 4, 126
    %s11 = scalar_lea.vmem %s0, %s10
    %v12 = vld [vmem:[%s11] sm:%s4]
    %s13 = scalar_lea.vmem [#allocation0], 1008
    %14 = vst [vmem:[%s13] sm:%s4] %v12
    %s15 = smul.addr 4, 125
    %s16 = scalar_lea.vmem %s0, %s15
    %v17 = vld [vmem:[%s16] sm:%s4]
    %s18 = scalar_lea.vmem [#allocation0], 1000
    %19 = vst [vmem:[%s18] sm:%s4] %v17
    %s20 = smul.addr 4, 124
    %s21 = scalar_lea.vmem %s0, %s20
    %v22 = vld [vmem:[%s21] sm:%s4]
    %s23 = scalar_lea.vmem [#allocation0], 992
    %24 = vst [vmem:[%s23] sm:%s4] %v22
    %s25 = smul.addr 4, 123
    %s26 = scalar_lea.vmem %s0, %s25
    %v27 = vld [vmem:[%s26] sm:%s4]
    %s28 = scalar_lea.vmem [#allocation0], 984
    %29 = vst [vmem:[%s28] sm:%s4] %v27
    %s30 = smul.addr 4, 122
    %s31 = scalar_lea.vmem %s0, %s30
    %v32 = vld [vmem:[%s31] sm:%s4]
    %s33 = scalar_lea.vmem [#allocation0], 976
    %34 = vst [vmem:[%s33] sm:%s4] %v32
    %s35 = smul.addr 4, 121
    %s36 = scalar_lea.vmem %s0, %s35
    %v37 = vld [vmem:[%s36] sm:%s4]
    %s38 = scalar_lea.vmem [#allocation0], 968
    %39 = vst [vmem:[%s38] sm:%s4] %v37
    %s40 = smul.addr 4, 120
    %s41 = scalar_lea.vmem %s0, %s40
    %v42 = vld [vmem:[%s41] sm:%s4]
    %s43 = scalar_lea.vmem [#allocation0], 960
    %44 = vst [vmem:[%s43] sm:%s4] %v42
    %s45 = smul.addr 4, 119
    %s46 = scalar_lea.vmem %s0, %s45
    %v47 = vld [vmem:[%s46] sm:%s4]
    %s48 = scalar_lea.vmem [#allocation0], 952
    %49 = vst [vmem:[%s48] sm:%s4] %v47
    %s50 = smul.addr 4, 118
    %s51 = scalar_lea.vmem %s0, %s50
    %v52 = vld [vmem:[%s51] sm:%s4]
    %s53 = scalar_lea.vmem [#allocation0], 944
    %54 = vst [vmem:[%s53] sm:%s4] %v52
    %s55 = smul.addr 4, 117
    %s56 = scalar_lea.vmem %s0, %s55
    %v57 = vld [vmem:[%s56] sm:%s4]
    %s58 = scalar_lea.vmem [#allocation0], 936
    %59 = vst [vmem:[%s58] sm:%s4] %v57
    %s60 = smul.addr 4, 116
    %s61 = scalar_lea.vmem %s0, %s60
    %v62 = vld [vmem:[%s61] sm:%s4]
    %s63 = scalar_lea.vmem [#allocation0], 928
    %64 = vst [vmem:[%s63] sm:%s4] %v62
    %s65 = smul.addr 4, 115
    %s66 = scalar_lea.vmem %s0, %s65
    %v67 = vld [vmem:[%s66] sm:%s4]
    %s68 = scalar_lea.vmem [#allocation0], 920
    %69 = vst [vmem:[%s68] sm:%s4] %v67
    %s70 = smul.addr 4, 114
    %s71 = scalar_lea.vmem %s0, %s70
    %v72 = vld [vmem:[%s71] sm:%s4]
    %s73 = scalar_lea.vmem [#allocation0], 912
    %74 = vst [vmem:[%s73] sm:%s4] %v72
    %s75 = smul.addr 4, 113
    %s76 = scalar_lea.vmem %s0, %s75
    %v77 = vld [vmem:[%s76] sm:%s4]
    %s78 = scalar_lea.vmem [#allocation0], 904
    %79 = vst [vmem:[%s78] sm:%s4] %v77
    %s80 = smul.addr 4, 112
    %s81 = scalar_lea.vmem %s0, %s80
    %v82 = vld [vmem:[%s81] sm:%s4]
    %s83 = scalar_lea.vmem [#allocation0], 896
    %84 = vst [vmem:[%s83] sm:%s4] %v82
    %s85 = smul.addr 4, 111
    %s86 = scalar_lea.vmem %s0, %s85
    %v87 = vld [vmem:[%s86] sm:%s4]
    %s88 = scalar_lea.vmem [#allocation0], 888
    %89 = vst [vmem:[%s88] sm:%s4] %v87
    %s90 = smul.addr 4, 110
    %s91 = scalar_lea.vmem %s0, %s90
    %v92 = vld [vmem:[%s91] sm:%s4]
    %s93 = scalar_lea.vmem [#allocation0], 880
    %94 = vst [vmem:[%s93] sm:%s4] %v92
    %s95 = smul.addr 4, 109
    %s96 = scalar_lea.vmem %s0, %s95
    %v97 = vld [vmem:[%s96] sm:%s4]
    %s98 = scalar_lea.vmem [#allocation0], 872
    %99 = vst [vmem:[%s98] sm:%s4] %v97
    %s100 = smul.addr 4, 108
    %s101 = scalar_lea.vmem %s0, %s100
    %v102 = vld [vmem:[%s101] sm:%s4]
    %s103 = scalar_lea.vmem [#allocation0], 864
    %104 = vst [vmem:[%s103] sm:%s4] %v102
    %s105 = smul.addr 4, 107
    %s106 = scalar_lea.vmem %s0, %s105
    %v107 = vld [vmem:[%s106] sm:%s4]
    %s108 = scalar_lea.vmem [#allocation0], 856
    %109 = vst [vmem:[%s108] sm:%s4] %v107
    %s110 = smul.addr 4, 106
    %s111 = scalar_lea.vmem %s0, %s110
    %v112 = vld [vmem:[%s111] sm:%s4]
    %s113 = scalar_lea.vmem [#allocation0], 848
    %114 = vst [vmem:[%s113] sm:%s4] %v112
    %s115 = smul.addr 4, 105
    %s116 = scalar_lea.vmem %s0, %s115
    %v117 = vld [vmem:[%s116] sm:%s4]
    %s118 = scalar_lea.vmem [#allocation0], 840
    %119 = vst [vmem:[%s118] sm:%s4] %v117
    %s120 = smul.addr 4, 104
    %s121 = scalar_lea.vmem %s0, %s120
    %v122 = vld [vmem:[%s121] sm:%s4]
    %s123 = scalar_lea.vmem [#allocation0], 832
    %124 = vst [vmem:[%s123] sm:%s4] %v122
    %s125 = smul.addr 4, 103
    %s126 = scalar_lea.vmem %s0, %s125
    %v127 = vld [vmem:[%s126] sm:%s4]
    %s128 = scalar_lea.vmem [#allocation0], 824
    %129 = vst [vmem:[%s128] sm:%s4] %v127
    %s130 = smul.addr 4, 102
    %s131 = scalar_lea.vmem %s0, %s130
    %v132 = vld [vmem:[%s131] sm:%s4]
    %s133 = scalar_lea.vmem [#allocation0], 816
    %134 = vst [vmem:[%s133] sm:%s4] %v132
    %s135 = smul.addr 4, 101
    %s136 = scalar_lea.vmem %s0, %s135
    %v137 = vld [vmem:[%s136] sm:%s4]
    %s138 = scalar_lea.vmem [#allocation0], 808
    %139 = vst [vmem:[%s138] sm:%s4] %v137
    %s140 = smul.addr 4, 100
    %s141 = scalar_lea.vmem %s0, %s140
    %v142 = vld [vmem:[%s141] sm:%s4]
    %s143 = scalar_lea.vmem [#allocation0], 800
    %144 = vst [vmem:[%s143] sm:%s4] %v142
    %s145 = smul.addr 4, 99
    %s146 = scalar_lea.vmem %s0, %s145
    %v147 = vld [vmem:[%s146] sm:%s4]
    %s148 = scalar_lea.vmem [#allocation0], 792
    %149 = vst [vmem:[%s148] sm:%s4] %v147
    %s150 = smul.addr 4, 98
    %s151 = scalar_lea.vmem %s0, %s150
    %v152 = vld [vmem:[%s151] sm:%s4]
    %s153 = scalar_lea.vmem [#allocation0], 784
    %154 = vst [vmem:[%s153] sm:%s4] %v152
    %s155 = smul.addr 4, 97
    %s156 = scalar_lea.vmem %s0, %s155
    %v157 = vld [vmem:[%s156] sm:%s4]
    %s158 = scalar_lea.vmem [#allocation0], 776
    %159 = vst [vmem:[%s158] sm:%s4] %v157
    %s160 = smul.addr 4, 96
    %s161 = scalar_lea.vmem %s0, %s160
    %v162 = vld [vmem:[%s161] sm:%s4]
    %s163 = scalar_lea.vmem [#allocation0], 768
    %164 = vst [vmem:[%s163] sm:%s4] %v162
    %s165 = smul.addr 4, 95
    %s166 = scalar_lea.vmem %s0, %s165
    %v167 = vld [vmem:[%s166] sm:%s4]
    %s168 = scalar_lea.vmem [#allocation0], 760
    %169 = vst [vmem:[%s168] sm:%s4] %v167
    %s170 = smul.addr 4, 94
    %s171 = scalar_lea.vmem %s0, %s170
    %v172 = vld [vmem:[%s171] sm:%s4]
    %s173 = scalar_lea.vmem [#allocation0], 752
    %174 = vst [vmem:[%s173] sm:%s4] %v172
    %s175 = smul.addr 4, 93
    %s176 = scalar_lea.vmem %s0, %s175
    %v177 = vld [vmem:[%s176] sm:%s4]
    %s178 = scalar_lea.vmem [#allocation0], 744
    %179 = vst [vmem:[%s178] sm:%s4] %v177
    %s180 = smul.addr 4, 92
    %s181 = scalar_lea.vmem %s0, %s180
    %v182 = vld [vmem:[%s181] sm:%s4]
    %s183 = scalar_lea.vmem [#allocation0], 736
    %184 = vst [vmem:[%s183] sm:%s4] %v182
    %s185 = smul.addr 4, 91
    %s186 = scalar_lea.vmem %s0, %s185
    %v187 = vld [vmem:[%s186] sm:%s4]
    %s188 = scalar_lea.vmem [#allocation0], 728
    %189 = vst [vmem:[%s188] sm:%s4] %v187
    %s190 = smul.addr 4, 90
    %s191 = scalar_lea.vmem %s0, %s190
    %v192 = vld [vmem:[%s191] sm:%s4]
    %s193 = scalar_lea.vmem [#allocation0], 720
    %194 = vst [vmem:[%s193] sm:%s4] %v192
    %s195 = smul.addr 4, 89
    %s196 = scalar_lea.vmem %s0, %s195
    %v197 = vld [vmem:[%s196] sm:%s4]
    %s198 = scalar_lea.vmem [#allocation0], 712
    %199 = vst [vmem:[%s198] sm:%s4] %v197
    %s200 = smul.addr 4, 88
    %s201 = scalar_lea.vmem %s0, %s200
    %v202 = vld [vmem:[%s201] sm:%s4]
    %s203 = scalar_lea.vmem [#allocation0], 704
    %204 = vst [vmem:[%s203] sm:%s4] %v202
    %s205 = smul.addr 4, 87
    %s206 = scalar_lea.vmem %s0, %s205
    %v207 = vld [vmem:[%s206] sm:%s4]
    %s208 = scalar_lea.vmem [#allocation0], 696
    %209 = vst [vmem:[%s208] sm:%s4] %v207
    %s210 = smul.addr 4, 86
    %s211 = scalar_lea.vmem %s0, %s210
    %v212 = vld [vmem:[%s211] sm:%s4]
    %s213 = scalar_lea.vmem [#allocation0], 688
    %214 = vst [vmem:[%s213] sm:%s4] %v212
    %s215 = smul.addr 4, 85
    %s216 = scalar_lea.vmem %s0, %s215
    %v217 = vld [vmem:[%s216] sm:%s4]
    %s218 = scalar_lea.vmem [#allocation0], 680
    %219 = vst [vmem:[%s218] sm:%s4] %v217
    %s220 = smul.addr 4, 84
    %s221 = scalar_lea.vmem %s0, %s220
    %v222 = vld [vmem:[%s221] sm:%s4]
    %s223 = scalar_lea.vmem [#allocation0], 672
    %224 = vst [vmem:[%s223] sm:%s4] %v222
    %s225 = smul.addr 4, 83
    %s226 = scalar_lea.vmem %s0, %s225
    %v227 = vld [vmem:[%s226] sm:%s4]
    %s228 = scalar_lea.vmem [#allocation0], 664
    %229 = vst [vmem:[%s228] sm:%s4] %v227
    %s230 = smul.addr 4, 82
    %s231 = scalar_lea.vmem %s0, %s230
    %v232 = vld [vmem:[%s231] sm:%s4]
    %s233 = scalar_lea.vmem [#allocation0], 656
    %234 = vst [vmem:[%s233] sm:%s4] %v232
    %s235 = smul.addr 4, 81
    %s236 = scalar_lea.vmem %s0, %s235
    %v237 = vld [vmem:[%s236] sm:%s4]
    %s238 = scalar_lea.vmem [#allocation0], 648
    %239 = vst [vmem:[%s238] sm:%s4] %v237
    %s240 = smul.addr 4, 80
    %s241 = scalar_lea.vmem %s0, %s240
    %v242 = vld [vmem:[%s241] sm:%s4]
    %s243 = scalar_lea.vmem [#allocation0], 640
    %244 = vst [vmem:[%s243] sm:%s4] %v242
    %s245 = smul.addr 4, 79
    %s246 = scalar_lea.vmem %s0, %s245
    %v247 = vld [vmem:[%s246] sm:%s4]
    %s248 = scalar_lea.vmem [#allocation0], 632
    %249 = vst [vmem:[%s248] sm:%s4] %v247
    %s250 = smul.addr 4, 78
    %s251 = scalar_lea.vmem %s0, %s250
    %v252 = vld [vmem:[%s251] sm:%s4]
    %s253 = scalar_lea.vmem [#allocation0], 624
    %254 = vst [vmem:[%s253] sm:%s4] %v252
    %s255 = smul.addr 4, 77
    %s256 = scalar_lea.vmem %s0, %s255
    %v257 = vld [vmem:[%s256] sm:%s4]
    %s258 = scalar_lea.vmem [#allocation0], 616
    %259 = vst [vmem:[%s258] sm:%s4] %v257
    %s260 = smul.addr 4, 76
    %s261 = scalar_lea.vmem %s0, %s260
    %v262 = vld [vmem:[%s261] sm:%s4]
    %s263 = scalar_lea.vmem [#allocation0], 608
    %264 = vst [vmem:[%s263] sm:%s4] %v262
    %s265 = smul.addr 4, 75
    %s266 = scalar_lea.vmem %s0, %s265
    %v267 = vld [vmem:[%s266] sm:%s4]
    %s268 = scalar_lea.vmem [#allocation0], 600
    %269 = vst [vmem:[%s268] sm:%s4] %v267
    %s270 = smul.addr 4, 74
    %s271 = scalar_lea.vmem %s0, %s270
    %v272 = vld [vmem:[%s271] sm:%s4]
    %s273 = scalar_lea.vmem [#allocation0], 592
    %274 = vst [vmem:[%s273] sm:%s4] %v272
    %s275 = smul.addr 4, 73
    %s276 = scalar_lea.vmem %s0, %s275
    %v277 = vld [vmem:[%s276] sm:%s4]
    %s278 = scalar_lea.vmem [#allocation0], 584
    %279 = vst [vmem:[%s278] sm:%s4] %v277
    %s280 = smul.addr 4, 72
    %s281 = scalar_lea.vmem %s0, %s280
    %v282 = vld [vmem:[%s281] sm:%s4]
    %s283 = scalar_lea.vmem [#allocation0], 576
    %284 = vst [vmem:[%s283] sm:%s4] %v282
    %s285 = smul.addr 4, 71
    %s286 = scalar_lea.vmem %s0, %s285
    %v287 = vld [vmem:[%s286] sm:%s4]
    %s288 = scalar_lea.vmem [#allocation0], 568
    %289 = vst [vmem:[%s288] sm:%s4] %v287
    %s290 = smul.addr 4, 70
    %s291 = scalar_lea.vmem %s0, %s290
    %v292 = vld [vmem:[%s291] sm:%s4]
    %s293 = scalar_lea.vmem [#allocation0], 560
    %294 = vst [vmem:[%s293] sm:%s4] %v292
    %s295 = smul.addr 4, 69
    %s296 = scalar_lea.vmem %s0, %s295
    %v297 = vld [vmem:[%s296] sm:%s4]
    %s298 = scalar_lea.vmem [#allocation0], 552
    %299 = vst [vmem:[%s298] sm:%s4] %v297
    %s300 = smul.addr 4, 68
    %s301 = scalar_lea.vmem %s0, %s300
    %v302 = vld [vmem:[%s301] sm:%s4]
    %s303 = scalar_lea.vmem [#allocation0], 544
    %304 = vst [vmem:[%s303] sm:%s4] %v302
    %s305 = smul.addr 4, 67
    %s306 = scalar_lea.vmem %s0, %s305
    %v307 = vld [vmem:[%s306] sm:%s4]
    %s308 = scalar_lea.vmem [#allocation0], 536
    %309 = vst [vmem:[%s308] sm:%s4] %v307
    %s310 = smul.addr 4, 66
    %s311 = scalar_lea.vmem %s0, %s310
    %v312 = vld [vmem:[%s311] sm:%s4]
    %s313 = scalar_lea.vmem [#allocation0], 528
    %314 = vst [vmem:[%s313] sm:%s4] %v312
    %s315 = smul.addr 4, 65
    %s316 = scalar_lea.vmem %s0, %s315
    %v317 = vld [vmem:[%s316] sm:%s4]
    %s318 = scalar_lea.vmem [#allocation0], 520
    %319 = vst [vmem:[%s318] sm:%s4] %v317
    %s320 = smul.addr 4, 64
    %s321 = scalar_lea.vmem %s0, %s320
    %v322 = vld [vmem:[%s321] sm:%s4]
    %s323 = scalar_lea.vmem [#allocation0], 512
    %324 = vst [vmem:[%s323] sm:%s4] %v322
    %s325 = smul.addr 4, 63
    %s326 = scalar_lea.vmem %s0, %s325
    %v327 = vld [vmem:[%s326] sm:%s4]
    %s328 = scalar_lea.vmem [#allocation0], 504
    %329 = vst [vmem:[%s328] sm:%s4] %v327
    %s330 = smul.addr 4, 62
    %s331 = scalar_lea.vmem %s0, %s330
    %v332 = vld [vmem:[%s331] sm:%s4]
    %s333 = scalar_lea.vmem [#allocation0], 496
    %334 = vst [vmem:[%s333] sm:%s4] %v332
    %s335 = smul.addr 4, 61
    %s336 = scalar_lea.vmem %s0, %s335
    %v337 = vld [vmem:[%s336] sm:%s4]
    %s338 = scalar_lea.vmem [#allocation0], 488
    %339 = vst [vmem:[%s338] sm:%s4] %v337
    %s340 = smul.addr 4, 60
    %s341 = scalar_lea.vmem %s0, %s340
    %v342 = vld [vmem:[%s341] sm:%s4]
    %s343 = scalar_lea.vmem [#allocation0], 480
    %344 = vst [vmem:[%s343] sm:%s4] %v342
    %s345 = smul.addr 4, 59
    %s346 = scalar_lea.vmem %s0, %s345
    %v347 = vld [vmem:[%s346] sm:%s4]
    %s348 = scalar_lea.vmem [#allocation0], 472
    %349 = vst [vmem:[%s348] sm:%s4] %v347
    %s350 = smul.addr 4, 58
    %s351 = scalar_lea.vmem %s0, %s350
    %v352 = vld [vmem:[%s351] sm:%s4]
    %s353 = scalar_lea.vmem [#allocation0], 464
    %354 = vst [vmem:[%s353] sm:%s4] %v352
    %s355 = smul.addr 4, 57
    %s356 = scalar_lea.vmem %s0, %s355
    %v357 = vld [vmem:[%s356] sm:%s4]
    %s358 = scalar_lea.vmem [#allocation0], 456
    %359 = vst [vmem:[%s358] sm:%s4] %v357
    %s360 = smul.addr 4, 56
    %s361 = scalar_lea.vmem %s0, %s360
    %v362 = vld [vmem:[%s361] sm:%s4]
    %s363 = scalar_lea.vmem [#allocation0], 448
    %364 = vst [vmem:[%s363] sm:%s4] %v362
    %s365 = smul.addr 4, 55
    %s366 = scalar_lea.vmem %s0, %s365
    %v367 = vld [vmem:[%s366] sm:%s4]
    %s368 = scalar_lea.vmem [#allocation0], 440
    %369 = vst [vmem:[%s368] sm:%s4] %v367
    %s370 = smul.addr 4, 54
    %s371 = scalar_lea.vmem %s0, %s370
    %v372 = vld [vmem:[%s371] sm:%s4]
    %s373 = scalar_lea.vmem [#allocation0], 432
    %374 = vst [vmem:[%s373] sm:%s4] %v372
    %s375 = smul.addr 4, 53
    %s376 = scalar_lea.vmem %s0, %s375
    %v377 = vld [vmem:[%s376] sm:%s4]
    %s378 = scalar_lea.vmem [#allocation0], 424
    %379 = vst [vmem:[%s378] sm:%s4] %v377
    %s380 = smul.addr 4, 52
    %s381 = scalar_lea.vmem %s0, %s380
    %v382 = vld [vmem:[%s381] sm:%s4]
    %s383 = scalar_lea.vmem [#allocation0], 416
    %384 = vst [vmem:[%s383] sm:%s4] %v382
    %s385 = smul.addr 4, 51
    %s386 = scalar_lea.vmem %s0, %s385
    %v387 = vld [vmem:[%s386] sm:%s4]
    %s388 = scalar_lea.vmem [#allocation0], 408
    %389 = vst [vmem:[%s388] sm:%s4] %v387
    %s390 = smul.addr 4, 50
    %s391 = scalar_lea.vmem %s0, %s390
    %v392 = vld [vmem:[%s391] sm:%s4]
    %s393 = scalar_lea.vmem [#allocation0], 400
    %394 = vst [vmem:[%s393] sm:%s4] %v392
    %s395 = smul.addr 4, 49
    %s396 = scalar_lea.vmem %s0, %s395
    %v397 = vld [vmem:[%s396] sm:%s4]
    %s398 = scalar_lea.vmem [#allocation0], 392
    %399 = vst [vmem:[%s398] sm:%s4] %v397
    %s400 = smul.addr 4, 48
    %s401 = scalar_lea.vmem %s0, %s400
    %v402 = vld [vmem:[%s401] sm:%s4]
    %s403 = scalar_lea.vmem [#allocation0], 384
    %404 = vst [vmem:[%s403] sm:%s4] %v402
    %s405 = smul.addr 4, 47
    %s406 = scalar_lea.vmem %s0, %s405
    %v407 = vld [vmem:[%s406] sm:%s4]
    %s408 = scalar_lea.vmem [#allocation0], 376
    %409 = vst [vmem:[%s408] sm:%s4] %v407
    %s410 = smul.addr 4, 46
    %s411 = scalar_lea.vmem %s0, %s410
    %v412 = vld [vmem:[%s411] sm:%s4]
    %s413 = scalar_lea.vmem [#allocation0], 368
    %414 = vst [vmem:[%s413] sm:%s4] %v412
    %s415 = smul.addr 4, 45
    %s416 = scalar_lea.vmem %s0, %s415
    %v417 = vld [vmem:[%s416] sm:%s4]
    %s418 = scalar_lea.vmem [#allocation0], 360
    %419 = vst [vmem:[%s418] sm:%s4] %v417
    %s420 = smul.addr 4, 44
    %s421 = scalar_lea.vmem %s0, %s420
    %v422 = vld [vmem:[%s421] sm:%s4]
    %s423 = scalar_lea.vmem [#allocation0], 352
    %424 = vst [vmem:[%s423] sm:%s4] %v422
    %s425 = smul.addr 4, 43
    %s426 = scalar_lea.vmem %s0, %s425
    %v427 = vld [vmem:[%s426] sm:%s4]
    %s428 = scalar_lea.vmem [#allocation0], 344
    %429 = vst [vmem:[%s428] sm:%s4] %v427
    %s430 = smul.addr 4, 42
    %s431 = scalar_lea.vmem %s0, %s430
    %v432 = vld [vmem:[%s431] sm:%s4]
    %s433 = scalar_lea.vmem [#allocation0], 336
    %434 = vst [vmem:[%s433] sm:%s4] %v432
    %s435 = smul.addr 4, 41
    %s436 = scalar_lea.vmem %s0, %s435
    %v437 = vld [vmem:[%s436] sm:%s4]
    %s438 = scalar_lea.vmem [#allocation0], 328
    %439 = vst [vmem:[%s438] sm:%s4] %v437
    %s440 = smul.addr 4, 40
    %s441 = scalar_lea.vmem %s0, %s440
    %v442 = vld [vmem:[%s441] sm:%s4]
    %s443 = scalar_lea.vmem [#allocation0], 320
    %444 = vst [vmem:[%s443] sm:%s4] %v442
    %s445 = smul.addr 4, 39
    %s446 = scalar_lea.vmem %s0, %s445
    %v447 = vld [vmem:[%s446] sm:%s4]
    %s448 = scalar_lea.vmem [#allocation0], 312
    %449 = vst [vmem:[%s448] sm:%s4] %v447
    %s450 = smul.addr 4, 38
    %s451 = scalar_lea.vmem %s0, %s450
    %v452 = vld [vmem:[%s451] sm:%s4]
    %s453 = scalar_lea.vmem [#allocation0], 304
    %454 = vst [vmem:[%s453] sm:%s4] %v452
    %s455 = smul.addr 4, 37
    %s456 = scalar_lea.vmem %s0, %s455
    %v457 = vld [vmem:[%s456] sm:%s4]
    %s458 = scalar_lea.vmem [#allocation0], 296
    %459 = vst [vmem:[%s458] sm:%s4] %v457
    %s460 = smul.addr 4, 36
    %s461 = scalar_lea.vmem %s0, %s460
    %v462 = vld [vmem:[%s461] sm:%s4]
    %s463 = scalar_lea.vmem [#allocation0], 288
    %464 = vst [vmem:[%s463] sm:%s4] %v462
    %s465 = smul.addr 4, 35
    %s466 = scalar_lea.vmem %s0, %s465
    %v467 = vld [vmem:[%s466] sm:%s4]
    %s468 = scalar_lea.vmem [#allocation0], 280
    %469 = vst [vmem:[%s468] sm:%s4] %v467
    %s470 = smul.addr 4, 34
    %s471 = scalar_lea.vmem %s0, %s470
    %v472 = vld [vmem:[%s471] sm:%s4]
    %s473 = scalar_lea.vmem [#allocation0], 272
    %474 = vst [vmem:[%s473] sm:%s4] %v472
    %s475 = smul.addr 4, 33
    %s476 = scalar_lea.vmem %s0, %s475
    %v477 = vld [vmem:[%s476] sm:%s4]
    %s478 = scalar_lea.vmem [#allocation0], 264
    %479 = vst [vmem:[%s478] sm:%s4] %v477
    %s480 = smul.addr 4, 32
    %s481 = scalar_lea.vmem %s0, %s480
    %v482 = vld [vmem:[%s481] sm:%s4]
    %s483 = scalar_lea.vmem [#allocation0], 256
    %484 = vst [vmem:[%s483] sm:%s4] %v482
    %s485 = smul.addr 4, 31
    %s486 = scalar_lea.vmem %s0, %s485
    %v487 = vld [vmem:[%s486] sm:%s4]
    %s488 = scalar_lea.vmem [#allocation0], 248
    %489 = vst [vmem:[%s488] sm:%s4] %v487
    %s490 = smul.addr 4, 30
    %s491 = scalar_lea.vmem %s0, %s490
    %v492 = vld [vmem:[%s491] sm:%s4]
    %s493 = scalar_lea.vmem [#allocation0], 240
    %494 = vst [vmem:[%s493] sm:%s4] %v492
    %s495 = smul.addr 4, 29
    %s496 = scalar_lea.vmem %s0, %s495
    %v497 = vld [vmem:[%s496] sm:%s4]
    %s498 = scalar_lea.vmem [#allocation0], 232
    %499 = vst [vmem:[%s498] sm:%s4] %v497
    %s500 = smul.addr 4, 28
    %s501 = scalar_lea.vmem %s0, %s500
    %v502 = vld [vmem:[%s501] sm:%s4]
    %s503 = scalar_lea.vmem [#allocation0], 224
    %504 = vst [vmem:[%s503] sm:%s4] %v502
    %s505 = smul.addr 4, 27
    %s506 = scalar_lea.vmem %s0, %s505
    %v507 = vld [vmem:[%s506] sm:%s4]
    %s508 = scalar_lea.vmem [#allocation0], 216
    %509 = vst [vmem:[%s508] sm:%s4] %v507
    %s510 = smul.addr 4, 26
    %s511 = scalar_lea.vmem %s0, %s510
    %v512 = vld [vmem:[%s511] sm:%s4]
    %s513 = scalar_lea.vmem [#allocation0], 208
    %514 = vst [vmem:[%s513] sm:%s4] %v512
    %s515 = smul.addr 4, 25
    %s516 = scalar_lea.vmem %s0, %s515
    %v517 = vld [vmem:[%s516] sm:%s4]
    %s518 = scalar_lea.vmem [#allocation0], 200
    %519 = vst [vmem:[%s518] sm:%s4] %v517
    %s520 = smul.addr 4, 24
    %s521 = scalar_lea.vmem %s0, %s520
    %v522 = vld [vmem:[%s521] sm:%s4]
    %s523 = scalar_lea.vmem [#allocation0], 192
    %524 = vst [vmem:[%s523] sm:%s4] %v522
    %s525 = smul.addr 4, 23
    %s526 = scalar_lea.vmem %s0, %s525
    %v527 = vld [vmem:[%s526] sm:%s4]
    %s528 = scalar_lea.vmem [#allocation0], 184
    %529 = vst [vmem:[%s528] sm:%s4] %v527
    %s530 = smul.addr 4, 22
    %s531 = scalar_lea.vmem %s0, %s530
    %v532 = vld [vmem:[%s531] sm:%s4]
    %s533 = scalar_lea.vmem [#allocation0], 176
    %534 = vst [vmem:[%s533] sm:%s4] %v532
    %s535 = smul.addr 4, 21
    %s536 = scalar_lea.vmem %s0, %s535
    %v537 = vld [vmem:[%s536] sm:%s4]
    %s538 = scalar_lea.vmem [#allocation0], 168
    %539 = vst [vmem:[%s538] sm:%s4] %v537
    %s540 = smul.addr 4, 20
    %s541 = scalar_lea.vmem %s0, %s540
    %v542 = vld [vmem:[%s541] sm:%s4]
    %s543 = scalar_lea.vmem [#allocation0], 160
    %544 = vst [vmem:[%s543] sm:%s4] %v542
    %s545 = smul.addr 4, 19
    %s546 = scalar_lea.vmem %s0, %s545
    %v547 = vld [vmem:[%s546] sm:%s4]
    %s548 = scalar_lea.vmem [#allocation0], 152
    %549 = vst [vmem:[%s548] sm:%s4] %v547
    %s550 = smul.addr 4, 18
    %s551 = scalar_lea.vmem %s0, %s550
    %v552 = vld [vmem:[%s551] sm:%s4]
    %s553 = scalar_lea.vmem [#allocation0], 144
    %554 = vst [vmem:[%s553] sm:%s4] %v552
    %s555 = smul.addr 4, 17
    %s556 = scalar_lea.vmem %s0, %s555
    %v557 = vld [vmem:[%s556] sm:%s4]
    %s558 = scalar_lea.vmem [#allocation0], 136
    %559 = vst [vmem:[%s558] sm:%s4] %v557
    %s560 = smul.addr 4, 16
    %s561 = scalar_lea.vmem %s0, %s560
    %v562 = vld [vmem:[%s561] sm:%s4]
    %s563 = scalar_lea.vmem [#allocation0], 128
    %564 = vst [vmem:[%s563] sm:%s4] %v562
    %s565 = smul.addr 4, 15
    %s566 = scalar_lea.vmem %s0, %s565
    %v567 = vld [vmem:[%s566] sm:%s4]
    %s568 = scalar_lea.vmem [#allocation0], 120
    %569 = vst [vmem:[%s568] sm:%s4] %v567
    %s570 = smul.addr 4, 14
    %s571 = scalar_lea.vmem %s0, %s570
    %v572 = vld [vmem:[%s571] sm:%s4]
    %s573 = scalar_lea.vmem [#allocation0], 112
    %574 = vst [vmem:[%s573] sm:%s4] %v572
    %s575 = smul.addr 4, 13
    %s576 = scalar_lea.vmem %s0, %s575
    %v577 = vld [vmem:[%s576] sm:%s4]
    %s578 = scalar_lea.vmem [#allocation0], 104
    %579 = vst [vmem:[%s578] sm:%s4] %v577
    %s580 = smul.addr 4, 12
    %s581 = scalar_lea.vmem %s0, %s580
    %v582 = vld [vmem:[%s581] sm:%s4]
    %s583 = scalar_lea.vmem [#allocation0], 96
    %584 = vst [vmem:[%s583] sm:%s4] %v582
    %s585 = smul.addr 4, 11
    %s586 = scalar_lea.vmem %s0, %s585
    %v587 = vld [vmem:[%s586] sm:%s4]
    %s588 = scalar_lea.vmem [#allocation0], 88
    %589 = vst [vmem:[%s588] sm:%s4] %v587
    %s590 = smul.addr 4, 10
    %s591 = scalar_lea.vmem %s0, %s590
    %v592 = vld [vmem:[%s591] sm:%s4]
    %s593 = scalar_lea.vmem [#allocation0], 80
    %594 = vst [vmem:[%s593] sm:%s4] %v592
    %s595 = smul.addr 4, 9
    %s596 = scalar_lea.vmem %s0, %s595
    %v597 = vld [vmem:[%s596] sm:%s4]
    %s598 = scalar_lea.vmem [#allocation0], 72
    %599 = vst [vmem:[%s598] sm:%s4] %v597
    %s600 = smul.addr 4, 8
    %s601 = scalar_lea.vmem %s0, %s600
    %v602 = vld [vmem:[%s601] sm:%s4]
    %s603 = scalar_lea.vmem [#allocation0], 64
    %604 = vst [vmem:[%s603] sm:%s4] %v602
    %s605 = smul.addr 4, 7
    %s606 = scalar_lea.vmem %s0, %s605
    %v607 = vld [vmem:[%s606] sm:%s4]
    %s608 = scalar_lea.vmem [#allocation0], 56
    %609 = vst [vmem:[%s608] sm:%s4] %v607
    %s610 = smul.addr 4, 6
    %s611 = scalar_lea.vmem %s0, %s610
    %v612 = vld [vmem:[%s611] sm:%s4]
    %s613 = scalar_lea.vmem [#allocation0], 48
    %614 = vst [vmem:[%s613] sm:%s4] %v612
    %s615 = smul.addr 4, 5
    %s616 = scalar_lea.vmem %s0, %s615
    %v617 = vld [vmem:[%s616] sm:%s4]
    %s618 = scalar_lea.vmem [#allocation0], 40
    %619 = vst [vmem:[%s618] sm:%s4] %v617
    %s620 = smul.addr 4, 4
    %s621 = scalar_lea.vmem %s0, %s620
    %v622 = vld [vmem:[%s621] sm:%s4]
    %s623 = scalar_lea.vmem [#allocation0], 32
    %624 = vst [vmem:[%s623] sm:%s4] %v622
    %s625 = smul.addr 4, 3
    %s626 = scalar_lea.vmem %s0, %s625
    %v627 = vld [vmem:[%s626] sm:%s4]
    %s628 = scalar_lea.vmem [#allocation0], 24
    %629 = vst [vmem:[%s628] sm:%s4] %v627
    %s630 = smul.addr 4, 2
    %s631 = scalar_lea.vmem %s0, %s630
    %v632 = vld [vmem:[%s631] sm:%s4]
    %s633 = scalar_lea.vmem [#allocation0], 16
    %634 = vst [vmem:[%s633] sm:%s4] %v632
    %s635 = scalar_lea.vmem %s0, 4
    %v636 = vld [vmem:[%s635] sm:%s4]
    %s637 = scalar_lea.vmem [#allocation0], 8
    %638 = vst [vmem:[%s637] sm:%s4] %v636
    %v639 = vld [vmem:[%s0] sm:%s4]
    %640 = vst [vmem:[#allocation0] sm:%s4] %v639
    %v641 = vld [vmem:[#allocation0] ss:$8 sm:$0xf]
    %v642 = vld [vmem:[#allocation0] ss:$8 sm:$0xf0]
    %vm643 = vcmask 1047556
    %v644 = vsel %vm643, %v642, %v641
    %vm645 = vcmask 261120
    %646 = vst.msk [vmem:[%s1] sm:$0xff] %vm645, %v644
    %s647 = scalar_lea.vmem [#allocation0], 64
    %v648 = vld [vmem:[%s647] ss:$8 sm:$0xf]
    %s649 = scalar_lea.vmem [#allocation0], 64
    %v650 = vld [vmem:[%s649] ss:$8 sm:$0xf0]
    %vm651 = vcmask 1047556
    %v652 = vsel %vm651, %v650, %v648
    %vm653 = vcmask 261120
    %s654 = scalar_lea.vmem %s1, 8
    %655 = vst.msk [vmem:[%s654] sm:$0xff] %vm653, %v652
    %s656 = scalar_lea.vmem [#allocation0], 128
    %v657 = vld [vmem:[%s656] ss:$8 sm:$0xf]
    %s658 = scalar_lea.vmem [#allocation0], 128
    %v659 = vld [vmem:[%s658] ss:$8 sm:$0xf0]
    %vm660 = vcmask 1047556
    %v661 = vsel %vm660, %v659, %v657
    %vm662 = vcmask 261120
    %s663 = scalar_lea.vmem %s1, 16
    %664 = vst.msk [vmem:[%s663] sm:$0xff] %vm662, %v661
    %s665 = scalar_lea.vmem [#allocation0], 192
    %v666 = vld [vmem:[%s665] ss:$8 sm:$0xf]
    %s667 = scalar_lea.vmem [#allocation0], 192
    %v668 = vld [vmem:[%s667] ss:$8 sm:$0xf0]
    %vm669 = vcmask 1047556
    %v670 = vsel %vm669, %v668, %v666
    %vm671 = vcmask 261120
    %s672 = scalar_lea.vmem %s1, 24
    %673 = vst.msk [vmem:[%s672] sm:$0xff] %vm671, %v670
    %s674 = scalar_lea.vmem [#allocation0], 256
    %v675 = vld [vmem:[%s674] ss:$8 sm:$0xf]
    %s676 = scalar_lea.vmem [#allocation0], 256
    %v677 = vld [vmem:[%s676] ss:$8 sm:$0xf0]
    %vm678 = vcmask 1047556
    %v679 = vsel %vm678, %v677, %v675
    %vm680 = vcmask 261120
    %s681 = scalar_lea.vmem %s1, 32
    %682 = vst.msk [vmem:[%s681] sm:$0xff] %vm680, %v679
    %s683 = scalar_lea.vmem [#allocation0], 320
    %v684 = vld [vmem:[%s683] ss:$8 sm:$0xf]
    %s685 = scalar_lea.vmem [#allocation0], 320
    %v686 = vld [vmem:[%s685] ss:$8 sm:$0xf0]
    %vm687 = vcmask 1047556
    %v688 = vsel %vm687, %v686, %v684
    %vm689 = vcmask 261120
    %s690 = scalar_lea.vmem %s1, 40
    %691 = vst.msk [vmem:[%s690] sm:$0xff] %vm689, %v688
    %s692 = scalar_lea.vmem [#allocation0], 384
    %v693 = vld [vmem:[%s692] ss:$8 sm:$0xf]
    %s694 = scalar_lea.vmem [#allocation0], 384
    %v695 = vld [vmem:[%s694] ss:$8 sm:$0xf0]
    %vm696 = vcmask 1047556
    %v697 = vsel %vm696, %v695, %v693
    %vm698 = vcmask 261120
    %s699 = scalar_lea.vmem %s1, 48
    %700 = vst.msk [vmem:[%s699] sm:$0xff] %vm698, %v697
    %s701 = scalar_lea.vmem [#allocation0], 448
    %v702 = vld [vmem:[%s701] ss:$8 sm:$0xf]
    %s703 = scalar_lea.vmem [#allocation0], 448
    %v704 = vld [vmem:[%s703] ss:$8 sm:$0xf0]
    %vm705 = vcmask 1047556
    %v706 = vsel %vm705, %v704, %v702
    %vm707 = vcmask 261120
    %s708 = scalar_lea.vmem %s1, 56
    %709 = vst.msk [vmem:[%s708] sm:$0xff] %vm707, %v706
    %s710 = scalar_lea.vmem [#allocation0], 512
    %v711 = vld [vmem:[%s710] ss:$8 sm:$0xf]
    %s712 = scalar_lea.vmem [#allocation0], 512
    %v713 = vld [vmem:[%s712] ss:$8 sm:$0xf0]
    %vm714 = vcmask 1047556
    %v715 = vsel %vm714, %v713, %v711
    %vm716 = vcmask 261120
    %s717 = scalar_lea.vmem %s1, 64
    %718 = vst.msk [vmem:[%s717] sm:$0xff] %vm716, %v715
    %s719 = scalar_lea.vmem [#allocation0], 576
    %v720 = vld [vmem:[%s719] ss:$8 sm:$0xf]
    %s721 = scalar_lea.vmem [#allocation0], 576
    %v722 = vld [vmem:[%s721] ss:$8 sm:$0xf0]
    %vm723 = vcmask 1047556
    %v724 = vsel %vm723, %v722, %v720
    %vm725 = vcmask 261120
    %s726 = scalar_lea.vmem %s1, 72
    %727 = vst.msk [vmem:[%s726] sm:$0xff] %vm725, %v724
    %s728 = scalar_lea.vmem [#allocation0], 640
    %v729 = vld [vmem:[%s728] ss:$8 sm:$0xf]
    %s730 = scalar_lea.vmem [#allocation0], 640
    %v731 = vld [vmem:[%s730] ss:$8 sm:$0xf0]
    %vm732 = vcmask 1047556
    %v733 = vsel %vm732, %v731, %v729
    %vm734 = vcmask 261120
    %s735 = scalar_lea.vmem %s1, 80
    %736 = vst.msk [vmem:[%s735] sm:$0xff] %vm734, %v733
    %s737 = scalar_lea.vmem [#allocation0], 704
    %v738 = vld [vmem:[%s737] ss:$8 sm:$0xf]
    %s739 = scalar_lea.vmem [#allocation0], 704
    %v740 = vld [vmem:[%s739] ss:$8 sm:$0xf0]
    %vm741 = vcmask 1047556
    %v742 = vsel %vm741, %v740, %v738
    %vm743 = vcmask 261120
    %s744 = scalar_lea.vmem %s1, 88
    %745 = vst.msk [vmem:[%s744] sm:$0xff] %vm743, %v742
    %s746 = scalar_lea.vmem [#allocation0], 768
    %v747 = vld [vmem:[%s746] ss:$8 sm:$0xf]
    %s748 = scalar_lea.vmem [#allocation0], 768
    %v749 = vld [vmem:[%s748] ss:$8 sm:$0xf0]
    %vm750 = vcmask 1047556
    %v751 = vsel %vm750, %v749, %v747
    %vm752 = vcmask 261120
    %s753 = scalar_lea.vmem %s1, 96
    %754 = vst.msk [vmem:[%s753] sm:$0xff] %vm752, %v751
    %s755 = scalar_lea.vmem [#allocation0], 832
    %v756 = vld [vmem:[%s755] ss:$8 sm:$0xf]
    %s757 = scalar_lea.vmem [#allocation0], 832
    %v758 = vld [vmem:[%s757] ss:$8 sm:$0xf0]
    %vm759 = vcmask 1047556
    %v760 = vsel %vm759, %v758, %v756
    %vm761 = vcmask 261120
    %s762 = scalar_lea.vmem %s1, 104
    %763 = vst.msk [vmem:[%s762] sm:$0xff] %vm761, %v760
    %s764 = scalar_lea.vmem [#allocation0], 896
    %v765 = vld [vmem:[%s764] ss:$8 sm:$0xf]
    %s766 = scalar_lea.vmem [#allocation0], 896
    %v767 = vld [vmem:[%s766] ss:$8 sm:$0xf0]
    %vm768 = vcmask 1047556
    %v769 = vsel %vm768, %v767, %v765
    %vm770 = vcmask 261120
    %s771 = scalar_lea.vmem %s1, 112
    %772 = vst.msk [vmem:[%s771] sm:$0xff] %vm770, %v769
    %s773 = scalar_lea.vmem [#allocation0], 960
    %v774 = vld [vmem:[%s773] ss:$8 sm:$0xf]
    %s775 = scalar_lea.vmem [#allocation0], 960
    %v776 = vld [vmem:[%s775] ss:$8 sm:$0xf0]
    %vm777 = vcmask 1047556
    %v778 = vsel %vm777, %v776, %v774
    %vm779 = vcmask 261120
    %s780 = scalar_lea.vmem %s1, 120
    %781 = vst.msk [vmem:[%s780] sm:$0xff] %vm779, %v778
    %s782 = scalar_lea.vmem [#allocation0], 3
    %v783 = vld [vmem:[%s782] ss:$8 sm:$0xf]
    %s784 = scalar_lea.vmem [#allocation0], 3
    %v785 = vld [vmem:[%s784] ss:$8 sm:$0xf0]
    %vm786 = vcmask 1047556
    %v787 = vsel %vm786, %v785, %v783
    %788 = vrot.lane.b32.xlu0 %v787, 96
    %v789 = vpop.permute.xlu0 %788
    %vm790 = vcmask 1048320
    %791 = vst.msk [vmem:[%s1] sm:$0xff] %vm790, %v789
    %s792 = scalar_lea.vmem [#allocation0], 259
    %v793 = vld [vmem:[%s792] ss:$8 sm:$0xf]
    %s794 = scalar_lea.vmem [#allocation0], 259
    %v795 = vld [vmem:[%s794] ss:$8 sm:$0xf0]
    %vm796 = vcmask 1047556
    %v797 = vsel %vm796, %v795, %v793
    %798 = vrot.lane.b32.xlu0 %v797, 96
    %v799 = vpop.permute.xlu0 %798
    %vm800 = vcmask 1048320
    %s801 = scalar_lea.vmem %s1, 32
    %802 = vst.msk [vmem:[%s801] sm:$0xff] %vm800, %v799
    %s803 = scalar_lea.vmem [#allocation0], 515
    %v804 = vld [vmem:[%s803] ss:$8 sm:$0xf]
    %s805 = scalar_lea.vmem [#allocation0], 515
    %v806 = vld [vmem:[%s805] ss:$8 sm:$0xf0]
    %vm807 = vcmask 1047556
    %v808 = vsel %vm807, %v806, %v804
    %809 = vrot.lane.b32.xlu0 %v808, 96
    %v810 = vpop.permute.xlu0 %809
    %vm811 = vcmask 1048320
    %s812 = scalar_lea.vmem %s1, 64
    %813 = vst.msk [vmem:[%s812] sm:$0xff] %vm811, %v810
    %s814 = scalar_lea.vmem [#allocation0], 771
    %v815 = vld [vmem:[%s814] ss:$8 sm:$0xf]
    %s816 = scalar_lea.vmem [#allocation0], 771
    %v817 = vld [vmem:[%s816] ss:$8 sm:$0xf0]
    %vm818 = vcmask 1047556
    %v819 = vsel %vm818, %v817, %v815
    %820 = vrot.lane.b32.xlu0 %v819, 96
    %v821 = vpop.permute.xlu0 %820
    %vm822 = vcmask 1048320
    %s823 = scalar_lea.vmem %s1, 96
    %824 = vst.msk [vmem:[%s823] sm:$0xff] %vm822, %v821
    %s825 = scalar_lea.vmem [#allocation0], 67
    %v826 = vld [vmem:[%s825] ss:$8 sm:$0xf]
    %s827 = scalar_lea.vmem [#allocation0], 67
    %v828 = vld [vmem:[%s827] ss:$8 sm:$0xf0]
    %vm829 = vcmask 1047556
    %v830 = vsel %vm829, %v828, %v826
    %831 = vrot.lane.b32.xlu0 %v830, 96
    %v832 = vpop.permute.xlu0 %831
    %vm833 = vcmask 1048320
    %s834 = scalar_lea.vmem %s1, 8
    %835 = vst.msk [vmem:[%s834] sm:$0xff] %vm833, %v832
    %s836 = scalar_lea.vmem [#allocation0], 323
    %v837 = vld [vmem:[%s836] ss:$8 sm:$0xf]
    %s838 = scalar_lea.vmem [#allocation0], 323
    %v839 = vld [vmem:[%s838] ss:$8 sm:$0xf0]
    %vm840 = vcmask 1047556
    %v841 = vsel %vm840, %v839, %v837
    %842 = vrot.lane.b32.xlu0 %v841, 96
    %v843 = vpop.permute.xlu0 %842
    %vm844 = vcmask 1048320
    %s845 = scalar_lea.vmem %s1, 40
    %846 = vst.msk [vmem:[%s845] sm:$0xff] %vm844, %v843
    %s847 = scalar_lea.vmem [#allocation0], 579
    %v848 = vld [vmem:[%s847] ss:$8 sm:$0xf]
    %s849 = scalar_lea.vmem [#allocation0], 579
    %v850 = vld [vmem:[%s849] ss:$8 sm:$0xf0]
    %vm851 = vcmask 1047556
    %v852 = vsel %vm851, %v850, %v848
    %853 = vrot.lane.b32.xlu0 %v852, 96
    %v854 = vpop.permute.xlu0 %853
    %vm855 = vcmask 1048320
    %s856 = scalar_lea.vmem %s1, 72
    %857 = vst.msk [vmem:[%s856] sm:$0xff] %vm855, %v854
    %s858 = scalar_lea.vmem [#allocation0], 835
    %v859 = vld [vmem:[%s858] ss:$8 sm:$0xf]
    %s860 = scalar_lea.vmem [#allocation0], 835
    %v861 = vld [vmem:[%s860] ss:$8 sm:$0xf0]
    %vm862 = vcmask 1047556
    %v863 = vsel %vm862, %v861, %v859
    %864 = vrot.lane.b32.xlu0 %v863, 96
    %v865 = vpop.permute.xlu0 %864
    %vm866 = vcmask 1048320
    %s867 = scalar_lea.vmem %s1, 104
    %868 = vst.msk [vmem:[%s867] sm:$0xff] %vm866, %v865
    %s869 = scalar_lea.vmem [#allocation0], 131
    %v870 = vld [vmem:[%s869] ss:$8 sm:$0xf]
    %s871 = scalar_lea.vmem [#allocation0], 131
    %v872 = vld [vmem:[%s871] ss:$8 sm:$0xf0]
    %vm873 = vcmask 1047556
    %v874 = vsel %vm873, %v872, %v870
    %875 = vrot.lane.b32.xlu0 %v874, 96
    %v876 = vpop.permute.xlu0 %875
    %vm877 = vcmask 1048320
    %s878 = scalar_lea.vmem %s1, 16
    %879 = vst.msk [vmem:[%s878] sm:$0xff] %vm877, %v876
    %s880 = scalar_lea.vmem [#allocation0], 387
    %v881 = vld [vmem:[%s880] ss:$8 sm:$0xf]
    %s882 = scalar_lea.vmem [#allocation0], 387
    %v883 = vld [vmem:[%s882] ss:$8 sm:$0xf0]
    %vm884 = vcmask 1047556
    %v885 = vsel %vm884, %v883, %v881
    %886 = vrot.lane.b32.xlu0 %v885, 96
    %v887 = vpop.permute.xlu0 %886
    %vm888 = vcmask 1048320
    %s889 = scalar_lea.vmem %s1, 48
    %890 = vst.msk [vmem:[%s889] sm:$0xff] %vm888, %v887
    %s891 = scalar_lea.vmem [#allocation0], 643
    %v892 = vld [vmem:[%s891] ss:$8 sm:$0xf]
    %s893 = scalar_lea.vmem [#allocation0], 643
    %v894 = vld [vmem:[%s893] ss:$8 sm:$0xf0]
    %vm895 = vcmask 1047556
    %v896 = vsel %vm895, %v894, %v892
    %897 = vrot.lane.b32.xlu0 %v896, 96
    %v898 = vpop.permute.xlu0 %897
    %vm899 = vcmask 1048320
    %s900 = scalar_lea.vmem %s1, 80
    %901 = vst.msk [vmem:[%s900] sm:$0xff] %vm899, %v898
    %s902 = scalar_lea.vmem [#allocation0], 899
    %v903 = vld [vmem:[%s902] ss:$8 sm:$0xf]
    %s904 = scalar_lea.vmem [#allocation0], 899
    %v905 = vld [vmem:[%s904] ss:$8 sm:$0xf0]
    %vm906 = vcmask 1047556
    %v907 = vsel %vm906, %v905, %v903
    %908 = vrot.lane.b32.xlu0 %v907, 96
    %v909 = vpop.permute.xlu0 %908
    %vm910 = vcmask 1048320
    %s911 = scalar_lea.vmem %s1, 112
    %912 = vst.msk [vmem:[%s911] sm:$0xff] %vm910, %v909
    %s913 = scalar_lea.vmem [#allocation0], 195
    %v914 = vld [vmem:[%s913] ss:$8 sm:$0xf]
    %s915 = scalar_lea.vmem [#allocation0], 195
    %v916 = vld [vmem:[%s915] ss:$8 sm:$0xf0]
    %vm917 = vcmask 1047556
    %v918 = vsel %vm917, %v916, %v914
    %919 = vrot.lane.b32.xlu0 %v918, 96
    %v920 = vpop.permute.xlu0 %919
    %vm921 = vcmask 1048320
    %s922 = scalar_lea.vmem %s1, 24
    %923 = vst.msk [vmem:[%s922] sm:$0xff] %vm921, %v920
    %s924 = scalar_lea.vmem [#allocation0], 451
    %v925 = vld [vmem:[%s924] ss:$8 sm:$0xf]
    %s926 = scalar_lea.vmem [#allocation0], 451
    %v927 = vld [vmem:[%s926] ss:$8 sm:$0xf0]
    %vm928 = vcmask 1047556
    %v929 = vsel %vm928, %v927, %v925
    %930 = vrot.lane.b32.xlu0 %v929, 96
    %v931 = vpop.permute.xlu0 %930
    %vm932 = vcmask 1048320
    %s933 = scalar_lea.vmem %s1, 56
    %934 = vst.msk [vmem:[%s933] sm:$0xff] %vm932, %v931
    %s935 = scalar_lea.vmem [#allocation0], 707
    %v936 = vld [vmem:[%s935] ss:$8 sm:$0xf]
    %s937 = scalar_lea.vmem [#allocation0], 707
    %v938 = vld [vmem:[%s937] ss:$8 sm:$0xf0]
    %vm939 = vcmask 1047556
    %v940 = vsel %vm939, %v938, %v936
    %941 = vrot.lane.b32.xlu0 %v940, 96
    %v942 = vpop.permute.xlu0 %941
    %vm943 = vcmask 1048320
    %s944 = scalar_lea.vmem %s1, 88
    %945 = vst.msk [vmem:[%s944] sm:$0xff] %vm943, %v942
    %s946 = scalar_lea.vmem [#allocation0], 963
    %v947 = vld [vmem:[%s946] ss:$8 sm:$0xf]
    %s948 = scalar_lea.vmem [#allocation0], 963
    %v949 = vld [vmem:[%s948] ss:$8 sm:$0xf0]
    %vm950 = vcmask 1047556
    %v951 = vsel %vm950, %v949, %v947
    %952 = vrot.lane.b32.xlu0 %v951, 96
    %v953 = vpop.permute.xlu0 %952
    %vm954 = vcmask 1048320
    %s955 = scalar_lea.vmem %s1, 120
    %956 = vst.msk [vmem:[%s955] sm:$0xff] %vm954, %v953
    %s957 = scalar_lea.vmem [#allocation0], 2
    %v958 = vld [vmem:[%s957] ss:$8 sm:$0xf]
    %s959 = scalar_lea.vmem [#allocation0], 2
    %v960 = vld [vmem:[%s959] ss:$8 sm:$0xf0]
    %vm961 = vcmask 1047556
    %v962 = vsel %vm961, %v960, %v958
    %963 = vrot.lane.b32.xlu0 %v962, 64
    %v964 = vpop.permute.xlu0 %963
    %vm965 = vcmask 785920
    %966 = vst.msk [vmem:[%s1] sm:$0xff] %vm965, %v964
    %s967 = scalar_lea.vmem [#allocation0], 258
    %v968 = vld [vmem:[%s967] ss:$8 sm:$0xf]
    %s969 = scalar_lea.vmem [#allocation0], 258
    %v970 = vld [vmem:[%s969] ss:$8 sm:$0xf0]
    %vm971 = vcmask 1047556
    %v972 = vsel %vm971, %v970, %v968
    %973 = vrot.lane.b32.xlu0 %v972, 64
    %v974 = vpop.permute.xlu0 %973
    %vm975 = vcmask 785920
    %s976 = scalar_lea.vmem %s1, 32
    %977 = vst.msk [vmem:[%s976] sm:$0xff] %vm975, %v974
    %s978 = scalar_lea.vmem [#allocation0], 514
    %v979 = vld [vmem:[%s978] ss:$8 sm:$0xf]
    %s980 = scalar_lea.vmem [#allocation0], 514
    %v981 = vld [vmem:[%s980] ss:$8 sm:$0xf0]
    %vm982 = vcmask 1047556
    %v983 = vsel %vm982, %v981, %v979
    %984 = vrot.lane.b32.xlu0 %v983, 64
    %v985 = vpop.permute.xlu0 %984
    %vm986 = vcmask 785920
    %s987 = scalar_lea.vmem %s1, 64
    %988 = vst.msk [vmem:[%s987] sm:$0xff] %vm986, %v985
    %s989 = scalar_lea.vmem [#allocation0], 770
    %v990 = vld [vmem:[%s989] ss:$8 sm:$0xf]
    %s991 = scalar_lea.vmem [#allocation0], 770
    %v992 = vld [vmem:[%s991] ss:$8 sm:$0xf0]
    %vm993 = vcmask 1047556
    %v994 = vsel %vm993, %v992, %v990
    %995 = vrot.lane.b32.xlu0 %v994, 64
    %v996 = vpop.permute.xlu0 %995
    %vm997 = vcmask 785920
    %s998 = scalar_lea.vmem %s1, 96
    %999 = vst.msk [vmem:[%s998] sm:$0xff] %vm997, %v996
    %s1000 = scalar_lea.vmem [#allocation0], 66
    %v1001 = vld [vmem:[%s1000] ss:$8 sm:$0xf]
    %s1002 = scalar_lea.vmem [#allocation0], 66
    %v1003 = vld [vmem:[%s1002] ss:$8 sm:$0xf0]
    %vm1004 = vcmask 1047556
    %v1005 = vsel %vm1004, %v1003, %v1001
    %1006 = vrot.lane.b32.xlu0 %v1005, 64
    %v1007 = vpop.permute.xlu0 %1006
    %vm1008 = vcmask 785920
    %s1009 = scalar_lea.vmem %s1, 8
    %1010 = vst.msk [vmem:[%s1009] sm:$0xff] %vm1008, %v1007
    %s1011 = scalar_lea.vmem [#allocation0], 322
    %v1012 = vld [vmem:[%s1011] ss:$8 sm:$0xf]
    %s1013 = scalar_lea.vmem [#allocation0], 322
    %v1014 = vld [vmem:[%s1013] ss:$8 sm:$0xf0]
    %vm1015 = vcmask 1047556
    %v1016 = vsel %vm1015, %v1014, %v1012
    %1017 = vrot.lane.b32.xlu0 %v1016, 64
    %v1018 = vpop.permute.xlu0 %1017
    %vm1019 = vcmask 785920
    %s1020 = scalar_lea.vmem %s1, 40
    %1021 = vst.msk [vmem:[%s1020] sm:$0xff] %vm1019, %v1018
    %s1022 = scalar_lea.vmem [#allocation0], 578
    %v1023 = vld [vmem:[%s1022] ss:$8 sm:$0xf]
    %s1024 = scalar_lea.vmem [#allocation0], 578
    %v1025 = vld [vmem:[%s1024] ss:$8 sm:$0xf0]
    %vm1026 = vcmask 1047556
    %v1027 = vsel %vm1026, %v1025, %v1023
    %1028 = vrot.lane.b32.xlu0 %v1027, 64
    %v1029 = vpop.permute.xlu0 %1028
    %vm1030 = vcmask 785920
    %s1031 = scalar_lea.vmem %s1, 72
    %1032 = vst.msk [vmem:[%s1031] sm:$0xff] %vm1030, %v1029
    %s1033 = scalar_lea.vmem [#allocation0], 834
    %v1034 = vld [vmem:[%s1033] ss:$8 sm:$0xf]
    %s1035 = scalar_lea.vmem [#allocation0], 834
    %v1036 = vld [vmem:[%s1035] ss:$8 sm:$0xf0]
    %vm1037 = vcmask 1047556
    %v1038 = vsel %vm1037, %v1036, %v1034
    %1039 = vrot.lane.b32.xlu0 %v1038, 64
    %v1040 = vpop.permute.xlu0 %1039
    %vm1041 = vcmask 785920
    %s1042 = scalar_lea.vmem %s1, 104
    %1043 = vst.msk [vmem:[%s1042] sm:$0xff] %vm1041, %v1040
    %s1044 = scalar_lea.vmem [#allocation0], 130
    %v1045 = vld [vmem:[%s1044] ss:$8 sm:$0xf]
    %s1046 = scalar_lea.vmem [#allocation0], 130
    %v1047 = vld [vmem:[%s1046] ss:$8 sm:$0xf0]
    %vm1048 = vcmask 1047556
    %v1049 = vsel %vm1048, %v1047, %v1045
    %1050 = vrot.lane.b32.xlu0 %v1049, 64
    %v1051 = vpop.permute.xlu0 %1050
    %vm1052 = vcmask 785920
    %s1053 = scalar_lea.vmem %s1, 16
    %1054 = vst.msk [vmem:[%s1053] sm:$0xff] %vm1052, %v1051
    %s1055 = scalar_lea.vmem [#allocation0], 386
    %v1056 = vld [vmem:[%s1055] ss:$8 sm:$0xf]
    %s1057 = scalar_lea.vmem [#allocation0], 386
    %v1058 = vld [vmem:[%s1057] ss:$8 sm:$0xf0]
    %vm1059 = vcmask 1047556
    %v1060 = vsel %vm1059, %v1058, %v1056
    %1061 = vrot.lane.b32.xlu0 %v1060, 64
    %v1062 = vpop.permute.xlu0 %1061
    %vm1063 = vcmask 785920
    %s1064 = scalar_lea.vmem %s1, 48
    %1065 = vst.msk [vmem:[%s1064] sm:$0xff] %vm1063, %v1062
    %s1066 = scalar_lea.vmem [#allocation0], 642
    %v1067 = vld [vmem:[%s1066] ss:$8 sm:$0xf]
    %s1068 = scalar_lea.vmem [#allocation0], 642
    %v1069 = vld [vmem:[%s1068] ss:$8 sm:$0xf0]
    %vm1070 = vcmask 1047556
    %v1071 = vsel %vm1070, %v1069, %v1067
    %1072 = vrot.lane.b32.xlu0 %v1071, 64
    %v1073 = vpop.permute.xlu0 %1072
    %vm1074 = vcmask 785920
    %s1075 = scalar_lea.vmem %s1, 80
    %1076 = vst.msk [vmem:[%s1075] sm:$0xff] %vm1074, %v1073
    %s1077 = scalar_lea.vmem [#allocation0], 898
    %v1078 = vld [vmem:[%s1077] ss:$8 sm:$0xf]
    %s1079 = scalar_lea.vmem [#allocation0], 898
    %v1080 = vld [vmem:[%s1079] ss:$8 sm:$0xf0]
    %vm1081 = vcmask 1047556
    %v1082 = vsel %vm1081, %v1080, %v1078
    %1083 = vrot.lane.b32.xlu0 %v1082, 64
    %v1084 = vpop.permute.xlu0 %1083
    %vm1085 = vcmask 785920
    %s1086 = scalar_lea.vmem %s1, 112
    %1087 = vst.msk [vmem:[%s1086] sm:$0xff] %vm1085, %v1084
    %s1088 = scalar_lea.vmem [#allocation0], 194
    %v1089 = vld [vmem:[%s1088] ss:$8 sm:$0xf]
    %s1090 = scalar_lea.vmem [#allocation0], 194
    %v1091 = vld [vmem:[%s1090] ss:$8 sm:$0xf0]
    %vm1092 = vcmask 1047556
    %v1093 = vsel %vm1092, %v1091, %v1089
    %1094 = vrot.lane.b32.xlu0 %v1093, 64
    %v1095 = vpop.permute.xlu0 %1094
    %vm1096 = vcmask 785920
    %s1097 = scalar_lea.vmem %s1, 24
    %1098 = vst.msk [vmem:[%s1097] sm:$0xff] %vm1096, %v1095
    %s1099 = scalar_lea.vmem [#allocation0], 450
    %v1100 = vld [vmem:[%s1099] ss:$8 sm:$0xf]
    %s1101 = scalar_lea.vmem [#allocation0], 450
    %v1102 = vld [vmem:[%s1101] ss:$8 sm:$0xf0]
    %vm1103 = vcmask 1047556
    %v1104 = vsel %vm1103, %v1102, %v1100
    %1105 = vrot.lane.b32.xlu0 %v1104, 64
    %v1106 = vpop.permute.xlu0 %1105
    %vm1107 = vcmask 785920
    %s1108 = scalar_lea.vmem %s1, 56
    %1109 = vst.msk [vmem:[%s1108] sm:$0xff] %vm1107, %v1106
    %s1110 = scalar_lea.vmem [#allocation0], 706
    %v1111 = vld [vmem:[%s1110] ss:$8 sm:$0xf]
    %s1112 = scalar_lea.vmem [#allocation0], 706
    %v1113 = vld [vmem:[%s1112] ss:$8 sm:$0xf0]
    %vm1114 = vcmask 1047556
    %v1115 = vsel %vm1114, %v1113, %v1111
    %1116 = vrot.lane.b32.xlu0 %v1115, 64
    %v1117 = vpop.permute.xlu0 %1116
    %vm1118 = vcmask 785920
    %s1119 = scalar_lea.vmem %s1, 88
    %1120 = vst.msk [vmem:[%s1119] sm:$0xff] %vm1118, %v1117
    %s1121 = scalar_lea.vmem [#allocation0], 962
    %v1122 = vld [vmem:[%s1121] ss:$8 sm:$0xf]
    %s1123 = scalar_lea.vmem [#allocation0], 962
    %v1124 = vld [vmem:[%s1123] ss:$8 sm:$0xf0]
    %vm1125 = vcmask 1047556
    %v1126 = vsel %vm1125, %v1124, %v1122
    %1127 = vrot.lane.b32.xlu0 %v1126, 64
    %v1128 = vpop.permute.xlu0 %1127
    %vm1129 = vcmask 785920
    %s1130 = scalar_lea.vmem %s1, 120
    %1131 = vst.msk [vmem:[%s1130] sm:$0xff] %vm1129, %v1128
    %s1132 = scalar_lea.vmem [#allocation0], 1
    %v1133 = vld [vmem:[%s1132] ss:$8 sm:$0xf]
    %s1134 = scalar_lea.vmem [#allocation0], 1
    %v1135 = vld [vmem:[%s1134] ss:$8 sm:$0xf0]
    %vm1136 = vcmask 1047556
    %v1137 = vsel %vm1136, %v1135, %v1133
    %1138 = vrot.lane.b32.xlu0 %v1137, 32
    %v1139 = vpop.permute.xlu0 %1138
    %vm1140 = vcmask 523520
    %1141 = vst.msk [vmem:[%s1] sm:$0xff] %vm1140, %v1139
    %s1142 = scalar_lea.vmem [#allocation0], 257
    %v1143 = vld [vmem:[%s1142] ss:$8 sm:$0xf]
    %s1144 = scalar_lea.vmem [#allocation0], 257
    %v1145 = vld [vmem:[%s1144] ss:$8 sm:$0xf0]
    %vm1146 = vcmask 1047556
    %v1147 = vsel %vm1146, %v1145, %v1143
    %1148 = vrot.lane.b32.xlu0 %v1147, 32
    %v1149 = vpop.permute.xlu0 %1148
    %vm1150 = vcmask 523520
    %s1151 = scalar_lea.vmem %s1, 32
    %1152 = vst.msk [vmem:[%s1151] sm:$0xff] %vm1150, %v1149
    %s1153 = scalar_lea.vmem [#allocation0], 513
    %v1154 = vld [vmem:[%s1153] ss:$8 sm:$0xf]
    %s1155 = scalar_lea.vmem [#allocation0], 513
    %v1156 = vld [vmem:[%s1155] ss:$8 sm:$0xf0]
    %vm1157 = vcmask 1047556
    %v1158 = vsel %vm1157, %v1156, %v1154
    %1159 = vrot.lane.b32.xlu0 %v1158, 32
    %v1160 = vpop.permute.xlu0 %1159
    %vm1161 = vcmask 523520
    %s1162 = scalar_lea.vmem %s1, 64
    %1163 = vst.msk [vmem:[%s1162] sm:$0xff] %vm1161, %v1160
    %s1164 = scalar_lea.vmem [#allocation0], 769
    %v1165 = vld [vmem:[%s1164] ss:$8 sm:$0xf]
    %s1166 = scalar_lea.vmem [#allocation0], 769
    %v1167 = vld [vmem:[%s1166] ss:$8 sm:$0xf0]
    %vm1168 = vcmask 1047556
    %v1169 = vsel %vm1168, %v1167, %v1165
    %1170 = vrot.lane.b32.xlu0 %v1169, 32
    %v1171 = vpop.permute.xlu0 %1170
    %vm1172 = vcmask 523520
    %s1173 = scalar_lea.vmem %s1, 96
    %1174 = vst.msk [vmem:[%s1173] sm:$0xff] %vm1172, %v1171
    %s1175 = scalar_lea.vmem [#allocation0], 65
    %v1176 = vld [vmem:[%s1175] ss:$8 sm:$0xf]
    %s1177 = scalar_lea.vmem [#allocation0], 65
    %v1178 = vld [vmem:[%s1177] ss:$8 sm:$0xf0]
    %vm1179 = vcmask 1047556
    %v1180 = vsel %vm1179, %v1178, %v1176
    %1181 = vrot.lane.b32.xlu0 %v1180, 32
    %v1182 = vpop.permute.xlu0 %1181
    %vm1183 = vcmask 523520
    %s1184 = scalar_lea.vmem %s1, 8
    %1185 = vst.msk [vmem:[%s1184] sm:$0xff] %vm1183, %v1182
    %s1186 = scalar_lea.vmem [#allocation0], 321
    %v1187 = vld [vmem:[%s1186] ss:$8 sm:$0xf]
    %s1188 = scalar_lea.vmem [#allocation0], 321
    %v1189 = vld [vmem:[%s1188] ss:$8 sm:$0xf0]
    %vm1190 = vcmask 1047556
    %v1191 = vsel %vm1190, %v1189, %v1187
    %1192 = vrot.lane.b32.xlu0 %v1191, 32
    %v1193 = vpop.permute.xlu0 %1192
    %vm1194 = vcmask 523520
    %s1195 = scalar_lea.vmem %s1, 40
    %1196 = vst.msk [vmem:[%s1195] sm:$0xff] %vm1194, %v1193
    %s1197 = scalar_lea.vmem [#allocation0], 577
    %v1198 = vld [vmem:[%s1197] ss:$8 sm:$0xf]
    %s1199 = scalar_lea.vmem [#allocation0], 577
    %v1200 = vld [vmem:[%s1199] ss:$8 sm:$0xf0]
    %vm1201 = vcmask 1047556
    %v1202 = vsel %vm1201, %v1200, %v1198
    %1203 = vrot.lane.b32.xlu0 %v1202, 32
    %v1204 = vpop.permute.xlu0 %1203
    %vm1205 = vcmask 523520
    %s1206 = scalar_lea.vmem %s1, 72
    %1207 = vst.msk [vmem:[%s1206] sm:$0xff] %vm1205, %v1204
    %s1208 = scalar_lea.vmem [#allocation0], 833
    %v1209 = vld [vmem:[%s1208] ss:$8 sm:$0xf]
    %s1210 = scalar_lea.vmem [#allocation0], 833
    %v1211 = vld [vmem:[%s1210] ss:$8 sm:$0xf0]
    %vm1212 = vcmask 1047556
    %v1213 = vsel %vm1212, %v1211, %v1209
    %1214 = vrot.lane.b32.xlu0 %v1213, 32
    %v1215 = vpop.permute.xlu0 %1214
    %vm1216 = vcmask 523520
    %s1217 = scalar_lea.vmem %s1, 104
    %1218 = vst.msk [vmem:[%s1217] sm:$0xff] %vm1216, %v1215
    %s1219 = scalar_lea.vmem [#allocation0], 129
    %v1220 = vld [vmem:[%s1219] ss:$8 sm:$0xf]
    %s1221 = scalar_lea.vmem [#allocation0], 129
    %v1222 = vld [vmem:[%s1221] ss:$8 sm:$0xf0]
    %vm1223 = vcmask 1047556
    %v1224 = vsel %vm1223, %v1222, %v1220
    %1225 = vrot.lane.b32.xlu0 %v1224, 32
    %v1226 = vpop.permute.xlu0 %1225
    %vm1227 = vcmask 523520
    %s1228 = scalar_lea.vmem %s1, 16
    %1229 = vst.msk [vmem:[%s1228] sm:$0xff] %vm1227, %v1226
    %s1230 = scalar_lea.vmem [#allocation0], 385
    %v1231 = vld [vmem:[%s1230] ss:$8 sm:$0xf]
    %s1232 = scalar_lea.vmem [#allocation0], 385
    %v1233 = vld [vmem:[%s1232] ss:$8 sm:$0xf0]
    %vm1234 = vcmask 1047556
    %v1235 = vsel %vm1234, %v1233, %v1231
    %1236 = vrot.lane.b32.xlu0 %v1235, 32
    %v1237 = vpop.permute.xlu0 %1236
    %vm1238 = vcmask 523520
    %s1239 = scalar_lea.vmem %s1, 48
    %1240 = vst.msk [vmem:[%s1239] sm:$0xff] %vm1238, %v1237
    %s1241 = scalar_lea.vmem [#allocation0], 641
    %v1242 = vld [vmem:[%s1241] ss:$8 sm:$0xf]
    %s1243 = scalar_lea.vmem [#allocation0], 641
    %v1244 = vld [vmem:[%s1243] ss:$8 sm:$0xf0]
    %vm1245 = vcmask 1047556
    %v1246 = vsel %vm1245, %v1244, %v1242
    %1247 = vrot.lane.b32.xlu0 %v1246, 32
    %v1248 = vpop.permute.xlu0 %1247
    %vm1249 = vcmask 523520
    %s1250 = scalar_lea.vmem %s1, 80
    %1251 = vst.msk [vmem:[%s1250] sm:$0xff] %vm1249, %v1248
    %s1252 = scalar_lea.vmem [#allocation0], 897
    %v1253 = vld [vmem:[%s1252] ss:$8 sm:$0xf]
    %s1254 = scalar_lea.vmem [#allocation0], 897
    %v1255 = vld [vmem:[%s1254] ss:$8 sm:$0xf0]
    %vm1256 = vcmask 1047556
    %v1257 = vsel %vm1256, %v1255, %v1253
    %1258 = vrot.lane.b32.xlu0 %v1257, 32
    %v1259 = vpop.permute.xlu0 %1258
    %vm1260 = vcmask 523520
    %s1261 = scalar_lea.vmem %s1, 112
    %1262 = vst.msk [vmem:[%s1261] sm:$0xff] %vm1260, %v1259
    %s1263 = scalar_lea.vmem [#allocation0], 193
    %v1264 = vld [vmem:[%s1263] ss:$8 sm:$0xf]
    %s1265 = scalar_lea.vmem [#allocation0], 193
    %v1266 = vld [vmem:[%s1265] ss:$8 sm:$0xf0]
    %vm1267 = vcmask 1047556
    %v1268 = vsel %vm1267, %v1266, %v1264
    %1269 = vrot.lane.b32.xlu0 %v1268, 32
    %v1270 = vpop.permute.xlu0 %1269
    %vm1271 = vcmask 523520
    %s1272 = scalar_lea.vmem %s1, 24
    %1273 = vst.msk [vmem:[%s1272] sm:$0xff] %vm1271, %v1270
    %s1274 = scalar_lea.vmem [#allocation0], 449
    %v1275 = vld [vmem:[%s1274] ss:$8 sm:$0xf]
    %s1276 = scalar_lea.vmem [#allocation0], 449
    %v1277 = vld [vmem:[%s1276] ss:$8 sm:$0xf0]
    %vm1278 = vcmask 1047556
    %v1279 = vsel %vm1278, %v1277, %v1275
    %1280 = vrot.lane.b32.xlu0 %v1279, 32
    %v1281 = vpop.permute.xlu0 %1280
    %vm1282 = vcmask 523520
    %s1283 = scalar_lea.vmem %s1, 56
    %1284 = vst.msk [vmem:[%s1283] sm:$0xff] %vm1282, %v1281
    %s1285 = scalar_lea.vmem [#allocation0], 705
    %v1286 = vld [vmem:[%s1285] ss:$8 sm:$0xf]
    %s1287 = scalar_lea.vmem [#allocation0], 705
    %v1288 = vld [vmem:[%s1287] ss:$8 sm:$0xf0]
    %vm1289 = vcmask 1047556
    %v1290 = vsel %vm1289, %v1288, %v1286
    %1291 = vrot.lane.b32.xlu0 %v1290, 32
    %v1292 = vpop.permute.xlu0 %1291
    %vm1293 = vcmask 523520
    %s1294 = scalar_lea.vmem %s1, 88
    %1295 = vst.msk [vmem:[%s1294] sm:$0xff] %vm1293, %v1292
    %s1296 = scalar_lea.vmem [#allocation0], 961
    %v1297 = vld [vmem:[%s1296] ss:$8 sm:$0xf]
    %s1298 = scalar_lea.vmem [#allocation0], 961
    %v1299 = vld [vmem:[%s1298] ss:$8 sm:$0xf0]
    %vm1300 = vcmask 1047556
    %v1301 = vsel %vm1300, %v1299, %v1297
    %1302 = vrot.lane.b32.xlu0 %v1301, 32
    %v1303 = vpop.permute.xlu0 %1302
    %vm1304 = vcmask 523520
    %s1305 = scalar_lea.vmem %s1, 120
    %1306 = vst.msk [vmem:[%s1305] sm:$0xff] %vm1304, %v1303

// kernel: squeeze.13
$region0: #{squeeze.13}
  %s0 = inlined_call_operand.vmem [shape: f32[1,4,4,32], index: 0, kind: input, shape index: {}]
  %s1 = inlined_call_operand.vmem [shape: f32[4,128], index: 1, kind: output, shape index: {}]
  $region1: #{squeeze.13} parent=0
    #allocation0 [shape = 'u8[4096]{0}', space=vmem, size = 0x1000, scoped, tag = 'scoped mem for output reshape']
    #allocation1 [shape = 'u8[16384]{0}', space=vmem, size = 0x4000, scoped, tag = 'scoped mem for input reshape']
    %s3 = sshll.u32 1, 4
    %s4 = ssub.s32 %s3, 1
    %s5 = smul.addr 4, 3
    %s6 = scalar_lea.vmem %s0, %s5
    %v7 = vld [vmem:[%s6] sm:%s4]
    %s8 = scalar_lea.vmem [#allocation1], 24
    %9 = vst [vmem:[%s8] sm:%s4] %v7
    %s10 = smul.addr 4, 2
    %s11 = scalar_lea.vmem %s0, %s10
    %v12 = vld [vmem:[%s11] sm:%s4]
    %s13 = scalar_lea.vmem [#allocation1], 16
    %14 = vst [vmem:[%s13] sm:%s4] %v12
    %s15 = scalar_lea.vmem %s0, 4
    %v16 = vld [vmem:[%s15] sm:%s4]
    %s17 = scalar_lea.vmem [#allocation1], 8
    %18 = vst [vmem:[%s17] sm:%s4] %v16
    %v19 = vld [vmem:[%s0] sm:%s4]
    %20 = vst [vmem:[#allocation1] sm:%s4] %v19
    %v21 = vld [vmem:[#allocation1] ss:$8 sm:$0xf]
    %vm22 = vcmask 261120
    %23 = vst.msk [vmem:[#allocation0] sm:$0xf] %vm22, %v21
    %s24 = scalar_lea.vmem [#allocation1], 3
    %v25 = vld [vmem:[%s24] ss:$8 sm:$0xf]
    %26 = vrot.lane.b32.xlu0 %v25, 96
    %v27 = vpop.permute.xlu0 %26
    %vm28 = vcmask 1048320
    %29 = vst.msk [vmem:[#allocation0] sm:$0xf] %vm28, %v27
    %s30 = scalar_lea.vmem [#allocation1], 2
    %v31 = vld [vmem:[%s30] ss:$8 sm:$0xf]
    %32 = vrot.lane.b32.xlu0 %v31, 64
    %v33 = vpop.permute.xlu0 %32
    %vm34 = vcmask 785920
    %35 = vst.msk [vmem:[#allocation0] sm:$0xf] %vm34, %v33
    %s36 = scalar_lea.vmem [#allocation1], 1
    %v37 = vld [vmem:[%s36] ss:$8 sm:$0xf]
    %38 = vrot.lane.b32.xlu0 %v37, 32
    %v39 = vpop.permute.xlu0 %38
    %vm40 = vcmask 523520
    %41 = vst.msk [vmem:[#allocation0] sm:$0xf] %vm40, %v39
    %s43 = sshll.u32 1, 4
    %s44 = ssub.s32 %s43, 1
    %v46 = vld [vmem:[#allocation0] sm:%s44]
    %s47 = sshll.u32 1, 4
    %s48 = ssub.s32 %s47, 1
    %49 = vst [vmem:[%s1] sm:%s48] %v46

// kernel: concare_forward.1
$region0: #{concare_forward.1}
  #allocation0 [shape = 'u32[]', space=smem, size = 0x4, offset = 0x4, fixed_abs, tag = 'smem constant byte address 0x4 - core index']
  #allocation1 [shape = 'u32[144,128]{1,0:T(1,128)}', space=vmem, size = 0x12000, scoped, tag = 'internal scratch']
  %s0 = inlined_call_operand.vmem [shape: f32[16,4], index: 0, kind: input, shape index: {}]
  %s1 = inlined_call_operand.vmem [shape: f32[128,416], index: 1, kind: input, shape index: {}]
  %s2 = inlined_call_operand.vmem [shape: f32[4,512], index: 2, kind: input, shape index: {}]
  %s3 = inlined_call_operand.vmem [shape: f32[10,128], index: 3, kind: input, shape index: {}]
  %s4 = inlined_call_operand.vmem [shape: f32[32,400], index: 4, kind: input, shape index: {}]
  %s5 = inlined_call_operand.vmem [shape: f32[16,53], index: 5, kind: input, shape index: {}]
  %s6 = inlined_call_operand.hbm [shape: f32[2,32], index: 6, kind: output, shape index: {0}]
  %s7 = inlined_call_operand.hbm [shape: f32[2,4], index: 7, kind: output, shape index: {1}]
  %s8 = inlined_call_operand.hbm [shape: f32[1,1], index: 8, kind: output, shape index: {2}]
  %9 = xla_tuple %s6, %s7, %s8
  %s10 = sld [smem:[#allocation0]]
  $region50: #{concare_forward.1} parent=0
    _
  %s12 = ssub.s32 1, %s10
  %s13 = scalar_select 0, %s12, %s10
  $region1: #{concare_forward.1} parent=0
    #allocation2 [shape = 'u8[1024]{0}', space=vmem, size = 0x400, scoped, tag = 'output window, operand 0, single buffered']
    #allocation3 [shape = 's32[1]{0}', space=sflag, size = 0x4, scoped, tag = 'scoped memory for concare_forward.1']
    #allocation4 [shape = 'u8[1024]{0}', space=vmem, size = 0x400, scoped, tag = 'output window, operand 1, single buffered']
    #allocation5 [shape = 's32[1]{0}', space=sflag, size = 0x4, scoped, tag = 'scoped memory for concare_forward.1']
    #allocation6 [shape = 'u8[512]{0}', space=vmem, size = 0x400, scoped, tag = 'output window, operand 2, single buffered']
    %14 = vsyncpa [#allocation3], 0
    %15 = vsyncpa [#allocation5], 0
    // Predicated region
    $region2: #{concare_forward.1} parent=1 // pred_check
      _
    $region3: #{concare_forward.1} parent=1 // pred_check_branch
      %17 = sbr.rel (0) target = $region5
    $region4: #{concare_forward.1} parent=1 // pred_region
      _
    $region5: #{concare_forward.1} parent=1 // pred_fallthru
      _
    // Predicated region
    $region6: #{concare_forward.1} parent=1 // pred_check
      _
    $region7: #{concare_forward.1} parent=1 // pred_check_branch
      %19 = sbr.rel (0) target = $region9
    $region8: #{concare_forward.1} parent=1 // pred_region
      _
    $region9: #{concare_forward.1} parent=1 // pred_fallthru
      _
    // Predicated region
    $region10: #{concare_forward.1} parent=1 // pred_check
      _
    $region11: #{concare_forward.1} parent=1 // pred_check_branch
      %21 = sbr.rel (0) target = $region13
    $region12: #{concare_forward.1} parent=1 // pred_region
      _
    $region13: #{concare_forward.1} parent=1 // pred_fallthru
      _
    // Predicated region
    $region14: #{concare_forward.1} parent=1 // pred_check
      _
    $region15: #{concare_forward.1} parent=1 // pred_check_branch
      %23 = sbr.rel (0) target = $region17
    $region16: #{concare_forward.1} parent=1 // pred_region
      _
    $region17: #{concare_forward.1} parent=1 // pred_fallthru
      _
    // Predicated region
    $region18: #{concare_forward.1} parent=1 // pred_check
      _
    $region19: #{concare_forward.1} parent=1 // pred_check_branch
      %25 = sbr.rel (0) target = $region21
    $region20: #{concare_forward.1} parent=1 // pred_region
      _
    $region21: #{concare_forward.1} parent=1 // pred_fallthru
      _
    // Predicated region
    $region22: #{concare_forward.1} parent=1 // pred_check
      _
    $region23: #{concare_forward.1} parent=1 // pred_check_branch
      %27 = sbr.rel (0) target = $region25
    $region24: #{concare_forward.1} parent=1 // pred_region
      _
    $region25: #{concare_forward.1} parent=1 // pred_fallthru
      _
    %v28 = vld [vmem:[%s1] sm:$0xff]
    %v29 = vld [vmem:[%s1 + $0x8] sm:$0xff]
    %v30 = vld [vmem:[%s1 + $0x10] sm:$0xff]
    %v31 = vld [vmem:[%s1 + $0x20] sm:$0xff]
    %v32 = vld [vmem:[%s1 + $0x28] sm:$0xff]
    %v33 = vld [vmem:[%s1 + $0x30] sm:$0xff]
    %v34 = vld [vmem:[%s1 + $0x40] sm:$0xff]
    %v35 = vld [vmem:[%s1 + $0x48] sm:$0xff]
    %v36 = vld [vmem:[%s1 + $0x50] sm:$0xff]
    %v37 = vld [vmem:[%s1 + $0x60] sm:$0xff]
    %v38 = vld [vmem:[%s1 + $0x68] sm:$0xff]
    %v39 = vld [vmem:[%s1 + $0x70] sm:$0xff]
    %v40 = vld [vmem:[%s1 + $0x80] sm:$0xff]
    %v41 = vld [vmem:[%s1 + $0x88] sm:$0xff]
    %v42 = vld [vmem:[%s1 + $0x90] sm:$0xff]
    %v43 = vld [vmem:[%s1 + $0xa0] sm:$0xff]
    %v44 = vld [vmem:[%s1 + $0xa8] sm:$0xff]
    %v45 = vld [vmem:[%s1 + $0xb0] sm:$0xff]
    %v46 = vld [vmem:[%s1 + $0xc0] sm:$0xff]
    %v47 = vld [vmem:[%s1 + $0xc8] sm:$0xff]
    %v48 = vld [vmem:[%s1 + $0xd0] sm:$0xff]
    %v49 = vld [vmem:[%s1 + $0xe0] sm:$0xff]
    %v50 = vld [vmem:[%s1 + $0xe8] sm:$0xff]
    %v51 = vld [vmem:[%s1 + $0xf0] sm:$0xff]
    %v52 = vld [vmem:[%s1 + $0x100] sm:$0xff]
    %v53 = vld [vmem:[%s1 + $0x108] sm:$0xff]
    %v54 = vld [vmem:[%s1 + $0x110] sm:$0xff]
    %v55 = vld [vmem:[%s1 + $0x120] sm:$0xff]
    %v56 = vld [vmem:[%s1 + $0x128] sm:$0xff]
    %v57 = vld [vmem:[%s1 + $0x130] sm:$0xff]
    %v58 = vld [vmem:[%s1 + $0x140] sm:$0xff]
    %v59 = vld [vmem:[%s1 + $0x148] sm:$0xff]
    %v60 = vld [vmem:[%s1 + $0x150] sm:$0xff]
    %v61 = vld [vmem:[%s1 + $0x160] sm:$0xff]
    %v62 = vld [vmem:[%s1 + $0x168] sm:$0xff]
    %v63 = vld [vmem:[%s1 + $0x170] sm:$0xff]
    %v64 = vld [vmem:[%s1 + $0x180] sm:$0xff]
    %v65 = vld [vmem:[%s1 + $0x188] sm:$0xff]
    %v66 = vld [vmem:[%s1 + $0x190] sm:$0xff]
    %v67 = vld [vmem:[%s1 + $0x1a0] sm:$0xff]
    %v68 = vld [vmem:[%s1 + $0x1a8] sm:$0xff]
    %v69 = vld [vmem:[%s1 + $0x1b0] sm:$0xff]
    %v70 = vld [vmem:[%s1 + $0x1c0] sm:$0xff]
    %v71 = vld [vmem:[%s1 + $0x1c8] sm:$0xff]
    %v72 = vld [vmem:[%s1 + $0x1d0] sm:$0xff]
    %v73 = vld [vmem:[%s1 + $0x1e0] sm:$0xff]
    %v74 = vld [vmem:[%s1 + $0x1e8] sm:$0xff]
    %v75 = vld [vmem:[%s1 + $0x1f0] sm:$0xff]
    %v76 = vld [vmem:[%s1 + $0x18] sm:$0xff]
    %v77 = vld [vmem:[%s1 + $0x38] sm:$0xff]
    %v78 = vld [vmem:[%s1 + $0x58] sm:$0xff]
    %v79 = vld [vmem:[%s1 + $0x78] sm:$0xff]
    %v80 = vld [vmem:[%s1 + $0x98] sm:$0xff]
    %v81 = vld [vmem:[%s1 + $0xb8] sm:$0xff]
    %v82 = vld [vmem:[%s1 + $0xd8] sm:$0xff]
    %v83 = vld [vmem:[%s1 + $0xf8] sm:$0xff]
    %v84 = vld [vmem:[%s1 + $0x118] sm:$0xff]
    %v85 = vld [vmem:[%s1 + $0x138] sm:$0xff]
    %v86 = vld [vmem:[%s1 + $0x158] sm:$0xff]
    %v87 = vld [vmem:[%s1 + $0x178] sm:$0xff]
    %v88 = vld [vmem:[%s1 + $0x198] sm:$0xff]
    %v89 = vld [vmem:[%s1 + $0x1b8] sm:$0xff]
    %v90 = vld [vmem:[%s1 + $0x1d8] sm:$0xff]
    %v91 = vld [vmem:[%s1 + $0x1f8] sm:$0xff]
    %v92 = vld [vmem:[%s2] sm:$0xff]
    %v93 = vld [vmem:[%s2 + $0x8] sm:$0xf]
    %v94 = vld [vmem:[%s2 + $0xc] sm:$0xf]
    %v95 = vld [vmem:[%s3] sm:$0x1]
    %v96 = vld [vmem:[%s3 + $0x1] sm:$0x1]
    %v97 = vld [vmem:[%s3 + $0x2] sm:$0x1]
    %v98 = vld [vmem:[%s3 + $0x3] sm:$0x1]
    %v99 = vld [vmem:[%s0] sm:$0xff]
    %v100 = vld [vmem:[%s0 + $0x8] sm:$0xff]
    %v103 = vcombine.high %v92, %v92
    %vm104 = vcmask 31744
    %v106 = vsel %vm104, %v99, 0
    %v109 = vsel %vm104, %v100, 0
    %vm111 = vcmask 1043456
    %v112 = vsel %vm111, %v92, 0
    %v114 = vsel %vm111, %v103, 0
    %v116 = vsel %vm111, %v93, 0
    %118 = vmatprep.subr.mxu0 0.0
    %119 = vmatpush1.msra.mxu0 0.0
    %120 = vmatprep.subr.mxu0 0.0
    %121 = vmatpush1.msra.mxu0 0.0
    %122 = vmatprep.subr.mxu0 0.0
    %123 = vmatpush1.msra.mxu0 0.0
    %124 = vmatprep.subr.mxu0 0.0
    %125 = vmatpush1.msra.mxu0 0.0
    %126 = vmatprep.subr.mxu0 0.0
    %127 = vmatpush1.msra.mxu0 0.0
    %128 = vmatprep.subr.mxu0 0.0
    %129 = vmatpush1.msra.mxu0 0.0
    %130 = vmatprep.subr.mxu0 0.0
    %131 = vmatpush1.msra.mxu0 0.0
    %132 = vmatprep.subr.mxu0 0.0
    %133 = vmatpush1.msra.mxu0 0.0
    %134 = vmatprep.subr.mxu0 0.0
    %135 = vmatpush1.msra.mxu0 0.0
    %136 = vmatprep.subr.mxu0 0.0
    %137 = vmatpush1.msra.mxu0 0.0
    %138 = vmatprep.subr.mxu0 0.0
    %139 = vmatpush1.msra.mxu0 0.0
    %140 = vmatprep.subr.mxu0 0.0
    %141 = vmatpush1.msra.mxu0 0.0
    %142 = vmatprep.subr.mxu0 0.0
    %143 = vmatpush1.msra.mxu0 0.0
    %144 = vmatprep.subr.mxu0 0.0
    %145 = vmatpush1.msra.mxu0 0.0
    %146 = vmatprep.subr.mxu0 0.0
    %147 = vmatpush1.msra.mxu0 0.0
    %148 = vmatprep.subr.mxu0 %v114
    %149 = vmatpush1.msra.mxu0 %v112
    %150 = vmatprep.subr.mxu0 0.0
    %151 = vmatpush2.msra.mxu0 0.0
    %152 = vmatprep.subr.mxu0 0.0
    %153 = vmatpush2.msra.mxu0 0.0
    %154 = vmatprep.subr.mxu0 0.0
    %155 = vmatpush2.msra.mxu0 0.0
    %156 = vmatprep.subr.mxu0 0.0
    %157 = vmatpush2.msra.mxu0 0.0
    %158 = vmatprep.subr.mxu0 0.0
    %159 = vmatpush2.msra.mxu0 0.0
    %160 = vmatprep.subr.mxu0 0.0
    %161 = vmatpush2.msra.mxu0 0.0
    %162 = vmatprep.subr.mxu0 0.0
    %163 = vmatpush2.msra.mxu0 0.0
    %164 = vmatprep.subr.mxu0 0.0
    %165 = vmatpush2.msra.mxu0 0.0
    %166 = vmatprep.subr.mxu0 0.0
    %167 = vmatpush2.msra.mxu0 0.0
    %168 = vmatprep.subr.mxu0 0.0
    %169 = vmatpush2.msra.mxu0 0.0
    %170 = vmatprep.subr.mxu0 0.0
    %171 = vmatpush2.msra.mxu0 0.0
    %172 = vmatprep.subr.mxu0 0.0
    %173 = vmatpush2.msra.mxu0 0.0
    %174 = vmatprep.subr.mxu0 0.0
    %175 = vmatpush2.msra.mxu0 0.0
    %176 = vmatprep.subr.mxu0 0.0
    %177 = vmatpush2.msra.mxu0 0.0
    %178 = vmatprep.subr.mxu0 0.0
    %179 = vmatpush2.msra.mxu0 0.0
    %180 = vmatprep.subr.mxu0 0.0
    %181 = vmatpush2.msra.mxu0 0.0
    %182 = vmatprep.mubr.f32.mxu0 0.0
    %183 = vmatmul.mubr.f32.gmra.mxu0 %v106
    %v184 = vpop.f32.mrf.mxu0
    %v185 = vadd.f32 0.0, %v184
    %v186 = vpop.f32.mrf.mxu0
    %v187 = vadd.f32 0.0, %v186
    %188 = vmatprep.mubr.f32.mxu0 0.0
    %189 = vmatmul.mubr.f32.gmra.mxu0 %v109
    %v190 = vpop.f32.mrf.mxu0
    %v191 = vadd.f32 0.0, %v190
    %v192 = vpop.f32.mrf.mxu0
    %v193 = vadd.f32 0.0, %v192
    %194 = vdwg.mxu0
    %195 = vmatprep.subr.mxu0 0.0
    %196 = vmatpush1.msra.mxu0 0.0
    %197 = vmatprep.subr.mxu0 0.0
    %198 = vmatpush1.msra.mxu0 0.0
    %199 = vmatprep.subr.mxu0 0.0
    %200 = vmatpush1.msra.mxu0 0.0
    %201 = vmatprep.subr.mxu0 0.0
    %202 = vmatpush1.msra.mxu0 0.0
    %203 = vmatprep.subr.mxu0 0.0
    %204 = vmatpush1.msra.mxu0 0.0
    %205 = vmatprep.subr.mxu0 0.0
    %206 = vmatpush1.msra.mxu0 0.0
    %207 = vmatprep.subr.mxu0 0.0
    %208 = vmatpush1.msra.mxu0 0.0
    %209 = vmatprep.subr.mxu0 0.0
    %210 = vmatpush1.msra.mxu0 0.0
    %211 = vmatprep.subr.mxu0 0.0
    %212 = vmatpush1.msra.mxu0 0.0
    %213 = vmatprep.subr.mxu0 0.0
    %214 = vmatpush1.msra.mxu0 0.0
    %215 = vmatprep.subr.mxu0 0.0
    %216 = vmatpush1.msra.mxu0 0.0
    %217 = vmatprep.subr.mxu0 0.0
    %218 = vmatpush1.msra.mxu0 0.0
    %219 = vmatprep.subr.mxu0 0.0
    %220 = vmatpush1.msra.mxu0 0.0
    %221 = vmatprep.subr.mxu0 0.0
    %222 = vmatpush1.msra.mxu0 0.0
    %223 = vmatprep.subr.mxu0 0.0
    %224 = vmatpush1.msra.mxu0 0.0
    %225 = vmatprep.subr.mxu0 0.0
    %226 = vmatpush1.msra.mxu0 %v116
    %227 = vmatprep.subr.mxu0 0.0
    %228 = vmatpush2.msra.mxu0 0.0
    %229 = vmatprep.subr.mxu0 0.0
    %230 = vmatpush2.msra.mxu0 0.0
    %231 = vmatprep.subr.mxu0 0.0
    %232 = vmatpush2.msra.mxu0 0.0
    %233 = vmatprep.subr.mxu0 0.0
    %234 = vmatpush2.msra.mxu0 0.0
    %235 = vmatprep.subr.mxu0 0.0
    %236 = vmatpush2.msra.mxu0 0.0
    %237 = vmatprep.subr.mxu0 0.0
    %238 = vmatpush2.msra.mxu0 0.0
    %239 = vmatprep.subr.mxu0 0.0
    %240 = vmatpush2.msra.mxu0 0.0
    %241 = vmatprep.subr.mxu0 0.0
    %242 = vmatpush2.msra.mxu0 0.0
    %243 = vmatprep.subr.mxu0 0.0
    %244 = vmatpush2.msra.mxu0 0.0
    %245 = vmatprep.subr.mxu0 0.0
    %246 = vmatpush2.msra.mxu0 0.0
    %247 = vmatprep.subr.mxu0 0.0
    %248 = vmatpush2.msra.mxu0 0.0
    %249 = vmatprep.subr.mxu0 0.0
    %250 = vmatpush2.msra.mxu0 0.0
    %251 = vmatprep.subr.mxu0 0.0
    %252 = vmatpush2.msra.mxu0 0.0
    %253 = vmatprep.subr.mxu0 0.0
    %254 = vmatpush2.msra.mxu0 0.0
    %255 = vmatprep.subr.mxu0 0.0
    %256 = vmatpush2.msra.mxu0 0.0
    %257 = vmatprep.subr.mxu0 0.0
    %258 = vmatpush2.msra.mxu0 0.0
    %259 = vmatprep.mubr.f32.mxu0 0.0
    %260 = vmatmul.mubr.f32.gmra.mxu0 %v106
    %v261 = vpop.f32.mrf.mxu0
    %v262 = vadd.f32 0.0, %v261
    %v263 = vpop.f32.mrf.mxu0
    %264 = vmatprep.mubr.f32.mxu0 0.0
    %265 = vmatmul.mubr.f32.gmra.mxu0 %v109
    %v266 = vpop.f32.mrf.mxu0
    %v267 = vadd.f32 0.0, %v266
    %v268 = vpop.f32.mrf.mxu0
    %269 = vdwg.mxu0
    %v270 = vadd.f32 %v185, 0.0
    %v271 = vlaneseq
    %v272 = vshrl.u32 %v271, 7
    %v273 = vsub.s32 0, %v272
    %v274 = vrot.slane %v95, %v273
    %v275 = vadd.f32 %v270, %v274
    %v276 = vxor.u32 %v275, 2147483648
    %v277 = vmul.f32 %v276, 1.442695
    %v278 = vpow.pop %v277
    %v279 = vadd.f32 %v278, 1.0
    %v280 = vrcp.pop %v279
    %v281 = vmul.f32 1.0, %v280
    %v282 = vadd.f32 %v187, 0.0
    %v283 = vlaneseq
    %v284 = vshrl.u32 %v283, 7
    %v285 = vsub.s32 0, %v284
    %v286 = vrot.slane %v96, %v285
    %v287 = vadd.f32 %v282, %v286
    %v288 = vxor.u32 %v287, 2147483648
    %v289 = vmul.f32 %v288, 1.442695
    %v290 = vpow.pop %v289
    %v291 = vadd.f32 %v290, 1.0
    %v292 = vrcp.pop %v291
    %v293 = vmul.f32 1.0, %v292
    %v294 = vlaneseq
    %v295 = vshrl.u32 %v294, 7
    %v296 = vsub.s32 0, %v295
    %v297 = vrot.slane %v97, %v296
    %v298 = vadd.f32 %v262, %v297
    %v299 = vlaneseq
    %v300 = vshrl.u32 %v299, 7
    %v301 = vsub.s32 0, %v300
    %v302 = vrot.slane %v98, %v301
    %v303 = vadd.f32 %v302, 0.0
    %v304 = vmul.f32 %v281, %v303
    %v305 = vadd.f32 %v298, %v304
    %v306 = vtanh.pop %v305
    %v307 = vsub.f32 1.0, %v293
    %v308 = vmul.f32 %v307, %v306
    %v309 = vmul.f32 %v293, 0.0
    %v310 = vadd.f32 %v308, %v309
    %311 = vmatprep.subr.mxu0 %v74
    %312 = vmatpush1.msra.mxu0 %v73
    %313 = vmatprep.subr.mxu0 %v71
    %314 = vmatpush1.msra.mxu0 %v70
    %315 = vmatprep.subr.mxu0 %v68
    %316 = vmatpush1.msra.mxu0 %v67
    %317 = vmatprep.subr.mxu0 %v65
    %318 = vmatpush1.msra.mxu0 %v64
    %319 = vmatprep.subr.mxu0 %v62
    %320 = vmatpush1.msra.mxu0 %v61
    %321 = vmatprep.subr.mxu0 %v59
    %322 = vmatpush1.msra.mxu0 %v58
    %323 = vmatprep.subr.mxu0 %v56
    %324 = vmatpush1.msra.mxu0 %v55
    %325 = vmatprep.subr.mxu0 %v53
    %326 = vmatpush1.msra.mxu0 %v52
    %327 = vmatprep.subr.mxu0 %v50
    %328 = vmatpush1.msra.mxu0 %v49
    %329 = vmatprep.subr.mxu0 %v47
    %330 = vmatpush1.msra.mxu0 %v46
    %331 = vmatprep.subr.mxu0 %v44
    %332 = vmatpush1.msra.mxu0 %v43
    %333 = vmatprep.subr.mxu0 %v41
    %334 = vmatpush1.msra.mxu0 %v40
    %335 = vmatprep.subr.mxu0 %v38
    %336 = vmatpush1.msra.mxu0 %v37
    %337 = vmatprep.subr.mxu0 %v35
    %338 = vmatpush1.msra.mxu0 %v34
    %339 = vmatprep.subr.mxu0 %v32
    %340 = vmatpush1.msra.mxu0 %v31
    %341 = vmatprep.subr.mxu0 %v29
    %342 = vmatpush1.msra.mxu0 %v28
    %343 = vmatprep.subr.mxu0 0.0
    %344 = vmatpush2.msra.mxu0 0.0
    %345 = vmatprep.subr.mxu0 0.0
    %346 = vmatpush2.msra.mxu0 0.0
    %347 = vmatprep.subr.mxu0 0.0
    %348 = vmatpush2.msra.mxu0 0.0
    %349 = vmatprep.subr.mxu0 0.0
    %350 = vmatpush2.msra.mxu0 0.0
    %351 = vmatprep.subr.mxu0 0.0
    %352 = vmatpush2.msra.mxu0 0.0
    %353 = vmatprep.subr.mxu0 0.0
    %354 = vmatpush2.msra.mxu0 0.0
    %355 = vmatprep.subr.mxu0 0.0
    %356 = vmatpush2.msra.mxu0 0.0
    %357 = vmatprep.subr.mxu0 0.0
    %358 = vmatpush2.msra.mxu0 0.0
    %359 = vmatprep.subr.mxu0 0.0
    %360 = vmatpush2.msra.mxu0 0.0
    %361 = vmatprep.subr.mxu0 0.0
    %362 = vmatpush2.msra.mxu0 0.0
    %363 = vmatprep.subr.mxu0 0.0
    %364 = vmatpush2.msra.mxu0 0.0
    %365 = vmatprep.subr.mxu0 0.0
    %366 = vmatpush2.msra.mxu0 0.0
    %367 = vmatprep.subr.mxu0 0.0
    %368 = vmatpush2.msra.mxu0 0.0
    %369 = vmatprep.subr.mxu0 0.0
    %370 = vmatpush2.msra.mxu0 0.0
    %371 = vmatprep.subr.mxu0 0.0
    %372 = vmatpush2.msra.mxu0 0.0
    %373 = vmatprep.subr.mxu0 0.0
    %374 = vmatpush2.msra.mxu0 0.0
    %375 = vmatprep.mubr.f32.mxu0 0.0
    %376 = vmatmul.mubr.f32.gmra.mxu0 %v310
    %v377 = vpop.f32.mrf.mxu0
    %v378 = vadd.f32 0.0, %v377
    %v379 = vpop.f32.mrf.mxu0
    %v380 = vadd.f32 0.0, %v379
    %381 = vdwg.mxu0
    %382 = vmatprep.subr.mxu0 0.0
    %383 = vmatpush1.msra.mxu0 %v75
    %384 = vmatprep.subr.mxu0 0.0
    %385 = vmatpush1.msra.mxu0 %v72
    %386 = vmatprep.subr.mxu0 0.0
    %387 = vmatpush1.msra.mxu0 %v69
    %388 = vmatprep.subr.mxu0 0.0
    %389 = vmatpush1.msra.mxu0 %v66
    %390 = vmatprep.subr.mxu0 0.0
    %391 = vmatpush1.msra.mxu0 %v63
    %392 = vmatprep.subr.mxu0 0.0
    %393 = vmatpush1.msra.mxu0 %v60
    %394 = vmatprep.subr.mxu0 0.0
    %395 = vmatpush1.msra.mxu0 %v57
    %396 = vmatprep.subr.mxu0 0.0
    %397 = vmatpush1.msra.mxu0 %v54
    %398 = vmatprep.subr.mxu0 0.0
    %399 = vmatpush1.msra.mxu0 %v51
    %400 = vmatprep.subr.mxu0 0.0
    %401 = vmatpush1.msra.mxu0 %v48
    %402 = vmatprep.subr.mxu0 0.0
    %403 = vmatpush1.msra.mxu0 %v45
    %404 = vmatprep.subr.mxu0 0.0
    %405 = vmatpush1.msra.mxu0 %v42
    %406 = vmatprep.subr.mxu0 0.0
    %407 = vmatpush1.msra.mxu0 %v39
    %408 = vmatprep.subr.mxu0 0.0
    %409 = vmatpush1.msra.mxu0 %v36
    %410 = vmatprep.subr.mxu0 0.0
    %411 = vmatpush1.msra.mxu0 %v33
    %412 = vmatprep.subr.mxu0 0.0
    %413 = vmatpush1.msra.mxu0 %v30
    %414 = vmatprep.subr.mxu0 0.0
    %415 = vmatpush2.msra.mxu0 0.0
    %416 = vmatprep.subr.mxu0 0.0
    %417 = vmatpush2.msra.mxu0 0.0
    %418 = vmatprep.subr.mxu0 0.0
    %419 = vmatpush2.msra.mxu0 0.0
    %420 = vmatprep.subr.mxu0 0.0
    %421 = vmatpush2.msra.mxu0 0.0
    %422 = vmatprep.subr.mxu0 0.0
    %423 = vmatpush2.msra.mxu0 0.0
    %424 = vmatprep.subr.mxu0 0.0
    %425 = vmatpush2.msra.mxu0 0.0
    %426 = vmatprep.subr.mxu0 0.0
    %427 = vmatpush2.msra.mxu0 0.0
    %428 = vmatprep.subr.mxu0 0.0
    %429 = vmatpush2.msra.mxu0 0.0
    %430 = vmatprep.subr.mxu0 0.0
    %431 = vmatpush2.msra.mxu0 0.0
    %432 = vmatprep.subr.mxu0 0.0
    %433 = vmatpush2.msra.mxu0 0.0
    %434 = vmatprep.subr.mxu0 0.0
    %435 = vmatpush2.msra.mxu0 0.0
    %436 = vmatprep.subr.mxu0 0.0
    %437 = vmatpush2.msra.mxu0 0.0
    %438 = vmatprep.subr.mxu0 0.0
    %439 = vmatpush2.msra.mxu0 0.0
    %440 = vmatprep.subr.mxu0 0.0
    %441 = vmatpush2.msra.mxu0 0.0
    %442 = vmatprep.subr.mxu0 0.0
    %443 = vmatpush2.msra.mxu0 0.0
    %444 = vmatprep.subr.mxu0 0.0
    %445 = vmatpush2.msra.mxu0 0.0
    %446 = vmatprep.mubr.f32.mxu0 0.0
    %447 = vmatmul.mubr.f32.gmra.mxu0 %v310
    %v448 = vpop.f32.mrf.mxu0
    %v449 = vadd.f32 0.0, %v448
    %v450 = vpop.f32.mrf.mxu0
    %451 = vdwg.mxu0
    %v453 = vrot.slane %v378, 6
    %v455 = vadd.f32 %v185, %v453
    %v456 = vadd.f32 %v455, %v274
    %v457 = vxor.u32 %v456, 2147483648
    %v458 = vmul.f32 %v457, 1.442695
    %v459 = vpow.pop %v458
    %v460 = vadd.f32 %v459, 1.0
    %v461 = vrcp.pop %v460
    %v462 = vmul.f32 1.0, %v461
    %v464 = vrot.slane %v380, 6
    %v466 = vadd.f32 %v187, %v464
    %v467 = vadd.f32 %v466, %v286
    %v468 = vxor.u32 %v467, 2147483648
    %v469 = vmul.f32 %v468, 1.442695
    %v470 = vpow.pop %v469
    %v471 = vadd.f32 %v470, 1.0
    %v472 = vrcp.pop %v471
    %v473 = vmul.f32 1.0, %v472
    %v474 = vadd.f32 %v449, %v302
    %v476 = vrot.slane %v474, 6
    %v478 = vmul.f32 %v462, %v476
    %v479 = vadd.f32 %v298, %v478
    %v480 = vtanh.pop %v479
    %v481 = vsub.f32 1.0, %v473
    %v482 = vmul.f32 %v481, %v480
    %v484 = vrot.slane %v310, 6
    %v486 = vmul.f32 %v473, %v484
    %v487 = vadd.f32 %v482, %v486
    %v489 = vrot.slane %v487, 2
    %491 = vmatprep.subr.mxu0 %v74
    %492 = vmatpush1.msra.mxu0 %v73
    %493 = vmatprep.subr.mxu0 %v71
    %494 = vmatpush1.msra.mxu0 %v70
    %495 = vmatprep.subr.mxu0 %v68
    %496 = vmatpush1.msra.mxu0 %v67
    %497 = vmatprep.subr.mxu0 %v65
    %498 = vmatpush1.msra.mxu0 %v64
    %499 = vmatprep.subr.mxu0 %v62
    %500 = vmatpush1.msra.mxu0 %v61
    %501 = vmatprep.subr.mxu0 %v59
    %502 = vmatpush1.msra.mxu0 %v58
    %503 = vmatprep.subr.mxu0 %v56
    %504 = vmatpush1.msra.mxu0 %v55
    %505 = vmatprep.subr.mxu0 %v53
    %506 = vmatpush1.msra.mxu0 %v52
    %507 = vmatprep.subr.mxu0 %v50
    %508 = vmatpush1.msra.mxu0 %v49
    %509 = vmatprep.subr.mxu0 %v47
    %510 = vmatpush1.msra.mxu0 %v46
    %511 = vmatprep.subr.mxu0 %v44
    %512 = vmatpush1.msra.mxu0 %v43
    %513 = vmatprep.subr.mxu0 %v41
    %514 = vmatpush1.msra.mxu0 %v40
    %515 = vmatprep.subr.mxu0 %v38
    %516 = vmatpush1.msra.mxu0 %v37
    %517 = vmatprep.subr.mxu0 %v35
    %518 = vmatpush1.msra.mxu0 %v34
    %519 = vmatprep.subr.mxu0 %v32
    %520 = vmatpush1.msra.mxu0 %v31
    %521 = vmatprep.subr.mxu0 %v29
    %522 = vmatpush1.msra.mxu0 %v28
    %523 = vmatprep.subr.mxu0 0.0
    %524 = vmatpush2.msra.mxu0 0.0
    %525 = vmatprep.subr.mxu0 0.0
    %526 = vmatpush2.msra.mxu0 0.0
    %527 = vmatprep.subr.mxu0 0.0
    %528 = vmatpush2.msra.mxu0 0.0
    %529 = vmatprep.subr.mxu0 0.0
    %530 = vmatpush2.msra.mxu0 0.0
    %531 = vmatprep.subr.mxu0 0.0
    %532 = vmatpush2.msra.mxu0 0.0
    %533 = vmatprep.subr.mxu0 0.0
    %534 = vmatpush2.msra.mxu0 0.0
    %535 = vmatprep.subr.mxu0 0.0
    %536 = vmatpush2.msra.mxu0 0.0
    %537 = vmatprep.subr.mxu0 0.0
    %538 = vmatpush2.msra.mxu0 0.0
    %539 = vmatprep.subr.mxu0 0.0
    %540 = vmatpush2.msra.mxu0 0.0
    %541 = vmatprep.subr.mxu0 0.0
    %542 = vmatpush2.msra.mxu0 0.0
    %543 = vmatprep.subr.mxu0 0.0
    %544 = vmatpush2.msra.mxu0 0.0
    %545 = vmatprep.subr.mxu0 0.0
    %546 = vmatpush2.msra.mxu0 0.0
    %547 = vmatprep.subr.mxu0 0.0
    %548 = vmatpush2.msra.mxu0 0.0
    %549 = vmatprep.subr.mxu0 0.0
    %550 = vmatpush2.msra.mxu0 0.0
    %551 = vmatprep.subr.mxu0 0.0
    %552 = vmatpush2.msra.mxu0 0.0
    %553 = vmatprep.subr.mxu0 0.0
    %554 = vmatpush2.msra.mxu0 0.0
    %555 = vmatprep.mubr.f32.mxu0 0.0
    %556 = vmatmul.mubr.f32.gmra.mxu0 %v489
    %v557 = vpop.f32.mrf.mxu0
    %v558 = vadd.f32 0.0, %v557
    %v559 = vpop.f32.mrf.mxu0
    %v560 = vadd.f32 0.0, %v559
    %561 = vdwg.mxu0
    %562 = vmatprep.subr.mxu0 0.0
    %563 = vmatpush1.msra.mxu0 %v75
    %564 = vmatprep.subr.mxu0 0.0
    %565 = vmatpush1.msra.mxu0 %v72
    %566 = vmatprep.subr.mxu0 0.0
    %567 = vmatpush1.msra.mxu0 %v69
    %568 = vmatprep.subr.mxu0 0.0
    %569 = vmatpush1.msra.mxu0 %v66
    %570 = vmatprep.subr.mxu0 0.0
    %571 = vmatpush1.msra.mxu0 %v63
    %572 = vmatprep.subr.mxu0 0.0
    %573 = vmatpush1.msra.mxu0 %v60
    %574 = vmatprep.subr.mxu0 0.0
    %575 = vmatpush1.msra.mxu0 %v57
    %576 = vmatprep.subr.mxu0 0.0
    %577 = vmatpush1.msra.mxu0 %v54
    %578 = vmatprep.subr.mxu0 0.0
    %579 = vmatpush1.msra.mxu0 %v51
    %580 = vmatprep.subr.mxu0 0.0
    %581 = vmatpush1.msra.mxu0 %v48
    %582 = vmatprep.subr.mxu0 0.0
    %583 = vmatpush1.msra.mxu0 %v45
    %584 = vmatprep.subr.mxu0 0.0
    %585 = vmatpush1.msra.mxu0 %v42
    %586 = vmatprep.subr.mxu0 0.0
    %587 = vmatpush1.msra.mxu0 %v39
    %588 = vmatprep.subr.mxu0 0.0
    %589 = vmatpush1.msra.mxu0 %v36
    %590 = vmatprep.subr.mxu0 0.0
    %591 = vmatpush1.msra.mxu0 %v33
    %592 = vmatprep.subr.mxu0 0.0
    %593 = vmatpush1.msra.mxu0 %v30
    %594 = vmatprep.subr.mxu0 0.0
    %595 = vmatpush2.msra.mxu0 0.0
    %596 = vmatprep.subr.mxu0 0.0
    %597 = vmatpush2.msra.mxu0 0.0
    %598 = vmatprep.subr.mxu0 0.0
    %599 = vmatpush2.msra.mxu0 0.0
    %600 = vmatprep.subr.mxu0 0.0
    %601 = vmatpush2.msra.mxu0 0.0
    %602 = vmatprep.subr.mxu0 0.0
    %603 = vmatpush2.msra.mxu0 0.0
    %604 = vmatprep.subr.mxu0 0.0
    %605 = vmatpush2.msra.mxu0 0.0
    %606 = vmatprep.subr.mxu0 0.0
    %607 = vmatpush2.msra.mxu0 0.0
    %608 = vmatprep.subr.mxu0 0.0
    %609 = vmatpush2.msra.mxu0 0.0
    %610 = vmatprep.subr.mxu0 0.0
    %611 = vmatpush2.msra.mxu0 0.0
    %612 = vmatprep.subr.mxu0 0.0
    %613 = vmatpush2.msra.mxu0 0.0
    %614 = vmatprep.subr.mxu0 0.0
    %615 = vmatpush2.msra.mxu0 0.0
    %616 = vmatprep.subr.mxu0 0.0
    %617 = vmatpush2.msra.mxu0 0.0
    %618 = vmatprep.subr.mxu0 0.0
    %619 = vmatpush2.msra.mxu0 0.0
    %620 = vmatprep.subr.mxu0 0.0
    %621 = vmatpush2.msra.mxu0 0.0
    %622 = vmatprep.subr.mxu0 0.0
    %623 = vmatpush2.msra.mxu0 0.0
    %624 = vmatprep.subr.mxu0 0.0
    %625 = vmatpush2.msra.mxu0 0.0
    %626 = vmatprep.mubr.f32.mxu0 0.0
    %627 = vmatmul.mubr.f32.gmra.mxu0 %v489
    %v628 = vpop.f32.mrf.mxu0
    %v629 = vadd.f32 0.0, %v628
    %v630 = vpop.f32.mrf.mxu0
    %631 = vdwg.mxu0
    %v633 = vrot.slane %v558, 4
    %v635 = vadd.f32 %v185, %v633
    %v636 = vadd.f32 %v635, %v274
    %v637 = vxor.u32 %v636, 2147483648
    %v638 = vmul.f32 %v637, 1.442695
    %v639 = vpow.pop %v638
    %v640 = vadd.f32 %v639, 1.0
    %v641 = vrcp.pop %v640
    %v642 = vmul.f32 1.0, %v641
    %v644 = vrot.slane %v560, 4
    %v646 = vadd.f32 %v187, %v644
    %v647 = vadd.f32 %v646, %v286
    %v648 = vxor.u32 %v647, 2147483648
    %v649 = vmul.f32 %v648, 1.442695
    %v650 = vpow.pop %v649
    %v651 = vadd.f32 %v650, 1.0
    %v652 = vrcp.pop %v651
    %v653 = vmul.f32 1.0, %v652
    %v654 = vadd.f32 %v629, %v302
    %v656 = vrot.slane %v654, 4
    %v658 = vmul.f32 %v642, %v656
    %v659 = vadd.f32 %v298, %v658
    %v660 = vtanh.pop %v659
    %v661 = vsub.f32 1.0, %v653
    %v662 = vmul.f32 %v661, %v660
    %v663 = vrot.slane %v487, 6
    %v665 = vmul.f32 %v653, %v663
    %v666 = vadd.f32 %v662, %v665
    %v668 = vrot.slane %v666, 4
    %670 = vmatprep.subr.mxu0 %v74
    %671 = vmatpush1.msra.mxu0 %v73
    %672 = vmatprep.subr.mxu0 %v71
    %673 = vmatpush1.msra.mxu0 %v70
    %674 = vmatprep.subr.mxu0 %v68
    %675 = vmatpush1.msra.mxu0 %v67
    %676 = vmatprep.subr.mxu0 %v65
    %677 = vmatpush1.msra.mxu0 %v64
    %678 = vmatprep.subr.mxu0 %v62
    %679 = vmatpush1.msra.mxu0 %v61
    %680 = vmatprep.subr.mxu0 %v59
    %681 = vmatpush1.msra.mxu0 %v58
    %682 = vmatprep.subr.mxu0 %v56
    %683 = vmatpush1.msra.mxu0 %v55
    %684 = vmatprep.subr.mxu0 %v53
    %685 = vmatpush1.msra.mxu0 %v52
    %686 = vmatprep.subr.mxu0 %v50
    %687 = vmatpush1.msra.mxu0 %v49
    %688 = vmatprep.subr.mxu0 %v47
    %689 = vmatpush1.msra.mxu0 %v46
    %690 = vmatprep.subr.mxu0 %v44
    %691 = vmatpush1.msra.mxu0 %v43
    %692 = vmatprep.subr.mxu0 %v41
    %693 = vmatpush1.msra.mxu0 %v40
    %694 = vmatprep.subr.mxu0 %v38
    %695 = vmatpush1.msra.mxu0 %v37
    %696 = vmatprep.subr.mxu0 %v35
    %697 = vmatpush1.msra.mxu0 %v34
    %698 = vmatprep.subr.mxu0 %v32
    %699 = vmatpush1.msra.mxu0 %v31
    %700 = vmatprep.subr.mxu0 %v29
    %701 = vmatpush1.msra.mxu0 %v28
    %702 = vmatprep.subr.mxu0 0.0
    %703 = vmatpush2.msra.mxu0 0.0
    %704 = vmatprep.subr.mxu0 0.0
    %705 = vmatpush2.msra.mxu0 0.0
    %706 = vmatprep.subr.mxu0 0.0
    %707 = vmatpush2.msra.mxu0 0.0
    %708 = vmatprep.subr.mxu0 0.0
    %709 = vmatpush2.msra.mxu0 0.0
    %710 = vmatprep.subr.mxu0 0.0
    %711 = vmatpush2.msra.mxu0 0.0
    %712 = vmatprep.subr.mxu0 0.0
    %713 = vmatpush2.msra.mxu0 0.0
    %714 = vmatprep.subr.mxu0 0.0
    %715 = vmatpush2.msra.mxu0 0.0
    %716 = vmatprep.subr.mxu0 0.0
    %717 = vmatpush2.msra.mxu0 0.0
    %718 = vmatprep.subr.mxu0 0.0
    %719 = vmatpush2.msra.mxu0 0.0
    %720 = vmatprep.subr.mxu0 0.0
    %721 = vmatpush2.msra.mxu0 0.0
    %722 = vmatprep.subr.mxu0 0.0
    %723 = vmatpush2.msra.mxu0 0.0
    %724 = vmatprep.subr.mxu0 0.0
    %725 = vmatpush2.msra.mxu0 0.0
    %726 = vmatprep.subr.mxu0 0.0
    %727 = vmatpush2.msra.mxu0 0.0
    %728 = vmatprep.subr.mxu0 0.0
    %729 = vmatpush2.msra.mxu0 0.0
    %730 = vmatprep.subr.mxu0 0.0
    %731 = vmatpush2.msra.mxu0 0.0
    %732 = vmatprep.subr.mxu0 0.0
    %733 = vmatpush2.msra.mxu0 0.0
    %734 = vmatprep.mubr.f32.mxu0 0.0
    %735 = vmatmul.mubr.f32.gmra.mxu0 %v668
    %v736 = vpop.f32.mrf.mxu0
    %v737 = vadd.f32 0.0, %v736
    %v738 = vpop.f32.mrf.mxu0
    %v739 = vadd.f32 0.0, %v738
    %740 = vdwg.mxu0
    %741 = vmatprep.subr.mxu0 0.0
    %742 = vmatpush1.msra.mxu0 %v75
    %743 = vmatprep.subr.mxu0 0.0
    %744 = vmatpush1.msra.mxu0 %v72
    %745 = vmatprep.subr.mxu0 0.0
    %746 = vmatpush1.msra.mxu0 %v69
    %747 = vmatprep.subr.mxu0 0.0
    %748 = vmatpush1.msra.mxu0 %v66
    %749 = vmatprep.subr.mxu0 0.0
    %750 = vmatpush1.msra.mxu0 %v63
    %751 = vmatprep.subr.mxu0 0.0
    %752 = vmatpush1.msra.mxu0 %v60
    %753 = vmatprep.subr.mxu0 0.0
    %754 = vmatpush1.msra.mxu0 %v57
    %755 = vmatprep.subr.mxu0 0.0
    %756 = vmatpush1.msra.mxu0 %v54
    %757 = vmatprep.subr.mxu0 0.0
    %758 = vmatpush1.msra.mxu0 %v51
    %759 = vmatprep.subr.mxu0 0.0
    %760 = vmatpush1.msra.mxu0 %v48
    %761 = vmatprep.subr.mxu0 0.0
    %762 = vmatpush1.msra.mxu0 %v45
    %763 = vmatprep.subr.mxu0 0.0
    %764 = vmatpush1.msra.mxu0 %v42
    %765 = vmatprep.subr.mxu0 0.0
    %766 = vmatpush1.msra.mxu0 %v39
    %767 = vmatprep.subr.mxu0 0.0
    %768 = vmatpush1.msra.mxu0 %v36
    %769 = vmatprep.subr.mxu0 0.0
    %770 = vmatpush1.msra.mxu0 %v33
    %771 = vmatprep.subr.mxu0 0.0
    %772 = vmatpush1.msra.mxu0 %v30
    %773 = vmatprep.subr.mxu0 0.0
    %774 = vmatpush2.msra.mxu0 0.0
    %775 = vmatprep.subr.mxu0 0.0
    %776 = vmatpush2.msra.mxu0 0.0
    %777 = vmatprep.subr.mxu0 0.0
    %778 = vmatpush2.msra.mxu0 0.0
    %779 = vmatprep.subr.mxu0 0.0
    %780 = vmatpush2.msra.mxu0 0.0
    %781 = vmatprep.subr.mxu0 0.0
    %782 = vmatpush2.msra.mxu0 0.0
    %783 = vmatprep.subr.mxu0 0.0
    %784 = vmatpush2.msra.mxu0 0.0
    %785 = vmatprep.subr.mxu0 0.0
    %786 = vmatpush2.msra.mxu0 0.0
    %787 = vmatprep.subr.mxu0 0.0
    %788 = vmatpush2.msra.mxu0 0.0
    %789 = vmatprep.subr.mxu0 0.0
    %790 = vmatpush2.msra.mxu0 0.0
    %791 = vmatprep.subr.mxu0 0.0
    %792 = vmatpush2.msra.mxu0 0.0
    %793 = vmatprep.subr.mxu0 0.0
    %794 = vmatpush2.msra.mxu0 0.0
    %795 = vmatprep.subr.mxu0 0.0
    %796 = vmatpush2.msra.mxu0 0.0
    %797 = vmatprep.subr.mxu0 0.0
    %798 = vmatpush2.msra.mxu0 0.0
    %799 = vmatprep.subr.mxu0 0.0
    %800 = vmatpush2.msra.mxu0 0.0
    %801 = vmatprep.subr.mxu0 0.0
    %802 = vmatpush2.msra.mxu0 0.0
    %803 = vmatprep.subr.mxu0 0.0
    %804 = vmatpush2.msra.mxu0 0.0
    %805 = vmatprep.mubr.f32.mxu0 0.0
    %806 = vmatmul.mubr.f32.gmra.mxu0 %v668
    %v807 = vpop.f32.mrf.mxu0
    %v808 = vadd.f32 0.0, %v807
    %v809 = vpop.f32.mrf.mxu0
    %810 = vdwg.mxu0
    %v812 = vrot.slane %v737, 2
    %v814 = vadd.f32 %v185, %v812
    %v815 = vadd.f32 %v814, %v274
    %v816 = vxor.u32 %v815, 2147483648
    %v817 = vmul.f32 %v816, 1.442695
    %v818 = vpow.pop %v817
    %v819 = vadd.f32 %v818, 1.0
    %v820 = vrcp.pop %v819
    %v821 = vmul.f32 1.0, %v820
    %v823 = vrot.slane %v739, 2
    %v825 = vadd.f32 %v187, %v823
    %v826 = vadd.f32 %v825, %v286
    %v827 = vxor.u32 %v826, 2147483648
    %v828 = vmul.f32 %v827, 1.442695
    %v829 = vpow.pop %v828
    %v830 = vadd.f32 %v829, 1.0
    %v831 = vrcp.pop %v830
    %v832 = vmul.f32 1.0, %v831
    %v833 = vadd.f32 %v808, %v302
    %v835 = vrot.slane %v833, 2
    %v837 = vmul.f32 %v821, %v835
    %v838 = vadd.f32 %v298, %v837
    %v839 = vtanh.pop %v838
    %v840 = vsub.f32 1.0, %v832
    %v841 = vmul.f32 %v840, %v839
    %v842 = vrot.slane %v666, 6
    %v844 = vmul.f32 %v832, %v842
    %v845 = vadd.f32 %v841, %v844
    %v847 = vrot.slane %v845, 6
    %849 = vmatprep.subr.mxu0 %v74
    %850 = vmatpush1.msra.mxu0 %v73
    %851 = vmatprep.subr.mxu0 %v71
    %852 = vmatpush1.msra.mxu0 %v70
    %853 = vmatprep.subr.mxu0 %v68
    %854 = vmatpush1.msra.mxu0 %v67
    %855 = vmatprep.subr.mxu0 %v65
    %856 = vmatpush1.msra.mxu0 %v64
    %857 = vmatprep.subr.mxu0 %v62
    %858 = vmatpush1.msra.mxu0 %v61
    %859 = vmatprep.subr.mxu0 %v59
    %860 = vmatpush1.msra.mxu0 %v58
    %861 = vmatprep.subr.mxu0 %v56
    %862 = vmatpush1.msra.mxu0 %v55
    %863 = vmatprep.subr.mxu0 %v53
    %864 = vmatpush1.msra.mxu0 %v52
    %865 = vmatprep.subr.mxu0 %v50
    %866 = vmatpush1.msra.mxu0 %v49
    %867 = vmatprep.subr.mxu0 %v47
    %868 = vmatpush1.msra.mxu0 %v46
    %869 = vmatprep.subr.mxu0 %v44
    %870 = vmatpush1.msra.mxu0 %v43
    %871 = vmatprep.subr.mxu0 %v41
    %872 = vmatpush1.msra.mxu0 %v40
    %873 = vmatprep.subr.mxu0 %v38
    %874 = vmatpush1.msra.mxu0 %v37
    %875 = vmatprep.subr.mxu0 %v35
    %876 = vmatpush1.msra.mxu0 %v34
    %877 = vmatprep.subr.mxu0 %v32
    %878 = vmatpush1.msra.mxu0 %v31
    %879 = vmatprep.subr.mxu0 %v29
    %880 = vmatpush1.msra.mxu0 %v28
    %881 = vmatprep.subr.mxu0 0.0
    %882 = vmatpush2.msra.mxu0 0.0
    %883 = vmatprep.subr.mxu0 0.0
    %884 = vmatpush2.msra.mxu0 0.0
    %885 = vmatprep.subr.mxu0 0.0
    %886 = vmatpush2.msra.mxu0 0.0
    %887 = vmatprep.subr.mxu0 0.0
    %888 = vmatpush2.msra.mxu0 0.0
    %889 = vmatprep.subr.mxu0 0.0
    %890 = vmatpush2.msra.mxu0 0.0
    %891 = vmatprep.subr.mxu0 0.0
    %892 = vmatpush2.msra.mxu0 0.0
    %893 = vmatprep.subr.mxu0 0.0
    %894 = vmatpush2.msra.mxu0 0.0
    %895 = vmatprep.subr.mxu0 0.0
    %896 = vmatpush2.msra.mxu0 0.0
    %897 = vmatprep.subr.mxu0 0.0
    %898 = vmatpush2.msra.mxu0 0.0
    %899 = vmatprep.subr.mxu0 0.0
    %900 = vmatpush2.msra.mxu0 0.0
    %901 = vmatprep.subr.mxu0 0.0
    %902 = vmatpush2.msra.mxu0 0.0
    %903 = vmatprep.subr.mxu0 0.0
    %904 = vmatpush2.msra.mxu0 0.0
    %905 = vmatprep.subr.mxu0 0.0
    %906 = vmatpush2.msra.mxu0 0.0
    %907 = vmatprep.subr.mxu0 0.0
    %908 = vmatpush2.msra.mxu0 0.0
    %909 = vmatprep.subr.mxu0 0.0
    %910 = vmatpush2.msra.mxu0 0.0
    %911 = vmatprep.subr.mxu0 0.0
    %912 = vmatpush2.msra.mxu0 0.0
    %913 = vmatprep.mubr.f32.mxu0 0.0
    %914 = vmatmul.mubr.f32.gmra.mxu0 %v847
    %v915 = vpop.f32.mrf.mxu0
    %v916 = vadd.f32 0.0, %v915
    %v917 = vpop.f32.mrf.mxu0
    %v918 = vadd.f32 0.0, %v917
    %919 = vdwg.mxu0
    %920 = vmatprep.subr.mxu0 0.0
    %921 = vmatpush1.msra.mxu0 %v75
    %922 = vmatprep.subr.mxu0 0.0
    %923 = vmatpush1.msra.mxu0 %v72
    %924 = vmatprep.subr.mxu0 0.0
    %925 = vmatpush1.msra.mxu0 %v69
    %926 = vmatprep.subr.mxu0 0.0
    %927 = vmatpush1.msra.mxu0 %v66
    %928 = vmatprep.subr.mxu0 0.0
    %929 = vmatpush1.msra.mxu0 %v63
    %930 = vmatprep.subr.mxu0 0.0
    %931 = vmatpush1.msra.mxu0 %v60
    %932 = vmatprep.subr.mxu0 0.0
    %933 = vmatpush1.msra.mxu0 %v57
    %934 = vmatprep.subr.mxu0 0.0
    %935 = vmatpush1.msra.mxu0 %v54
    %936 = vmatprep.subr.mxu0 0.0
    %937 = vmatpush1.msra.mxu0 %v51
    %938 = vmatprep.subr.mxu0 0.0
    %939 = vmatpush1.msra.mxu0 %v48
    %940 = vmatprep.subr.mxu0 0.0
    %941 = vmatpush1.msra.mxu0 %v45
    %942 = vmatprep.subr.mxu0 0.0
    %943 = vmatpush1.msra.mxu0 %v42
    %944 = vmatprep.subr.mxu0 0.0
    %945 = vmatpush1.msra.mxu0 %v39
    %946 = vmatprep.subr.mxu0 0.0
    %947 = vmatpush1.msra.mxu0 %v36
    %948 = vmatprep.subr.mxu0 0.0
    %949 = vmatpush1.msra.mxu0 %v33
    %950 = vmatprep.subr.mxu0 0.0
    %951 = vmatpush1.msra.mxu0 %v30
    %952 = vmatprep.subr.mxu0 0.0
    %953 = vmatpush2.msra.mxu0 0.0
    %954 = vmatprep.subr.mxu0 0.0
    %955 = vmatpush2.msra.mxu0 0.0
    %956 = vmatprep.subr.mxu0 0.0
    %957 = vmatpush2.msra.mxu0 0.0
    %958 = vmatprep.subr.mxu0 0.0
    %959 = vmatpush2.msra.mxu0 0.0
    %960 = vmatprep.subr.mxu0 0.0
    %961 = vmatpush2.msra.mxu0 0.0
    %962 = vmatprep.subr.mxu0 0.0
    %963 = vmatpush2.msra.mxu0 0.0
    %964 = vmatprep.subr.mxu0 0.0
    %965 = vmatpush2.msra.mxu0 0.0
    %966 = vmatprep.subr.mxu0 0.0
    %967 = vmatpush2.msra.mxu0 0.0
    %968 = vmatprep.subr.mxu0 0.0
    %969 = vmatpush2.msra.mxu0 0.0
    %970 = vmatprep.subr.mxu0 0.0
    %971 = vmatpush2.msra.mxu0 0.0
    %972 = vmatprep.subr.mxu0 0.0
    %973 = vmatpush2.msra.mxu0 0.0
    %974 = vmatprep.subr.mxu0 0.0
    %975 = vmatpush2.msra.mxu0 0.0
    %976 = vmatprep.subr.mxu0 0.0
    %977 = vmatpush2.msra.mxu0 0.0
    %978 = vmatprep.subr.mxu0 0.0
    %979 = vmatpush2.msra.mxu0 0.0
    %980 = vmatprep.subr.mxu0 0.0
    %981 = vmatpush2.msra.mxu0 0.0
    %982 = vmatprep.subr.mxu0 0.0
    %983 = vmatpush2.msra.mxu0 0.0
    %984 = vmatprep.mubr.f32.mxu0 0.0
    %985 = vmatmul.mubr.f32.gmra.mxu0 %v847
    %v986 = vpop.f32.mrf.mxu0
    %v987 = vadd.f32 0.0, %v986
    %v988 = vpop.f32.mrf.mxu0
    %989 = vdwg.mxu0
    %v990 = vadd.f32 %v191, %v916
    %v991 = vadd.f32 %v990, %v274
    %v992 = vxor.u32 %v991, 2147483648
    %v993 = vmul.f32 %v992, 1.442695
    %v994 = vpow.pop %v993
    %v995 = vadd.f32 %v994, 1.0
    %v996 = vrcp.pop %v995
    %v997 = vmul.f32 1.0, %v996
    %v998 = vadd.f32 %v193, %v918
    %v999 = vadd.f32 %v998, %v286
    %v1000 = vxor.u32 %v999, 2147483648
    %v1001 = vmul.f32 %v1000, 1.442695
    %v1002 = vpow.pop %v1001
    %v1003 = vadd.f32 %v1002, 1.0
    %v1004 = vrcp.pop %v1003
    %v1005 = vmul.f32 1.0, %v1004
    %v1006 = vadd.f32 %v267, %v297
    %v1007 = vadd.f32 %v987, %v302
    %v1008 = vmul.f32 %v997, %v1007
    %v1009 = vadd.f32 %v1006, %v1008
    %v1010 = vtanh.pop %v1009
    %v1011 = vsub.f32 1.0, %v1005
    %v1012 = vmul.f32 %v1011, %v1010
    %v1013 = vmul.f32 %v1005, %v847
    %v1014 = vadd.f32 %v1012, %v1013
    %1015 = vmatprep.subr.mxu0 %v74
    %1016 = vmatpush1.msra.mxu0 %v73
    %1017 = vmatprep.subr.mxu0 %v71
    %1018 = vmatpush1.msra.mxu0 %v70
    %1019 = vmatprep.subr.mxu0 %v68
    %1020 = vmatpush1.msra.mxu0 %v67
    %1021 = vmatprep.subr.mxu0 %v65
    %1022 = vmatpush1.msra.mxu0 %v64
    %1023 = vmatprep.subr.mxu0 %v62
    %1024 = vmatpush1.msra.mxu0 %v61
    %1025 = vmatprep.subr.mxu0 %v59
    %1026 = vmatpush1.msra.mxu0 %v58
    %1027 = vmatprep.subr.mxu0 %v56
    %1028 = vmatpush1.msra.mxu0 %v55
    %1029 = vmatprep.subr.mxu0 %v53
    %1030 = vmatpush1.msra.mxu0 %v52
    %1031 = vmatprep.subr.mxu0 %v50
    %1032 = vmatpush1.msra.mxu0 %v49
    %1033 = vmatprep.subr.mxu0 %v47
    %1034 = vmatpush1.msra.mxu0 %v46
    %1035 = vmatprep.subr.mxu0 %v44
    %1036 = vmatpush1.msra.mxu0 %v43
    %1037 = vmatprep.subr.mxu0 %v41
    %1038 = vmatpush1.msra.mxu0 %v40
    %1039 = vmatprep.subr.mxu0 %v38
    %1040 = vmatpush1.msra.mxu0 %v37
    %1041 = vmatprep.subr.mxu0 %v35
    %1042 = vmatpush1.msra.mxu0 %v34
    %1043 = vmatprep.subr.mxu0 %v32
    %1044 = vmatpush1.msra.mxu0 %v31
    %1045 = vmatprep.subr.mxu0 %v29
    %1046 = vmatpush1.msra.mxu0 %v28
    %1047 = vmatprep.subr.mxu0 0.0
    %1048 = vmatpush2.msra.mxu0 0.0
    %1049 = vmatprep.subr.mxu0 0.0
    %1050 = vmatpush2.msra.mxu0 0.0
    %1051 = vmatprep.subr.mxu0 0.0
    %1052 = vmatpush2.msra.mxu0 0.0
    %1053 = vmatprep.subr.mxu0 0.0
    %1054 = vmatpush2.msra.mxu0 0.0
    %1055 = vmatprep.subr.mxu0 0.0
    %1056 = vmatpush2.msra.mxu0 0.0
    %1057 = vmatprep.subr.mxu0 0.0
    %1058 = vmatpush2.msra.mxu0 0.0
    %1059 = vmatprep.subr.mxu0 0.0
    %1060 = vmatpush2.msra.mxu0 0.0
    %1061 = vmatprep.subr.mxu0 0.0
    %1062 = vmatpush2.msra.mxu0 0.0
    %1063 = vmatprep.subr.mxu0 0.0
    %1064 = vmatpush2.msra.mxu0 0.0
    %1065 = vmatprep.subr.mxu0 0.0
    %1066 = vmatpush2.msra.mxu0 0.0
    %1067 = vmatprep.subr.mxu0 0.0
    %1068 = vmatpush2.msra.mxu0 0.0
    %1069 = vmatprep.subr.mxu0 0.0
    %1070 = vmatpush2.msra.mxu0 0.0
    %1071 = vmatprep.subr.mxu0 0.0
    %1072 = vmatpush2.msra.mxu0 0.0
    %1073 = vmatprep.subr.mxu0 0.0
    %1074 = vmatpush2.msra.mxu0 0.0
    %1075 = vmatprep.subr.mxu0 0.0
    %1076 = vmatpush2.msra.mxu0 0.0
    %1077 = vmatprep.subr.mxu0 0.0
    %1078 = vmatpush2.msra.mxu0 0.0
    %1079 = vmatprep.mubr.f32.mxu0 0.0
    %1080 = vmatmul.mubr.f32.gmra.mxu0 %v1014
    %v1081 = vpop.f32.mrf.mxu0
    %v1082 = vadd.f32 0.0, %v1081
    %v1083 = vpop.f32.mrf.mxu0
    %v1084 = vadd.f32 0.0, %v1083
    %1085 = vdwg.mxu0
    %1086 = vmatprep.subr.mxu0 0.0
    %1087 = vmatpush1.msra.mxu0 %v75
    %1088 = vmatprep.subr.mxu0 0.0
    %1089 = vmatpush1.msra.mxu0 %v72
    %1090 = vmatprep.subr.mxu0 0.0
    %1091 = vmatpush1.msra.mxu0 %v69
    %1092 = vmatprep.subr.mxu0 0.0
    %1093 = vmatpush1.msra.mxu0 %v66
    %1094 = vmatprep.subr.mxu0 0.0
    %1095 = vmatpush1.msra.mxu0 %v63
    %1096 = vmatprep.subr.mxu0 0.0
    %1097 = vmatpush1.msra.mxu0 %v60
    %1098 = vmatprep.subr.mxu0 0.0
    %1099 = vmatpush1.msra.mxu0 %v57
    %1100 = vmatprep.subr.mxu0 0.0
    %1101 = vmatpush1.msra.mxu0 %v54
    %1102 = vmatprep.subr.mxu0 0.0
    %1103 = vmatpush1.msra.mxu0 %v51
    %1104 = vmatprep.subr.mxu0 0.0
    %1105 = vmatpush1.msra.mxu0 %v48
    %1106 = vmatprep.subr.mxu0 0.0
    %1107 = vmatpush1.msra.mxu0 %v45
    %1108 = vmatprep.subr.mxu0 0.0
    %1109 = vmatpush1.msra.mxu0 %v42
    %1110 = vmatprep.subr.mxu0 0.0
    %1111 = vmatpush1.msra.mxu0 %v39
    %1112 = vmatprep.subr.mxu0 0.0
    %1113 = vmatpush1.msra.mxu0 %v36
    %1114 = vmatprep.subr.mxu0 0.0
    %1115 = vmatpush1.msra.mxu0 %v33
    %1116 = vmatprep.subr.mxu0 0.0
    %1117 = vmatpush1.msra.mxu0 %v30
    %1118 = vmatprep.subr.mxu0 0.0
    %1119 = vmatpush2.msra.mxu0 0.0
    %1120 = vmatprep.subr.mxu0 0.0
    %1121 = vmatpush2.msra.mxu0 0.0
    %1122 = vmatprep.subr.mxu0 0.0
    %1123 = vmatpush2.msra.mxu0 0.0
    %1124 = vmatprep.subr.mxu0 0.0
    %1125 = vmatpush2.msra.mxu0 0.0
    %1126 = vmatprep.subr.mxu0 0.0
    %1127 = vmatpush2.msra.mxu0 0.0
    %1128 = vmatprep.subr.mxu0 0.0
    %1129 = vmatpush2.msra.mxu0 0.0
    %1130 = vmatprep.subr.mxu0 0.0
    %1131 = vmatpush2.msra.mxu0 0.0
    %1132 = vmatprep.subr.mxu0 0.0
    %1133 = vmatpush2.msra.mxu0 0.0
    %1134 = vmatprep.subr.mxu0 0.0
    %1135 = vmatpush2.msra.mxu0 0.0
    %1136 = vmatprep.subr.mxu0 0.0
    %1137 = vmatpush2.msra.mxu0 0.0
    %1138 = vmatprep.subr.mxu0 0.0
    %1139 = vmatpush2.msra.mxu0 0.0
    %1140 = vmatprep.subr.mxu0 0.0
    %1141 = vmatpush2.msra.mxu0 0.0
    %1142 = vmatprep.subr.mxu0 0.0
    %1143 = vmatpush2.msra.mxu0 0.0
    %1144 = vmatprep.subr.mxu0 0.0
    %1145 = vmatpush2.msra.mxu0 0.0
    %1146 = vmatprep.subr.mxu0 0.0
    %1147 = vmatpush2.msra.mxu0 0.0
    %1148 = vmatprep.subr.mxu0 0.0
    %1149 = vmatpush2.msra.mxu0 0.0
    %1150 = vmatprep.mubr.f32.mxu0 0.0
    %1151 = vmatmul.mubr.f32.gmra.mxu0 %v1014
    %v1152 = vpop.f32.mrf.mxu0
    %v1153 = vadd.f32 0.0, %v1152
    %v1154 = vpop.f32.mrf.mxu0
    %1155 = vdwg.mxu0
    %v1157 = vrot.slane %v1082, 6
    %v1159 = vadd.f32 %v191, %v1157
    %v1160 = vadd.f32 %v1159, %v274
    %v1161 = vxor.u32 %v1160, 2147483648
    %v1162 = vmul.f32 %v1161, 1.442695
    %v1163 = vpow.pop %v1162
    %v1164 = vadd.f32 %v1163, 1.0
    %v1165 = vrcp.pop %v1164
    %v1166 = vmul.f32 1.0, %v1165
    %v1168 = vrot.slane %v1084, 6
    %v1170 = vadd.f32 %v193, %v1168
    %v1171 = vadd.f32 %v1170, %v286
    %v1172 = vxor.u32 %v1171, 2147483648
    %v1173 = vmul.f32 %v1172, 1.442695
    %v1174 = vpow.pop %v1173
    %v1175 = vadd.f32 %v1174, 1.0
    %v1176 = vrcp.pop %v1175
    %v1177 = vmul.f32 1.0, %v1176
    %v1178 = vadd.f32 %v1153, %v302
    %v1180 = vrot.slane %v1178, 6
    %v1182 = vmul.f32 %v1166, %v1180
    %v1183 = vadd.f32 %v1006, %v1182
    %v1184 = vtanh.pop %v1183
    %v1185 = vsub.f32 1.0, %v1177
    %v1186 = vmul.f32 %v1185, %v1184
    %v1188 = vrot.slane %v1014, 6
    %v1190 = vmul.f32 %v1177, %v1188
    %v1191 = vadd.f32 %v1186, %v1190
    %v1193 = vrot.slane %v1191, 2
    %1195 = vmatprep.subr.mxu0 %v74
    %1196 = vmatpush1.msra.mxu0 %v73
    %1197 = vmatprep.subr.mxu0 %v71
    %1198 = vmatpush1.msra.mxu0 %v70
    %1199 = vmatprep.subr.mxu0 %v68
    %1200 = vmatpush1.msra.mxu0 %v67
    %1201 = vmatprep.subr.mxu0 %v65
    %1202 = vmatpush1.msra.mxu0 %v64
    %1203 = vmatprep.subr.mxu0 %v62
    %1204 = vmatpush1.msra.mxu0 %v61
    %1205 = vmatprep.subr.mxu0 %v59
    %1206 = vmatpush1.msra.mxu0 %v58
    %1207 = vmatprep.subr.mxu0 %v56
    %1208 = vmatpush1.msra.mxu0 %v55
    %1209 = vmatprep.subr.mxu0 %v53
    %1210 = vmatpush1.msra.mxu0 %v52
    %1211 = vmatprep.subr.mxu0 %v50
    %1212 = vmatpush1.msra.mxu0 %v49
    %1213 = vmatprep.subr.mxu0 %v47
    %1214 = vmatpush1.msra.mxu0 %v46
    %1215 = vmatprep.subr.mxu0 %v44
    %1216 = vmatpush1.msra.mxu0 %v43
    %1217 = vmatprep.subr.mxu0 %v41
    %1218 = vmatpush1.msra.mxu0 %v40
    %1219 = vmatprep.subr.mxu0 %v38
    %1220 = vmatpush1.msra.mxu0 %v37
    %1221 = vmatprep.subr.mxu0 %v35
    %1222 = vmatpush1.msra.mxu0 %v34
    %1223 = vmatprep.subr.mxu0 %v32
    %1224 = vmatpush1.msra.mxu0 %v31
    %1225 = vmatprep.subr.mxu0 %v29
    %1226 = vmatpush1.msra.mxu0 %v28
    %1227 = vmatprep.subr.mxu0 0.0
    %1228 = vmatpush2.msra.mxu0 0.0
    %1229 = vmatprep.subr.mxu0 0.0
    %1230 = vmatpush2.msra.mxu0 0.0
    %1231 = vmatprep.subr.mxu0 0.0
    %1232 = vmatpush2.msra.mxu0 0.0
    %1233 = vmatprep.subr.mxu0 0.0
    %1234 = vmatpush2.msra.mxu0 0.0
    %1235 = vmatprep.subr.mxu0 0.0
    %1236 = vmatpush2.msra.mxu0 0.0
    %1237 = vmatprep.subr.mxu0 0.0
    %1238 = vmatpush2.msra.mxu0 0.0
    %1239 = vmatprep.subr.mxu0 0.0
    %1240 = vmatpush2.msra.mxu0 0.0
    %1241 = vmatprep.subr.mxu0 0.0
    %1242 = vmatpush2.msra.mxu0 0.0
    %1243 = vmatprep.subr.mxu0 0.0
    %1244 = vmatpush2.msra.mxu0 0.0
    %1245 = vmatprep.subr.mxu0 0.0
    %1246 = vmatpush2.msra.mxu0 0.0
    %1247 = vmatprep.subr.mxu0 0.0
    %1248 = vmatpush2.msra.mxu0 0.0
    %1249 = vmatprep.subr.mxu0 0.0
    %1250 = vmatpush2.msra.mxu0 0.0
    %1251 = vmatprep.subr.mxu0 0.0
    %1252 = vmatpush2.msra.mxu0 0.0
    %1253 = vmatprep.subr.mxu0 0.0
    %1254 = vmatpush2.msra.mxu0 0.0
    %1255 = vmatprep.subr.mxu0 0.0
    %1256 = vmatpush2.msra.mxu0 0.0
    %1257 = vmatprep.subr.mxu0 0.0
    %1258 = vmatpush2.msra.mxu0 0.0
    %1259 = vmatprep.mubr.f32.mxu0 0.0
    %1260 = vmatmul.mubr.f32.gmra.mxu0 %v1193
    %v1261 = vpop.f32.mrf.mxu0
    %v1262 = vadd.f32 0.0, %v1261
    %v1263 = vpop.f32.mrf.mxu0
    %v1264 = vadd.f32 0.0, %v1263
    %1265 = vdwg.mxu0
    %1266 = vmatprep.subr.mxu0 0.0
    %1267 = vmatpush1.msra.mxu0 %v75
    %1268 = vmatprep.subr.mxu0 0.0
    %1269 = vmatpush1.msra.mxu0 %v72
    %1270 = vmatprep.subr.mxu0 0.0
    %1271 = vmatpush1.msra.mxu0 %v69
    %1272 = vmatprep.subr.mxu0 0.0
    %1273 = vmatpush1.msra.mxu0 %v66
    %1274 = vmatprep.subr.mxu0 0.0
    %1275 = vmatpush1.msra.mxu0 %v63
    %1276 = vmatprep.subr.mxu0 0.0
    %1277 = vmatpush1.msra.mxu0 %v60
    %1278 = vmatprep.subr.mxu0 0.0
    %1279 = vmatpush1.msra.mxu0 %v57
    %1280 = vmatprep.subr.mxu0 0.0
    %1281 = vmatpush1.msra.mxu0 %v54
    %1282 = vmatprep.subr.mxu0 0.0
    %1283 = vmatpush1.msra.mxu0 %v51
    %1284 = vmatprep.subr.mxu0 0.0
    %1285 = vmatpush1.msra.mxu0 %v48
    %1286 = vmatprep.subr.mxu0 0.0
    %1287 = vmatpush1.msra.mxu0 %v45
    %1288 = vmatprep.subr.mxu0 0.0
    %1289 = vmatpush1.msra.mxu0 %v42
    %1290 = vmatprep.subr.mxu0 0.0
    %1291 = vmatpush1.msra.mxu0 %v39
    %1292 = vmatprep.subr.mxu0 0.0
    %1293 = vmatpush1.msra.mxu0 %v36
    %1294 = vmatprep.subr.mxu0 0.0
    %1295 = vmatpush1.msra.mxu0 %v33
    %1296 = vmatprep.subr.mxu0 0.0
    %1297 = vmatpush1.msra.mxu0 %v30
    %1298 = vmatprep.subr.mxu0 0.0
    %1299 = vmatpush2.msra.mxu0 0.0
    %1300 = vmatprep.subr.mxu0 0.0
    %1301 = vmatpush2.msra.mxu0 0.0
    %1302 = vmatprep.subr.mxu0 0.0
    %1303 = vmatpush2.msra.mxu0 0.0
    %1304 = vmatprep.subr.mxu0 0.0
    %1305 = vmatpush2.msra.mxu0 0.0
    %1306 = vmatprep.subr.mxu0 0.0
    %1307 = vmatpush2.msra.mxu0 0.0
    %1308 = vmatprep.subr.mxu0 0.0
    %1309 = vmatpush2.msra.mxu0 0.0
    %1310 = vmatprep.subr.mxu0 0.0
    %1311 = vmatpush2.msra.mxu0 0.0
    %1312 = vmatprep.subr.mxu0 0.0
    %1313 = vmatpush2.msra.mxu0 0.0
    %1314 = vmatprep.subr.mxu0 0.0
    %1315 = vmatpush2.msra.mxu0 0.0
    %1316 = vmatprep.subr.mxu0 0.0
    %1317 = vmatpush2.msra.mxu0 0.0
    %1318 = vmatprep.subr.mxu0 0.0
    %1319 = vmatpush2.msra.mxu0 0.0
    %1320 = vmatprep.subr.mxu0 0.0
    %1321 = vmatpush2.msra.mxu0 0.0
    %1322 = vmatprep.subr.mxu0 0.0
    %1323 = vmatpush2.msra.mxu0 0.0
    %1324 = vmatprep.subr.mxu0 0.0
    %1325 = vmatpush2.msra.mxu0 0.0
    %1326 = vmatprep.subr.mxu0 0.0
    %1327 = vmatpush2.msra.mxu0 0.0
    %1328 = vmatprep.subr.mxu0 0.0
    %1329 = vmatpush2.msra.mxu0 0.0
    %1330 = vmatprep.mubr.f32.mxu0 0.0
    %1331 = vmatmul.mubr.f32.gmra.mxu0 %v1193
    %v1332 = vpop.f32.mrf.mxu0
    %v1333 = vadd.f32 0.0, %v1332
    %v1334 = vpop.f32.mrf.mxu0
    %1335 = vdwg.mxu0
    %v1337 = vrot.slane %v1262, 4
    %v1339 = vadd.f32 %v191, %v1337
    %v1340 = vadd.f32 %v1339, %v274
    %v1341 = vxor.u32 %v1340, 2147483648
    %v1342 = vmul.f32 %v1341, 1.442695
    %v1343 = vpow.pop %v1342
    %v1344 = vadd.f32 %v1343, 1.0
    %v1345 = vrcp.pop %v1344
    %v1346 = vmul.f32 1.0, %v1345
    %v1348 = vrot.slane %v1264, 4
    %v1350 = vadd.f32 %v193, %v1348
    %v1351 = vadd.f32 %v1350, %v286
    %v1352 = vxor.u32 %v1351, 2147483648
    %v1353 = vmul.f32 %v1352, 1.442695
    %v1354 = vpow.pop %v1353
    %v1355 = vadd.f32 %v1354, 1.0
    %v1356 = vrcp.pop %v1355
    %v1357 = vmul.f32 1.0, %v1356
    %v1358 = vadd.f32 %v1333, %v302
    %v1360 = vrot.slane %v1358, 4
    %v1362 = vmul.f32 %v1346, %v1360
    %v1363 = vadd.f32 %v1006, %v1362
    %v1364 = vtanh.pop %v1363
    %v1365 = vsub.f32 1.0, %v1357
    %v1366 = vmul.f32 %v1365, %v1364
    %v1367 = vrot.slane %v1191, 6
    %v1369 = vmul.f32 %v1357, %v1367
    %v1370 = vadd.f32 %v1366, %v1369
    %v1372 = vrot.slane %v1370, 4
    %1374 = vmatprep.subr.mxu0 %v74
    %1375 = vmatpush1.msra.mxu0 %v73
    %1376 = vmatprep.subr.mxu0 %v71
    %1377 = vmatpush1.msra.mxu0 %v70
    %1378 = vmatprep.subr.mxu0 %v68
    %1379 = vmatpush1.msra.mxu0 %v67
    %1380 = vmatprep.subr.mxu0 %v65
    %1381 = vmatpush1.msra.mxu0 %v64
    %1382 = vmatprep.subr.mxu0 %v62
    %1383 = vmatpush1.msra.mxu0 %v61
    %1384 = vmatprep.subr.mxu0 %v59
    %1385 = vmatpush1.msra.mxu0 %v58
    %1386 = vmatprep.subr.mxu0 %v56
    %1387 = vmatpush1.msra.mxu0 %v55
    %1388 = vmatprep.subr.mxu0 %v53
    %1389 = vmatpush1.msra.mxu0 %v52
    %1390 = vmatprep.subr.mxu0 %v50
    %1391 = vmatpush1.msra.mxu0 %v49
    %1392 = vmatprep.subr.mxu0 %v47
    %1393 = vmatpush1.msra.mxu0 %v46
    %1394 = vmatprep.subr.mxu0 %v44
    %1395 = vmatpush1.msra.mxu0 %v43
    %1396 = vmatprep.subr.mxu0 %v41
    %1397 = vmatpush1.msra.mxu0 %v40
    %1398 = vmatprep.subr.mxu0 %v38
    %1399 = vmatpush1.msra.mxu0 %v37
    %1400 = vmatprep.subr.mxu0 %v35
    %1401 = vmatpush1.msra.mxu0 %v34
    %1402 = vmatprep.subr.mxu0 %v32
    %1403 = vmatpush1.msra.mxu0 %v31
    %1404 = vmatprep.subr.mxu0 %v29
    %1405 = vmatpush1.msra.mxu0 %v28
    %1406 = vmatprep.subr.mxu0 0.0
    %1407 = vmatpush2.msra.mxu0 0.0
    %1408 = vmatprep.subr.mxu0 0.0
    %1409 = vmatpush2.msra.mxu0 0.0
    %1410 = vmatprep.subr.mxu0 0.0
    %1411 = vmatpush2.msra.mxu0 0.0
    %1412 = vmatprep.subr.mxu0 0.0
    %1413 = vmatpush2.msra.mxu0 0.0
    %1414 = vmatprep.subr.mxu0 0.0
    %1415 = vmatpush2.msra.mxu0 0.0
    %1416 = vmatprep.subr.mxu0 0.0
    %1417 = vmatpush2.msra.mxu0 0.0
    %1418 = vmatprep.subr.mxu0 0.0
    %1419 = vmatpush2.msra.mxu0 0.0
    %1420 = vmatprep.subr.mxu0 0.0
    %1421 = vmatpush2.msra.mxu0 0.0
    %1422 = vmatprep.subr.mxu0 0.0
    %1423 = vmatpush2.msra.mxu0 0.0
    %1424 = vmatprep.subr.mxu0 0.0
    %1425 = vmatpush2.msra.mxu0 0.0
    %1426 = vmatprep.subr.mxu0 0.0
    %1427 = vmatpush2.msra.mxu0 0.0
    %1428 = vmatprep.subr.mxu0 0.0
    %1429 = vmatpush2.msra.mxu0 0.0
    %1430 = vmatprep.subr.mxu0 0.0
    %1431 = vmatpush2.msra.mxu0 0.0
    %1432 = vmatprep.subr.mxu0 0.0
    %1433 = vmatpush2.msra.mxu0 0.0
    %1434 = vmatprep.subr.mxu0 0.0
    %1435 = vmatpush2.msra.mxu0 0.0
    %1436 = vmatprep.subr.mxu0 0.0
    %1437 = vmatpush2.msra.mxu0 0.0
    %1438 = vmatprep.mubr.f32.mxu0 0.0
    %1439 = vmatmul.mubr.f32.gmra.mxu0 %v1372
    %v1440 = vpop.f32.mrf.mxu0
    %v1441 = vadd.f32 0.0, %v1440
    %v1442 = vpop.f32.mrf.mxu0
    %v1443 = vadd.f32 0.0, %v1442
    %1444 = vdwg.mxu0
    %1445 = vmatprep.subr.mxu0 0.0
    %1446 = vmatpush1.msra.mxu0 %v75
    %1447 = vmatprep.subr.mxu0 0.0
    %1448 = vmatpush1.msra.mxu0 %v72
    %1449 = vmatprep.subr.mxu0 0.0
    %1450 = vmatpush1.msra.mxu0 %v69
    %1451 = vmatprep.subr.mxu0 0.0
    %1452 = vmatpush1.msra.mxu0 %v66
    %1453 = vmatprep.subr.mxu0 0.0
    %1454 = vmatpush1.msra.mxu0 %v63
    %1455 = vmatprep.subr.mxu0 0.0
    %1456 = vmatpush1.msra.mxu0 %v60
    %1457 = vmatprep.subr.mxu0 0.0
    %1458 = vmatpush1.msra.mxu0 %v57
    %1459 = vmatprep.subr.mxu0 0.0
    %1460 = vmatpush1.msra.mxu0 %v54
    %1461 = vmatprep.subr.mxu0 0.0
    %1462 = vmatpush1.msra.mxu0 %v51
    %1463 = vmatprep.subr.mxu0 0.0
    %1464 = vmatpush1.msra.mxu0 %v48
    %1465 = vmatprep.subr.mxu0 0.0
    %1466 = vmatpush1.msra.mxu0 %v45
    %1467 = vmatprep.subr.mxu0 0.0
    %1468 = vmatpush1.msra.mxu0 %v42
    %1469 = vmatprep.subr.mxu0 0.0
    %1470 = vmatpush1.msra.mxu0 %v39
    %1471 = vmatprep.subr.mxu0 0.0
    %1472 = vmatpush1.msra.mxu0 %v36
    %1473 = vmatprep.subr.mxu0 0.0
    %1474 = vmatpush1.msra.mxu0 %v33
    %1475 = vmatprep.subr.mxu0 0.0
    %1476 = vmatpush1.msra.mxu0 %v30
    %1477 = vmatprep.subr.mxu0 0.0
    %1478 = vmatpush2.msra.mxu0 0.0
    %1479 = vmatprep.subr.mxu0 0.0
    %1480 = vmatpush2.msra.mxu0 0.0
    %1481 = vmatprep.subr.mxu0 0.0
    %1482 = vmatpush2.msra.mxu0 0.0
    %1483 = vmatprep.subr.mxu0 0.0
    %1484 = vmatpush2.msra.mxu0 0.0
    %1485 = vmatprep.subr.mxu0 0.0
    %1486 = vmatpush2.msra.mxu0 0.0
    %1487 = vmatprep.subr.mxu0 0.0
    %1488 = vmatpush2.msra.mxu0 0.0
    %1489 = vmatprep.subr.mxu0 0.0
    %1490 = vmatpush2.msra.mxu0 0.0
    %1491 = vmatprep.subr.mxu0 0.0
    %1492 = vmatpush2.msra.mxu0 0.0
    %1493 = vmatprep.subr.mxu0 0.0
    %1494 = vmatpush2.msra.mxu0 0.0
    %1495 = vmatprep.subr.mxu0 0.0
    %1496 = vmatpush2.msra.mxu0 0.0
    %1497 = vmatprep.subr.mxu0 0.0
    %1498 = vmatpush2.msra.mxu0 0.0
    %1499 = vmatprep.subr.mxu0 0.0
    %1500 = vmatpush2.msra.mxu0 0.0
    %1501 = vmatprep.subr.mxu0 0.0
    %1502 = vmatpush2.msra.mxu0 0.0
    %1503 = vmatprep.subr.mxu0 0.0
    %1504 = vmatpush2.msra.mxu0 0.0
    %1505 = vmatprep.subr.mxu0 0.0
    %1506 = vmatpush2.msra.mxu0 0.0
    %1507 = vmatprep.subr.mxu0 0.0
    %1508 = vmatpush2.msra.mxu0 0.0
    %1509 = vmatprep.mubr.f32.mxu0 0.0
    %1510 = vmatmul.mubr.f32.gmra.mxu0 %v1372
    %v1511 = vpop.f32.mrf.mxu0
    %v1512 = vadd.f32 0.0, %v1511
    %v1513 = vpop.f32.mrf.mxu0
    %1514 = vdwg.mxu0
    %v1516 = vrot.slane %v1441, 2
    %v1518 = vadd.f32 %v191, %v1516
    %v1519 = vadd.f32 %v1518, %v274
    %v1520 = vxor.u32 %v1519, 2147483648
    %v1521 = vmul.f32 %v1520, 1.442695
    %v1522 = vpow.pop %v1521
    %v1523 = vadd.f32 %v1522, 1.0
    %v1524 = vrcp.pop %v1523
    %v1525 = vmul.f32 1.0, %v1524
    %v1527 = vrot.slane %v1443, 2
    %v1529 = vadd.f32 %v193, %v1527
    %v1530 = vadd.f32 %v1529, %v286
    %v1531 = vxor.u32 %v1530, 2147483648
    %v1532 = vmul.f32 %v1531, 1.442695
    %v1533 = vpow.pop %v1532
    %v1534 = vadd.f32 %v1533, 1.0
    %v1535 = vrcp.pop %v1534
    %v1536 = vmul.f32 1.0, %v1535
    %v1537 = vadd.f32 %v1512, %v302
    %v1539 = vrot.slane %v1537, 2
    %v1541 = vmul.f32 %v1525, %v1539
    %v1542 = vadd.f32 %v1006, %v1541
    %v1543 = vtanh.pop %v1542
    %v1544 = vsub.f32 1.0, %v1536
    %v1545 = vmul.f32 %v1544, %v1543
    %v1546 = vrot.slane %v1370, 6
    %v1548 = vmul.f32 %v1536, %v1546
    %v1549 = vadd.f32 %v1545, %v1548
    %vm1550 = vcmask 1041408
    %v1551 = vsel %vm1550, %v310, %v487
    %v1552 = vsel %vm111, %v1551, %v666
    %vm1553 = vcmask 1045504
    %v1554 = vsel %vm1553, %v1552, %v845
    %v1555 = vsel %vm1550, %v1014, %v1191
    %v1556 = vsel %vm111, %v1555, %v1370
    %v1557 = vsel %vm1553, %v1556, %v1549
    %v1558 = vld [vmem:[%s5] sm:$0x3]
    %v1559 = vld [vmem:[%s5] sm:$0xff]
    %v1560 = vld [vmem:[%s5 + $0x8] sm:$0xff]
    %v1561 = vld [vmem:[%s3 + $0x9] sm:$0x1]
    %v1563 = vrot.slane %v1549, 6
    %1565 = vmatprep.subr.mxu0 0.0
    %1566 = vmatpush1.msra.mxu0 %v91
    %1567 = vmatprep.subr.mxu0 0.0
    %1568 = vmatpush1.msra.mxu0 %v90
    %1569 = vmatprep.subr.mxu0 0.0
    %1570 = vmatpush1.msra.mxu0 %v89
    %1571 = vmatprep.subr.mxu0 0.0
    %1572 = vmatpush1.msra.mxu0 %v88
    %1573 = vmatprep.subr.mxu0 0.0
    %1574 = vmatpush1.msra.mxu0 %v87
    %1575 = vmatprep.subr.mxu0 0.0
    %1576 = vmatpush1.msra.mxu0 %v86
    %1577 = vmatprep.subr.mxu0 0.0
    %1578 = vmatpush1.msra.mxu0 %v85
    %1579 = vmatprep.subr.mxu0 0.0
    %1580 = vmatpush1.msra.mxu0 %v84
    %1581 = vmatprep.subr.mxu0 0.0
    %1582 = vmatpush1.msra.mxu0 %v83
    %1583 = vmatprep.subr.mxu0 0.0
    %1584 = vmatpush1.msra.mxu0 %v82
    %1585 = vmatprep.subr.mxu0 0.0
    %1586 = vmatpush1.msra.mxu0 %v81
    %1587 = vmatprep.subr.mxu0 0.0
    %1588 = vmatpush1.msra.mxu0 %v80
    %1589 = vmatprep.subr.mxu0 0.0
    %1590 = vmatpush1.msra.mxu0 %v79
    %1591 = vmatprep.subr.mxu0 0.0
    %1592 = vmatpush1.msra.mxu0 %v78
    %1593 = vmatprep.subr.mxu0 0.0
    %1594 = vmatpush1.msra.mxu0 %v77
    %1595 = vmatprep.subr.mxu0 0.0
    %1596 = vmatpush1.msra.mxu0 %v76
    %1597 = vmatprep.subr.mxu0 0.0
    %1598 = vmatpush2.msra.mxu0 0.0
    %1599 = vmatprep.subr.mxu0 0.0
    %1600 = vmatpush2.msra.mxu0 0.0
    %1601 = vmatprep.subr.mxu0 0.0
    %1602 = vmatpush2.msra.mxu0 0.0
    %1603 = vmatprep.subr.mxu0 0.0
    %1604 = vmatpush2.msra.mxu0 0.0
    %1605 = vmatprep.subr.mxu0 0.0
    %1606 = vmatpush2.msra.mxu0 0.0
    %1607 = vmatprep.subr.mxu0 0.0
    %1608 = vmatpush2.msra.mxu0 0.0
    %1609 = vmatprep.subr.mxu0 0.0
    %1610 = vmatpush2.msra.mxu0 0.0
    %1611 = vmatprep.subr.mxu0 0.0
    %1612 = vmatpush2.msra.mxu0 0.0
    %1613 = vmatprep.subr.mxu0 0.0
    %1614 = vmatpush2.msra.mxu0 0.0
    %1615 = vmatprep.subr.mxu0 0.0
    %1616 = vmatpush2.msra.mxu0 0.0
    %1617 = vmatprep.subr.mxu0 0.0
    %1618 = vmatpush2.msra.mxu0 0.0
    %1619 = vmatprep.subr.mxu0 0.0
    %1620 = vmatpush2.msra.mxu0 0.0
    %1621 = vmatprep.subr.mxu0 0.0
    %1622 = vmatpush2.msra.mxu0 0.0
    %1623 = vmatprep.subr.mxu0 0.0
    %1624 = vmatpush2.msra.mxu0 0.0
    %1625 = vmatprep.subr.mxu0 0.0
    %1626 = vmatpush2.msra.mxu0 0.0
    %1627 = vmatprep.subr.mxu0 0.0
    %1628 = vmatpush2.msra.mxu0 0.0
    %1629 = vmatprep.mubr.f32.mxu0 0.0
    %1630 = vmatmul.mubr.f32.gmra.mxu0 %v1563
    %v1631 = vpop.f32.mrf.mxu0
    %v1632 = vadd.f32 0.0, %v1631
    %v1633 = vpop.f32.mrf.mxu0
    %1634 = vdwg.mxu0
    %v1635 = vld [vmem:[%s4] sm:$0xff]
    %v1636 = vld [vmem:[%s4 + $0x20] sm:$0xff]
    %v1637 = vld [vmem:[%s4 + $0x40] sm:$0xff]
    %v1638 = vld [vmem:[%s4 + $0x60] sm:$0xff]
    %vm1639 = vcmask 261120
    %v1641 = vsel %vm1639, %v1632, 0
    %1643 = vmatprep.subr.mxu0 0.0
    %1644 = vmatpush1.msra.mxu0 0.0
    %1645 = vmatprep.subr.mxu0 0.0
    %1646 = vmatpush1.msra.mxu0 0.0
    %1647 = vmatprep.subr.mxu0 0.0
    %1648 = vmatpush1.msra.mxu0 0.0
    %1649 = vmatprep.subr.mxu0 0.0
    %1650 = vmatpush1.msra.mxu0 0.0
    %1651 = vmatprep.subr.mxu0 0.0
    %1652 = vmatpush1.msra.mxu0 0.0
    %1653 = vmatprep.subr.mxu0 0.0
    %1654 = vmatpush1.msra.mxu0 0.0
    %1655 = vmatprep.subr.mxu0 0.0
    %1656 = vmatpush1.msra.mxu0 0.0
    %1657 = vmatprep.subr.mxu0 0.0
    %1658 = vmatpush1.msra.mxu0 0.0
    %1659 = vmatprep.subr.mxu0 0.0
    %1660 = vmatpush1.msra.mxu0 0.0
    %1661 = vmatprep.subr.mxu0 0.0
    %1662 = vmatpush1.msra.mxu0 0.0
    %1663 = vmatprep.subr.mxu0 0.0
    %1664 = vmatpush1.msra.mxu0 0.0
    %1665 = vmatprep.subr.mxu0 0.0
    %1666 = vmatpush1.msra.mxu0 0.0
    %1667 = vmatprep.subr.mxu0 0.0
    %1668 = vmatpush1.msra.mxu0 %v1638
    %1669 = vmatprep.subr.mxu0 0.0
    %1670 = vmatpush1.msra.mxu0 %v1637
    %1671 = vmatprep.subr.mxu0 0.0
    %1672 = vmatpush1.msra.mxu0 %v1636
    %1673 = vmatprep.subr.mxu0 0.0
    %1674 = vmatpush1.msra.mxu0 %v1635
    %1675 = vmatprep.subr.mxu0 0.0
    %1676 = vmatpush2.msra.mxu0 0.0
    %1677 = vmatprep.subr.mxu0 0.0
    %1678 = vmatpush2.msra.mxu0 0.0
    %1679 = vmatprep.subr.mxu0 0.0
    %1680 = vmatpush2.msra.mxu0 0.0
    %1681 = vmatprep.subr.mxu0 0.0
    %1682 = vmatpush2.msra.mxu0 0.0
    %1683 = vmatprep.subr.mxu0 0.0
    %1684 = vmatpush2.msra.mxu0 0.0
    %1685 = vmatprep.subr.mxu0 0.0
    %1686 = vmatpush2.msra.mxu0 0.0
    %1687 = vmatprep.subr.mxu0 0.0
    %1688 = vmatpush2.msra.mxu0 0.0
    %1689 = vmatprep.subr.mxu0 0.0
    %1690 = vmatpush2.msra.mxu0 0.0
    %1691 = vmatprep.subr.mxu0 0.0
    %1692 = vmatpush2.msra.mxu0 0.0
    %1693 = vmatprep.subr.mxu0 0.0
    %1694 = vmatpush2.msra.mxu0 0.0
    %1695 = vmatprep.subr.mxu0 0.0
    %1696 = vmatpush2.msra.mxu0 0.0
    %1697 = vmatprep.subr.mxu0 0.0
    %1698 = vmatpush2.msra.mxu0 0.0
    %1699 = vmatprep.subr.mxu0 0.0
    %1700 = vmatpush2.msra.mxu0 0.0
    %1701 = vmatprep.subr.mxu0 0.0
    %1702 = vmatpush2.msra.mxu0 0.0
    %1703 = vmatprep.subr.mxu0 0.0
    %1704 = vmatpush2.msra.mxu0 0.0
    %1705 = vmatprep.subr.mxu0 0.0
    %1706 = vmatpush2.msra.mxu0 0.0
    %1707 = vmatprep.mubr.f32.mxu0 0.0
    %1708 = vmatmul.mubr.f32.gmra.mxu0 %v1641
    %v1709 = vpop.f32.mrf.mxu0
    %v1710 = vadd.f32 0.0, %v1709
    %v1711 = vpop.f32.mrf.mxu0
    %1712 = vdwg.mxu0
    %v1714 = vrot.slane %v1710, 6
    %v1716 = vrot.slane %v1710, 4
    %v1718 = vrot.slane %v1710, 2
    %v1720 = vsel %vm1550, %v1710, %v1714
    %v1721 = vsel %vm111, %v1720, %v1716
    %v1722 = vsel %vm1553, %v1721, %v1718
    %v1723 = vmul.f32 %v1554, %v1722
    %v1724 = vmul.f32 %v1557, %v1722
    %1725 = vmatprep.subr.mxu0 0.0
    %1726 = vmatpush1.xpose.msra.mxu0 0.0
    %1727 = vmatprep.subr.mxu0 0.0
    %1728 = vmatpush1.xpose.msra.mxu0 0.0
    %1729 = vmatprep.subr.mxu0 0.0
    %1730 = vmatpush1.xpose.msra.mxu0 0.0
    %1731 = vmatprep.subr.mxu0 0.0
    %1732 = vmatpush1.xpose.msra.mxu0 0.0
    %1733 = vmatprep.subr.mxu0 0.0
    %1734 = vmatpush1.xpose.msra.mxu0 0.0
    %1735 = vmatprep.subr.mxu0 0.0
    %1736 = vmatpush1.xpose.msra.mxu0 0.0
    %1737 = vmatprep.subr.mxu0 0.0
    %1738 = vmatpush1.xpose.msra.mxu0 0.0
    %1739 = vmatprep.subr.mxu0 0.0
    %1740 = vmatpush1.xpose.msra.mxu0 0.0
    %1741 = vmatprep.subr.mxu0 0.0
    %1742 = vmatpush1.xpose.msra.mxu0 0.0
    %1743 = vmatprep.subr.mxu0 0.0
    %1744 = vmatpush1.xpose.msra.mxu0 0.0
    %1745 = vmatprep.subr.mxu0 0.0
    %1746 = vmatpush1.xpose.msra.mxu0 0.0
    %1747 = vmatprep.subr.mxu0 0.0
    %1748 = vmatpush1.xpose.msra.mxu0 0.0
    %1749 = vmatprep.subr.mxu0 0.0
    %1750 = vmatpush1.xpose.msra.mxu0 0.0
    %1751 = vmatprep.subr.mxu0 0.0
    %1752 = vmatpush1.xpose.msra.mxu0 0.0
    %1753 = vmatprep.subr.mxu0 0.0
    %1754 = vmatpush1.xpose.msra.mxu0 0.0
    %1755 = vmatprep.subr.mxu0 0.0
    %1756 = vmatpush1.xpose.msra.mxu0 %v94
    %1757 = vmatprep.subr.mxu0 0.0
    %1758 = vmatpush2.xpose.msra.mxu0 0.0
    %1759 = vmatprep.subr.mxu0 0.0
    %1760 = vmatpush2.xpose.msra.mxu0 0.0
    %1761 = vmatprep.subr.mxu0 0.0
    %1762 = vmatpush2.xpose.msra.mxu0 0.0
    %1763 = vmatprep.subr.mxu0 0.0
    %1764 = vmatpush2.xpose.msra.mxu0 0.0
    %1765 = vmatprep.subr.mxu0 0.0
    %1766 = vmatpush2.xpose.msra.mxu0 0.0
    %1767 = vmatprep.subr.mxu0 0.0
    %1768 = vmatpush2.xpose.msra.mxu0 0.0
    %1769 = vmatprep.subr.mxu0 0.0
    %1770 = vmatpush2.xpose.msra.mxu0 0.0
    %1771 = vmatprep.subr.mxu0 0.0
    %1772 = vmatpush2.xpose.msra.mxu0 0.0
    %1773 = vmatprep.subr.mxu0 0.0
    %1774 = vmatpush2.xpose.msra.mxu0 0.0
    %1775 = vmatprep.subr.mxu0 0.0
    %1776 = vmatpush2.xpose.msra.mxu0 0.0
    %1777 = vmatprep.subr.mxu0 0.0
    %1778 = vmatpush2.xpose.msra.mxu0 0.0
    %1779 = vmatprep.subr.mxu0 0.0
    %1780 = vmatpush2.xpose.msra.mxu0 0.0
    %1781 = vmatprep.subr.mxu0 0.0
    %1782 = vmatpush2.xpose.msra.mxu0 0.0
    %1783 = vmatprep.subr.mxu0 0.0
    %1784 = vmatpush2.xpose.msra.mxu0 0.0
    %1785 = vmatprep.subr.mxu0 0.0
    %1786 = vmatpush2.xpose.msra.mxu0 0.0
    %1787 = vmatprep.subr.mxu0 0.0
    %1788 = vmatpush2.xpose.msra.mxu0 0.0
    %1789 = vmatprep.mubr.f32.mxu0 0.0
    %1790 = vmatmul.mubr.f32.gmra.mxu0 %v1723
    %v1791 = vpop.f32.mrf.mxu0
    %v1792 = vadd.f32 0.0, %v1791
    %v1793 = vpop.f32.mrf.mxu0
    %1794 = vmatprep.mubr.f32.mxu0 0.0
    %1795 = vmatmul.mubr.f32.gmra.mxu0 %v1724
    %v1796 = vpop.f32.mrf.mxu0
    %v1797 = vadd.f32 0.0, %v1796
    %v1798 = vpop.f32.mrf.mxu0
    %1799 = vdwg.mxu0
    %v1800 = vxor.u32 %v1792, 2147483648
    %v1801 = vxor.u32 %v1797, 2147483648
    %v1802 = vmul.f32 %v1800, 1.442695
    %v1803 = vpow.pop %v1802
    %v1804 = vmul.f32 %v1801, 1.442695
    %v1805 = vpow.pop %v1804
    %v1806 = vadd.f32 %v1803, 1.0
    %v1807 = vadd.f32 %v1805, 1.0
    %v1808 = vrcp.pop %v1806
    %v1809 = vmul.f32 1.0, %v1808
    %v1810 = vrcp.pop %v1807
    %v1811 = vmul.f32 1.0, %v1810
    %v1812 = vxor.u32 %v1561, 2147483648
    %v1813 = vmul.f32 %v1812, 1.442695
    %v1814 = vpow.pop %v1813
    %v1815 = vadd.f32 %v1814, 1.0
    %v1816 = vrcp.pop %v1815
    %v1817 = vmul.f32 1.0, %v1816
    %v1818 = vsub.f32 1.0, %v1809
    %v1819 = vsub.f32 1.0, %v1811
    %v1820 = vadd.f32 %v1818, 2.72
    %v1821 = vadd.f32 %v1819, 2.72
    %v1822 = vlog2.pop %v1820
    %v1823 = vmul.f32 %v1822, 0.6931472
    %v1824 = vlog2.pop %v1821
    %v1825 = vmul.f32 %v1824, 0.6931472
    %1827 = vset.pattern.permute.xlu0 52
    %1828 = vperm.xlu0 %1827, %v1559
    %v1829 = vpop.permute.xlu0 %1828
    %1832 = vset.pattern.permute.xlu0 52
    %1833 = vperm.xlu0 %1832, %v1560
    %v1834 = vpop.permute.xlu0 %1833
    %v1836 = vmul.f32 %v1823, %v1829
    %v1837 = vmul.f32 %v1825, %v1834
    %v1838 = vlaneseq
    %v1839 = vshrl.u32 %v1838, 7
    %v1840 = vsub.s32 0, %v1839
    %v1841 = vrot.slane %v1817, %v1840
    %v1842 = vmul.f32 %v1841, %v1836
    %v1843 = vmul.f32 %v1841, %v1837
    %v1844 = vrcp.pop %v1842
    %v1845 = vmul.f32 %v1809, %v1844
    %v1846 = vrcp.pop %v1843
    %v1847 = vmul.f32 %v1811, %v1846
    %v1848 = vmax.f32 %v1845, 0.0
    %v1849 = vmax.f32 %v1847, 0.0
    %v1851 = vrot.slane %v1848, 2
    %v1853 = vmax.f32 %v1848, %v1851
    %v1854 = vrot.slane %v1848, 4
    %v1856 = vmax.f32 %v1853, %v1854
    %v1857 = vrot.slane %v1848, 6
    %v1859 = vmax.f32 %v1856, %v1857
    %v1860 = vmax.f32 %v1859, %v1849
    %v1862 = vrot.slane %v1849, 2
    %v1864 = vmax.f32 %v1860, %v1862
    %v1865 = vrot.slane %v1849, 4
    %v1867 = vmax.f32 %v1864, %v1865
    %v1868 = vrot.slane %v1849, 6
    %v1870 = vmax.f32 %v1867, %v1868
    %v1872 = vrot.slane %v1870, 6
    %v1874 = vrot.slane %v1870, 4
    %v1876 = vrot.slane %v1870, 2
    %v1878 = vsel %vm1550, %v1870, %v1872
    %v1879 = vsel %vm111, %v1878, %v1874
    %v1880 = vsel %vm1553, %v1879, %v1876
    %v1881 = vsub.f32 %v1848, %v1880
    %v1882 = vsub.f32 %v1849, %v1880
    %v1883 = vmul.f32 %v1881, 1.442695
    %v1884 = vpow.pop %v1883
    %v1885 = vmul.f32 %v1882, 1.442695
    %v1886 = vpow.pop %v1885
    %1888 = vrot.lane.b32.xlu0 %v1558, 92
    %v1889 = vpop.permute.xlu0 %1888
    %vm1890 = vcmask 130048
    %v1891 = vsel %vm1890, %v1889, 0
    %1893 = vmatprep.subr.mxu0 0.0
    %1894 = vmatpush1.msra.mxu0 0.0
    %1895 = vmatprep.subr.mxu0 0.0
    %1896 = vmatpush1.msra.mxu0 0.0
    %1897 = vmatprep.subr.mxu0 0.0
    %1898 = vmatpush1.msra.mxu0 0.0
    %1899 = vmatprep.subr.mxu0 0.0
    %1900 = vmatpush1.msra.mxu0 0.0
    %1901 = vmatprep.subr.mxu0 0.0
    %1902 = vmatpush1.msra.mxu0 0.0
    %1903 = vmatprep.subr.mxu0 0.0
    %1904 = vmatpush1.msra.mxu0 0.0
    %1905 = vmatprep.subr.mxu0 0.0
    %1906 = vmatpush1.msra.mxu0 0.0
    %1907 = vmatprep.subr.mxu0 0.0
    %1908 = vmatpush1.msra.mxu0 0.0
    %1909 = vmatprep.subr.mxu0 0.0
    %1910 = vmatpush1.msra.mxu0 0.0
    %1911 = vmatprep.subr.mxu0 0.0
    %1912 = vmatpush1.msra.mxu0 0.0
    %1913 = vmatprep.subr.mxu0 0.0
    %1914 = vmatpush1.msra.mxu0 0.0
    %1915 = vmatprep.subr.mxu0 0.0
    %1916 = vmatpush1.msra.mxu0 0.0
    %1917 = vmatprep.subr.mxu0 0.0
    %1918 = vmatpush1.msra.mxu0 0.0
    %1919 = vmatprep.subr.mxu0 0.0
    %1920 = vmatpush1.msra.mxu0 0.0
    %1921 = vmatprep.subr.mxu0 0.0
    %1922 = vmatpush1.msra.mxu0 %v1886
    %1923 = vmatprep.subr.mxu0 0.0
    %1924 = vmatpush1.msra.mxu0 %v1884
    %1925 = vmatprep.subr.mxu0 0.0
    %1926 = vmatpush2.msra.mxu0 0.0
    %1927 = vmatprep.subr.mxu0 0.0
    %1928 = vmatpush2.msra.mxu0 0.0
    %1929 = vmatprep.subr.mxu0 0.0
    %1930 = vmatpush2.msra.mxu0 0.0
    %1931 = vmatprep.subr.mxu0 0.0
    %1932 = vmatpush2.msra.mxu0 0.0
    %1933 = vmatprep.subr.mxu0 0.0
    %1934 = vmatpush2.msra.mxu0 0.0
    %1935 = vmatprep.subr.mxu0 0.0
    %1936 = vmatpush2.msra.mxu0 0.0
    %1937 = vmatprep.subr.mxu0 0.0
    %1938 = vmatpush2.msra.mxu0 0.0
    %1939 = vmatprep.subr.mxu0 0.0
    %1940 = vmatpush2.msra.mxu0 0.0
    %1941 = vmatprep.subr.mxu0 0.0
    %1942 = vmatpush2.msra.mxu0 0.0
    %1943 = vmatprep.subr.mxu0 0.0
    %1944 = vmatpush2.msra.mxu0 0.0
    %1945 = vmatprep.subr.mxu0 0.0
    %1946 = vmatpush2.msra.mxu0 0.0
    %1947 = vmatprep.subr.mxu0 0.0
    %1948 = vmatpush2.msra.mxu0 0.0
    %1949 = vmatprep.subr.mxu0 0.0
    %1950 = vmatpush2.msra.mxu0 0.0
    %1951 = vmatprep.subr.mxu0 0.0
    %1952 = vmatpush2.msra.mxu0 0.0
    %1953 = vmatprep.subr.mxu0 0.0
    %1954 = vmatpush2.msra.mxu0 0.0
    %1955 = vmatprep.subr.mxu0 0.0
    %1956 = vmatpush2.msra.mxu0 0.0
    %1957 = vmatprep.mubr.f32.mxu0 0.0
    %1958 = vmatmul.mubr.f32.gmra.mxu0 %v1891
    %v1959 = vpop.f32.mrf.mxu0
    %v1960 = vadd.f32 0.0, %v1959
    %v1961 = vpop.f32.mrf.mxu0
    %1962 = vdwg.mxu0
    %v1963 = vrcp.pop %v1960
    %v1965 = vsel %vm104, %v1884, 0
    %v1968 = vsel %vm104, %v1886, 0
    %v1971 = vsel %vm111, %v94, 0
    %1973 = vmatprep.subr.mxu0 0.0
    %1974 = vmatpush1.msra.mxu0 0.0
    %1975 = vmatprep.subr.mxu0 0.0
    %1976 = vmatpush1.msra.mxu0 0.0
    %1977 = vmatprep.subr.mxu0 0.0
    %1978 = vmatpush1.msra.mxu0 0.0
    %1979 = vmatprep.subr.mxu0 0.0
    %1980 = vmatpush1.msra.mxu0 0.0
    %1981 = vmatprep.subr.mxu0 0.0
    %1982 = vmatpush1.msra.mxu0 0.0
    %1983 = vmatprep.subr.mxu0 0.0
    %1984 = vmatpush1.msra.mxu0 0.0
    %1985 = vmatprep.subr.mxu0 0.0
    %1986 = vmatpush1.msra.mxu0 0.0
    %1987 = vmatprep.subr.mxu0 0.0
    %1988 = vmatpush1.msra.mxu0 0.0
    %1989 = vmatprep.subr.mxu0 0.0
    %1990 = vmatpush1.msra.mxu0 0.0
    %1991 = vmatprep.subr.mxu0 0.0
    %1992 = vmatpush1.msra.mxu0 0.0
    %1993 = vmatprep.subr.mxu0 0.0
    %1994 = vmatpush1.msra.mxu0 0.0
    %1995 = vmatprep.subr.mxu0 0.0
    %1996 = vmatpush1.msra.mxu0 0.0
    %1997 = vmatprep.subr.mxu0 0.0
    %1998 = vmatpush1.msra.mxu0 0.0
    %1999 = vmatprep.subr.mxu0 0.0
    %2000 = vmatpush1.msra.mxu0 0.0
    %2001 = vmatprep.subr.mxu0 0.0
    %2002 = vmatpush1.msra.mxu0 0.0
    %2003 = vmatprep.subr.mxu0 0.0
    %2004 = vmatpush1.msra.mxu0 %v1971
    %2005 = vmatprep.subr.mxu0 0.0
    %2006 = vmatpush2.msra.mxu0 0.0
    %2007 = vmatprep.subr.mxu0 0.0
    %2008 = vmatpush2.msra.mxu0 0.0
    %2009 = vmatprep.subr.mxu0 0.0
    %2010 = vmatpush2.msra.mxu0 0.0
    %2011 = vmatprep.subr.mxu0 0.0
    %2012 = vmatpush2.msra.mxu0 0.0
    %2013 = vmatprep.subr.mxu0 0.0
    %2014 = vmatpush2.msra.mxu0 0.0
    %2015 = vmatprep.subr.mxu0 0.0
    %2016 = vmatpush2.msra.mxu0 0.0
    %2017 = vmatprep.subr.mxu0 0.0
    %2018 = vmatpush2.msra.mxu0 0.0
    %2019 = vmatprep.subr.mxu0 0.0
    %2020 = vmatpush2.msra.mxu0 0.0
    %2021 = vmatprep.subr.mxu0 0.0
    %2022 = vmatpush2.msra.mxu0 0.0
    %2023 = vmatprep.subr.mxu0 0.0
    %2024 = vmatpush2.msra.mxu0 0.0
    %2025 = vmatprep.subr.mxu0 0.0
    %2026 = vmatpush2.msra.mxu0 0.0
    %2027 = vmatprep.subr.mxu0 0.0
    %2028 = vmatpush2.msra.mxu0 0.0
    %2029 = vmatprep.subr.mxu0 0.0
    %2030 = vmatpush2.msra.mxu0 0.0
    %2031 = vmatprep.subr.mxu0 0.0
    %2032 = vmatpush2.msra.mxu0 0.0
    %2033 = vmatprep.subr.mxu0 0.0
    %2034 = vmatpush2.msra.mxu0 0.0
    %2035 = vmatprep.subr.mxu0 0.0
    %2036 = vmatpush2.msra.mxu0 0.0
    %2037 = vmatprep.mubr.f32.mxu0 0.0
    %2038 = vmatmul.mubr.f32.gmra.mxu0 %v1965
    %v2039 = vpop.f32.mrf.mxu0
    %v2040 = vadd.f32 0.0, %v2039
    %v2041 = vpop.f32.mrf.mxu0
    %2042 = vmatprep.mubr.f32.mxu0 0.0
    %2043 = vmatmul.mubr.f32.gmra.mxu0 %v1968
    %v2044 = vpop.f32.mrf.mxu0
    %v2045 = vadd.f32 0.0, %v2044
    %v2046 = vpop.f32.mrf.mxu0
    %2047 = vdwg.mxu0
    %v2048 = vmul.f32 %v2040, %v1554
    %v2049 = vmul.f32 %v2045, %v1557
    %2050 = vmatprep.subr.mxu0 0.0
    %2051 = vmatpush1.msra.mxu0 0.0
    %2052 = vmatprep.subr.mxu0 0.0
    %2053 = vmatpush1.msra.mxu0 0.0
    %2054 = vmatprep.subr.mxu0 0.0
    %2055 = vmatpush1.msra.mxu0 0.0
    %2056 = vmatprep.subr.mxu0 0.0
    %2057 = vmatpush1.msra.mxu0 0.0
    %2058 = vmatprep.subr.mxu0 0.0
    %2059 = vmatpush1.msra.mxu0 0.0
    %2060 = vmatprep.subr.mxu0 0.0
    %2061 = vmatpush1.msra.mxu0 0.0
    %2062 = vmatprep.subr.mxu0 0.0
    %2063 = vmatpush1.msra.mxu0 0.0
    %2064 = vmatprep.subr.mxu0 0.0
    %2065 = vmatpush1.msra.mxu0 0.0
    %2066 = vmatprep.subr.mxu0 0.0
    %2067 = vmatpush1.msra.mxu0 0.0
    %2068 = vmatprep.subr.mxu0 0.0
    %2069 = vmatpush1.msra.mxu0 0.0
    %2070 = vmatprep.subr.mxu0 0.0
    %2071 = vmatpush1.msra.mxu0 0.0
    %2072 = vmatprep.subr.mxu0 0.0
    %2073 = vmatpush1.msra.mxu0 0.0
    %2074 = vmatprep.subr.mxu0 0.0
    %2075 = vmatpush1.msra.mxu0 0.0
    %2076 = vmatprep.subr.mxu0 0.0
    %2077 = vmatpush1.msra.mxu0 0.0
    %2078 = vmatprep.subr.mxu0 0.0
    %2079 = vmatpush1.msra.mxu0 %v2049
    %2080 = vmatprep.subr.mxu0 0.0
    %2081 = vmatpush1.msra.mxu0 %v2048
    %2082 = vmatprep.subr.mxu0 0.0
    %2083 = vmatpush2.msra.mxu0 0.0
    %2084 = vmatprep.subr.mxu0 0.0
    %2085 = vmatpush2.msra.mxu0 0.0
    %2086 = vmatprep.subr.mxu0 0.0
    %2087 = vmatpush2.msra.mxu0 0.0
    %2088 = vmatprep.subr.mxu0 0.0
    %2089 = vmatpush2.msra.mxu0 0.0
    %2090 = vmatprep.subr.mxu0 0.0
    %2091 = vmatpush2.msra.mxu0 0.0
    %2092 = vmatprep.subr.mxu0 0.0
    %2093 = vmatpush2.msra.mxu0 0.0
    %2094 = vmatprep.subr.mxu0 0.0
    %2095 = vmatpush2.msra.mxu0 0.0
    %2096 = vmatprep.subr.mxu0 0.0
    %2097 = vmatpush2.msra.mxu0 0.0
    %2098 = vmatprep.subr.mxu0 0.0
    %2099 = vmatpush2.msra.mxu0 0.0
    %2100 = vmatprep.subr.mxu0 0.0
    %2101 = vmatpush2.msra.mxu0 0.0
    %2102 = vmatprep.subr.mxu0 0.0
    %2103 = vmatpush2.msra.mxu0 0.0
    %2104 = vmatprep.subr.mxu0 0.0
    %2105 = vmatpush2.msra.mxu0 0.0
    %2106 = vmatprep.subr.mxu0 0.0
    %2107 = vmatpush2.msra.mxu0 0.0
    %2108 = vmatprep.subr.mxu0 0.0
    %2109 = vmatpush2.msra.mxu0 0.0
    %2110 = vmatprep.subr.mxu0 0.0
    %2111 = vmatpush2.msra.mxu0 0.0
    %2112 = vmatprep.subr.mxu0 0.0
    %2113 = vmatpush2.msra.mxu0 0.0
    %2114 = vmatprep.mubr.f32.mxu0 0.0
    %2115 = vmatmul.mubr.f32.gmra.mxu0 %v1891
    %v2116 = vpop.f32.mrf.mxu0
    %v2117 = vadd.f32 0.0, %v2116
    %v2118 = vpop.f32.mrf.mxu0
    %2119 = vdwg.mxu0
    %v2121 = vsel %vm104, %v1963, 0
    %2123 = vmatprep.subr.mxu0 0.0
    %2124 = vmatpush1.msra.mxu0 0.0
    %2125 = vmatprep.subr.mxu0 0.0
    %2126 = vmatpush1.msra.mxu0 0.0
    %2127 = vmatprep.subr.mxu0 0.0
    %2128 = vmatpush1.msra.mxu0 0.0
    %2129 = vmatprep.subr.mxu0 0.0
    %2130 = vmatpush1.msra.mxu0 0.0
    %2131 = vmatprep.subr.mxu0 0.0
    %2132 = vmatpush1.msra.mxu0 0.0
    %2133 = vmatprep.subr.mxu0 0.0
    %2134 = vmatpush1.msra.mxu0 0.0
    %2135 = vmatprep.subr.mxu0 0.0
    %2136 = vmatpush1.msra.mxu0 0.0
    %2137 = vmatprep.subr.mxu0 0.0
    %2138 = vmatpush1.msra.mxu0 0.0
    %2139 = vmatprep.subr.mxu0 0.0
    %2140 = vmatpush1.msra.mxu0 0.0
    %2141 = vmatprep.subr.mxu0 0.0
    %2142 = vmatpush1.msra.mxu0 0.0
    %2143 = vmatprep.subr.mxu0 0.0
    %2144 = vmatpush1.msra.mxu0 0.0
    %2145 = vmatprep.subr.mxu0 0.0
    %2146 = vmatpush1.msra.mxu0 0.0
    %2147 = vmatprep.subr.mxu0 0.0
    %2148 = vmatpush1.msra.mxu0 0.0
    %2149 = vmatprep.subr.mxu0 0.0
    %2150 = vmatpush1.msra.mxu0 0.0
    %2151 = vmatprep.subr.mxu0 0.0
    %2152 = vmatpush1.msra.mxu0 0.0
    %2153 = vmatprep.subr.mxu0 0.0
    %2154 = vmatpush1.msra.mxu0 %v1971
    %2155 = vmatprep.subr.mxu0 0.0
    %2156 = vmatpush2.msra.mxu0 0.0
    %2157 = vmatprep.subr.mxu0 0.0
    %2158 = vmatpush2.msra.mxu0 0.0
    %2159 = vmatprep.subr.mxu0 0.0
    %2160 = vmatpush2.msra.mxu0 0.0
    %2161 = vmatprep.subr.mxu0 0.0
    %2162 = vmatpush2.msra.mxu0 0.0
    %2163 = vmatprep.subr.mxu0 0.0
    %2164 = vmatpush2.msra.mxu0 0.0
    %2165 = vmatprep.subr.mxu0 0.0
    %2166 = vmatpush2.msra.mxu0 0.0
    %2167 = vmatprep.subr.mxu0 0.0
    %2168 = vmatpush2.msra.mxu0 0.0
    %2169 = vmatprep.subr.mxu0 0.0
    %2170 = vmatpush2.msra.mxu0 0.0
    %2171 = vmatprep.subr.mxu0 0.0
    %2172 = vmatpush2.msra.mxu0 0.0
    %2173 = vmatprep.subr.mxu0 0.0
    %2174 = vmatpush2.msra.mxu0 0.0
    %2175 = vmatprep.subr.mxu0 0.0
    %2176 = vmatpush2.msra.mxu0 0.0
    %2177 = vmatprep.subr.mxu0 0.0
    %2178 = vmatpush2.msra.mxu0 0.0
    %2179 = vmatprep.subr.mxu0 0.0
    %2180 = vmatpush2.msra.mxu0 0.0
    %2181 = vmatprep.subr.mxu0 0.0
    %2182 = vmatpush2.msra.mxu0 0.0
    %2183 = vmatprep.subr.mxu0 0.0
    %2184 = vmatpush2.msra.mxu0 0.0
    %2185 = vmatprep.subr.mxu0 0.0
    %2186 = vmatpush2.msra.mxu0 0.0
    %2187 = vmatprep.mubr.f32.mxu0 0.0
    %2188 = vmatmul.mubr.f32.gmra.mxu0 %v2121
    %v2189 = vpop.f32.mrf.mxu0
    %v2190 = vadd.f32 0.0, %v2189
    %v2191 = vpop.f32.mrf.mxu0
    %2192 = vdwg.mxu0
    %v2193 = vmul.f32 %v2117, %v2190
    %v2195 = vrot.slane %v2193, 6
    %2196 = vrot.lane.b32.xlu0 %v2195, 96
    %v2197 = vpop.permute.xlu0 %2196
    %v2199 = vrot.slane %v2193, 4
    %2200 = vrot.lane.b32.xlu0 %v2199, 64
    %v2201 = vpop.permute.xlu0 %2200
    %v2203 = vrot.slane %v2193, 2
    %2204 = vrot.lane.b32.xlu0 %v2203, 32
    %v2205 = vpop.permute.xlu0 %2204
    %v2207 = vsel %vm1550, %v2193, %v2197
    %v2208 = vsel %vm111, %v2207, %v2201
    %v2209 = vsel %vm1553, %v2208, %v2205
    %v2210 = vld [vmem:[%s4 + $0x8] sm:$0xff]
    %v2211 = vld [vmem:[%s4 + $0x28] sm:$0xff]
    %v2212 = vld [vmem:[%s4 + $0x48] sm:$0xff]
    %v2213 = vld [vmem:[%s4 + $0x68] sm:$0xff]
    %v2214 = vld [vmem:[%s3 + $0x4] sm:$0x1]
    %v2215 = vlaneseq
    %v2216 = vshrl.u32 %v2215, 7
    %v2217 = vsub.s32 0, %v2216
    %v2218 = vrot.slane %v2214, %v2217
    %v2220 = vsel %vm1639, %v2209, 0
    %2222 = vmatprep.subr.mxu0 0.0
    %2223 = vmatpush1.msra.mxu0 0.0
    %2224 = vmatprep.subr.mxu0 0.0
    %2225 = vmatpush1.msra.mxu0 0.0
    %2226 = vmatprep.subr.mxu0 0.0
    %2227 = vmatpush1.msra.mxu0 0.0
    %2228 = vmatprep.subr.mxu0 0.0
    %2229 = vmatpush1.msra.mxu0 0.0
    %2230 = vmatprep.subr.mxu0 0.0
    %2231 = vmatpush1.msra.mxu0 0.0
    %2232 = vmatprep.subr.mxu0 0.0
    %2233 = vmatpush1.msra.mxu0 0.0
    %2234 = vmatprep.subr.mxu0 0.0
    %2235 = vmatpush1.msra.mxu0 0.0
    %2236 = vmatprep.subr.mxu0 0.0
    %2237 = vmatpush1.msra.mxu0 0.0
    %2238 = vmatprep.subr.mxu0 0.0
    %2239 = vmatpush1.msra.mxu0 0.0
    %2240 = vmatprep.subr.mxu0 0.0
    %2241 = vmatpush1.msra.mxu0 0.0
    %2242 = vmatprep.subr.mxu0 0.0
    %2243 = vmatpush1.msra.mxu0 0.0
    %2244 = vmatprep.subr.mxu0 0.0
    %2245 = vmatpush1.msra.mxu0 0.0
    %2246 = vmatprep.subr.mxu0 0.0
    %2247 = vmatpush1.msra.mxu0 %v2213
    %2248 = vmatprep.subr.mxu0 0.0
    %2249 = vmatpush1.msra.mxu0 %v2212
    %2250 = vmatprep.subr.mxu0 0.0
    %2251 = vmatpush1.msra.mxu0 %v2211
    %2252 = vmatprep.subr.mxu0 0.0
    %2253 = vmatpush1.msra.mxu0 %v2210
    %2254 = vmatprep.subr.mxu0 0.0
    %2255 = vmatpush2.msra.mxu0 0.0
    %2256 = vmatprep.subr.mxu0 0.0
    %2257 = vmatpush2.msra.mxu0 0.0
    %2258 = vmatprep.subr.mxu0 0.0
    %2259 = vmatpush2.msra.mxu0 0.0
    %2260 = vmatprep.subr.mxu0 0.0
    %2261 = vmatpush2.msra.mxu0 0.0
    %2262 = vmatprep.subr.mxu0 0.0
    %2263 = vmatpush2.msra.mxu0 0.0
    %2264 = vmatprep.subr.mxu0 0.0
    %2265 = vmatpush2.msra.mxu0 0.0
    %2266 = vmatprep.subr.mxu0 0.0
    %2267 = vmatpush2.msra.mxu0 0.0
    %2268 = vmatprep.subr.mxu0 0.0
    %2269 = vmatpush2.msra.mxu0 0.0
    %2270 = vmatprep.subr.mxu0 0.0
    %2271 = vmatpush2.msra.mxu0 0.0
    %2272 = vmatprep.subr.mxu0 0.0
    %2273 = vmatpush2.msra.mxu0 0.0
    %2274 = vmatprep.subr.mxu0 0.0
    %2275 = vmatpush2.msra.mxu0 0.0
    %2276 = vmatprep.subr.mxu0 0.0
    %2277 = vmatpush2.msra.mxu0 0.0
    %2278 = vmatprep.subr.mxu0 0.0
    %2279 = vmatpush2.msra.mxu0 0.0
    %2280 = vmatprep.subr.mxu0 0.0
    %2281 = vmatpush2.msra.mxu0 0.0
    %2282 = vmatprep.subr.mxu0 0.0
    %2283 = vmatpush2.msra.mxu0 0.0
    %2284 = vmatprep.subr.mxu0 0.0
    %2285 = vmatpush2.msra.mxu0 0.0
    %2286 = vmatprep.mubr.f32.mxu0 0.0
    %2287 = vmatmul.mubr.f32.gmra.mxu0 %v2220
    %v2288 = vpop.f32.mrf.mxu0
    %v2289 = vadd.f32 %v2218, %v2288
    %v2290 = vpop.f32.mrf.mxu0
    %2291 = vdwg.mxu0
    %v2292 = vld [vmem:[%s5] sm:$0xff]
    %2294 = vrot.lane.b32.xlu0 %v2289, 96
    %v2295 = vpop.permute.xlu0 %2294
    %vm2296 = vcmask 64512
    %v2297 = vsel %vm2296, %v2289, 0
    %v2299 = vsel %vm2296, %v2295, 0
    %2301 = vmatprep.subr.mxu0 0.0
    %2302 = vmatpush1.xpose.msra.mxu0 0.0
    %2303 = vmatprep.subr.mxu0 0.0
    %2304 = vmatpush1.xpose.msra.mxu0 0.0
    %2305 = vmatprep.subr.mxu0 0.0
    %2306 = vmatpush1.xpose.msra.mxu0 0.0
    %2307 = vmatprep.subr.mxu0 0.0
    %2308 = vmatpush1.xpose.msra.mxu0 0.0
    %2309 = vmatprep.subr.mxu0 0.0
    %2310 = vmatpush1.xpose.msra.mxu0 0.0
    %2311 = vmatprep.subr.mxu0 0.0
    %2312 = vmatpush1.xpose.msra.mxu0 0.0
    %2313 = vmatprep.subr.mxu0 0.0
    %2314 = vmatpush1.xpose.msra.mxu0 0.0
    %2315 = vmatprep.subr.mxu0 0.0
    %2316 = vmatpush1.xpose.msra.mxu0 0.0
    %2317 = vmatprep.subr.mxu0 0.0
    %2318 = vmatpush1.xpose.msra.mxu0 0.0
    %2319 = vmatprep.subr.mxu0 0.0
    %2320 = vmatpush1.xpose.msra.mxu0 0.0
    %2321 = vmatprep.subr.mxu0 0.0
    %2322 = vmatpush1.xpose.msra.mxu0 0.0
    %2323 = vmatprep.subr.mxu0 0.0
    %2324 = vmatpush1.xpose.msra.mxu0 0.0
    %2325 = vmatprep.subr.mxu0 0.0
    %2326 = vmatpush1.xpose.msra.mxu0 0.0
    %2327 = vmatprep.subr.mxu0 0.0
    %2328 = vmatpush1.xpose.msra.mxu0 0.0
    %2329 = vmatprep.subr.mxu0 0.0
    %2330 = vmatpush1.xpose.msra.mxu0 0.0
    %2331 = vmatprep.subr.mxu0 0.0
    %2332 = vmatpush1.xpose.msra.mxu0 %v2299
    %2333 = vmatprep.subr.mxu0 0.0
    %2334 = vmatpush2.xpose.msra.mxu0 0.0
    %2335 = vmatprep.subr.mxu0 0.0
    %2336 = vmatpush2.xpose.msra.mxu0 0.0
    %2337 = vmatprep.subr.mxu0 0.0
    %2338 = vmatpush2.xpose.msra.mxu0 0.0
    %2339 = vmatprep.subr.mxu0 0.0
    %2340 = vmatpush2.xpose.msra.mxu0 0.0
    %2341 = vmatprep.subr.mxu0 0.0
    %2342 = vmatpush2.xpose.msra.mxu0 0.0
    %2343 = vmatprep.subr.mxu0 0.0
    %2344 = vmatpush2.xpose.msra.mxu0 0.0
    %2345 = vmatprep.subr.mxu0 0.0
    %2346 = vmatpush2.xpose.msra.mxu0 0.0
    %2347 = vmatprep.subr.mxu0 0.0
    %2348 = vmatpush2.xpose.msra.mxu0 0.0
    %2349 = vmatprep.subr.mxu0 0.0
    %2350 = vmatpush2.xpose.msra.mxu0 0.0
    %2351 = vmatprep.subr.mxu0 0.0
    %2352 = vmatpush2.xpose.msra.mxu0 0.0
    %2353 = vmatprep.subr.mxu0 0.0
    %2354 = vmatpush2.xpose.msra.mxu0 0.0
    %2355 = vmatprep.subr.mxu0 0.0
    %2356 = vmatpush2.xpose.msra.mxu0 0.0
    %2357 = vmatprep.subr.mxu0 0.0
    %2358 = vmatpush2.xpose.msra.mxu0 0.0
    %2359 = vmatprep.subr.mxu0 0.0
    %2360 = vmatpush2.xpose.msra.mxu0 0.0
    %2361 = vmatprep.subr.mxu0 0.0
    %2362 = vmatpush2.xpose.msra.mxu0 0.0
    %2363 = vmatprep.subr.mxu0 0.0
    %2364 = vmatpush2.xpose.msra.mxu0 0.0
    %2365 = vmatprep.mubr.f32.mxu0 0.0
    %2366 = vmatmul.mubr.f32.gmra.mxu0 %v2297
    %v2367 = vpop.f32.mrf.mxu0
    %v2368 = vadd.f32 0.0, %v2367
    %v2369 = vpop.f32.mrf.mxu0
    %2370 = vdwg.mxu0
    %v2371 = vmul.f32 %v2368, 0.35355338
    %v2372 = vadd.f32 %v2371, %v2292
    %v2373 = vsel %vm2296, %v2372, -inf
    %2374 = vmax.xlane.f32.xlu0 %v2373
    %v2375 = vpop.xlane.xlu0 %2374
    %v2376 = vsub.f32 %v2372, %v2375
    %v2377 = vmul.f32 %v2376, 1.442695
    %v2378 = vpow.pop %v2377
    %v2379 = vsel %vm2296, %v2378, 0.0
    %2380 = vadd.xlane.f32.xlu0 %v2379
    %v2381 = vpop.xlane.xlu0 %2380
    %v2382 = vrcp.pop %v2381
    %v2383 = vmul.f32 %v2378, %v2382
    %2384 = vrot.lane.b32.xlu0 %v2289, 64
    %v2385 = vpop.permute.xlu0 %2384
    %v2388 = vsel %vm2296, %v2383, 0
    %2390 = vmatprep.subr.mxu0 0.0
    %2391 = vmatpush1.msra.mxu0 0.0
    %2392 = vmatprep.subr.mxu0 0.0
    %2393 = vmatpush1.msra.mxu0 0.0
    %2394 = vmatprep.subr.mxu0 0.0
    %2395 = vmatpush1.msra.mxu0 0.0
    %2396 = vmatprep.subr.mxu0 0.0
    %2397 = vmatpush1.msra.mxu0 0.0
    %2398 = vmatprep.subr.mxu0 0.0
    %2399 = vmatpush1.msra.mxu0 0.0
    %2400 = vmatprep.subr.mxu0 0.0
    %2401 = vmatpush1.msra.mxu0 0.0
    %2402 = vmatprep.subr.mxu0 0.0
    %2403 = vmatpush1.msra.mxu0 0.0
    %2404 = vmatprep.subr.mxu0 0.0
    %2405 = vmatpush1.msra.mxu0 0.0
    %2406 = vmatprep.subr.mxu0 0.0
    %2407 = vmatpush1.msra.mxu0 0.0
    %2408 = vmatprep.subr.mxu0 0.0
    %2409 = vmatpush1.msra.mxu0 0.0
    %2410 = vmatprep.subr.mxu0 0.0
    %2411 = vmatpush1.msra.mxu0 0.0
    %2412 = vmatprep.subr.mxu0 0.0
    %2413 = vmatpush1.msra.mxu0 0.0
    %2414 = vmatprep.subr.mxu0 0.0
    %2415 = vmatpush1.msra.mxu0 0.0
    %2416 = vmatprep.subr.mxu0 0.0
    %2417 = vmatpush1.msra.mxu0 0.0
    %2418 = vmatprep.subr.mxu0 0.0
    %2419 = vmatpush1.msra.mxu0 0.0
    %2420 = vmatprep.subr.mxu0 0.0
    %2421 = vmatpush1.msra.mxu0 %v2385
    %2422 = vmatprep.subr.mxu0 0.0
    %2423 = vmatpush2.msra.mxu0 0.0
    %2424 = vmatprep.subr.mxu0 0.0
    %2425 = vmatpush2.msra.mxu0 0.0
    %2426 = vmatprep.subr.mxu0 0.0
    %2427 = vmatpush2.msra.mxu0 0.0
    %2428 = vmatprep.subr.mxu0 0.0
    %2429 = vmatpush2.msra.mxu0 0.0
    %2430 = vmatprep.subr.mxu0 0.0
    %2431 = vmatpush2.msra.mxu0 0.0
    %2432 = vmatprep.subr.mxu0 0.0
    %2433 = vmatpush2.msra.mxu0 0.0
    %2434 = vmatprep.subr.mxu0 0.0
    %2435 = vmatpush2.msra.mxu0 0.0
    %2436 = vmatprep.subr.mxu0 0.0
    %2437 = vmatpush2.msra.mxu0 0.0
    %2438 = vmatprep.subr.mxu0 0.0
    %2439 = vmatpush2.msra.mxu0 0.0
    %2440 = vmatprep.subr.mxu0 0.0
    %2441 = vmatpush2.msra.mxu0 0.0
    %2442 = vmatprep.subr.mxu0 0.0
    %2443 = vmatpush2.msra.mxu0 0.0
    %2444 = vmatprep.subr.mxu0 0.0
    %2445 = vmatpush2.msra.mxu0 0.0
    %2446 = vmatprep.subr.mxu0 0.0
    %2447 = vmatpush2.msra.mxu0 0.0
    %2448 = vmatprep.subr.mxu0 0.0
    %2449 = vmatpush2.msra.mxu0 0.0
    %2450 = vmatprep.subr.mxu0 0.0
    %2451 = vmatpush2.msra.mxu0 0.0
    %2452 = vmatprep.subr.mxu0 0.0
    %2453 = vmatpush2.msra.mxu0 0.0
    %2454 = vmatprep.mubr.f32.mxu0 0.0
    %2455 = vmatmul.mubr.f32.gmra.mxu0 %v2388
    %v2456 = vpop.f32.mrf.mxu0
    %v2457 = vadd.f32 0.0, %v2456
    %v2458 = vpop.f32.mrf.mxu0
    %2459 = vdwg.mxu0
    %2460 = vrot.lane.b32.xlu0 %v2289, 120
    %v2461 = vpop.permute.xlu0 %2460
    %2462 = vrot.lane.b32.xlu0 %v2289, 88
    %v2463 = vpop.permute.xlu0 %2462
    %v2464 = vsel %vm2296, %v2461, 0
    %v2466 = vsel %vm2296, %v2463, 0
    %2468 = vmatprep.subr.mxu0 0.0
    %2469 = vmatpush1.xpose.msra.mxu0 0.0
    %2470 = vmatprep.subr.mxu0 0.0
    %2471 = vmatpush1.xpose.msra.mxu0 0.0
    %2472 = vmatprep.subr.mxu0 0.0
    %2473 = vmatpush1.xpose.msra.mxu0 0.0
    %2474 = vmatprep.subr.mxu0 0.0
    %2475 = vmatpush1.xpose.msra.mxu0 0.0
    %2476 = vmatprep.subr.mxu0 0.0
    %2477 = vmatpush1.xpose.msra.mxu0 0.0
    %2478 = vmatprep.subr.mxu0 0.0
    %2479 = vmatpush1.xpose.msra.mxu0 0.0
    %2480 = vmatprep.subr.mxu0 0.0
    %2481 = vmatpush1.xpose.msra.mxu0 0.0
    %2482 = vmatprep.subr.mxu0 0.0
    %2483 = vmatpush1.xpose.msra.mxu0 0.0
    %2484 = vmatprep.subr.mxu0 0.0
    %2485 = vmatpush1.xpose.msra.mxu0 0.0
    %2486 = vmatprep.subr.mxu0 0.0
    %2487 = vmatpush1.xpose.msra.mxu0 0.0
    %2488 = vmatprep.subr.mxu0 0.0
    %2489 = vmatpush1.xpose.msra.mxu0 0.0
    %2490 = vmatprep.subr.mxu0 0.0
    %2491 = vmatpush1.xpose.msra.mxu0 0.0
    %2492 = vmatprep.subr.mxu0 0.0
    %2493 = vmatpush1.xpose.msra.mxu0 0.0
    %2494 = vmatprep.subr.mxu0 0.0
    %2495 = vmatpush1.xpose.msra.mxu0 0.0
    %2496 = vmatprep.subr.mxu0 0.0
    %2497 = vmatpush1.xpose.msra.mxu0 0.0
    %2498 = vmatprep.subr.mxu0 0.0
    %2499 = vmatpush1.xpose.msra.mxu0 %v2466
    %2500 = vmatprep.subr.mxu0 0.0
    %2501 = vmatpush2.xpose.msra.mxu0 0.0
    %2502 = vmatprep.subr.mxu0 0.0
    %2503 = vmatpush2.xpose.msra.mxu0 0.0
    %2504 = vmatprep.subr.mxu0 0.0
    %2505 = vmatpush2.xpose.msra.mxu0 0.0
    %2506 = vmatprep.subr.mxu0 0.0
    %2507 = vmatpush2.xpose.msra.mxu0 0.0
    %2508 = vmatprep.subr.mxu0 0.0
    %2509 = vmatpush2.xpose.msra.mxu0 0.0
    %2510 = vmatprep.subr.mxu0 0.0
    %2511 = vmatpush2.xpose.msra.mxu0 0.0
    %2512 = vmatprep.subr.mxu0 0.0
    %2513 = vmatpush2.xpose.msra.mxu0 0.0
    %2514 = vmatprep.subr.mxu0 0.0
    %2515 = vmatpush2.xpose.msra.mxu0 0.0
    %2516 = vmatprep.subr.mxu0 0.0
    %2517 = vmatpush2.xpose.msra.mxu0 0.0
    %2518 = vmatprep.subr.mxu0 0.0
    %2519 = vmatpush2.xpose.msra.mxu0 0.0
    %2520 = vmatprep.subr.mxu0 0.0
    %2521 = vmatpush2.xpose.msra.mxu0 0.0
    %2522 = vmatprep.subr.mxu0 0.0
    %2523 = vmatpush2.xpose.msra.mxu0 0.0
    %2524 = vmatprep.subr.mxu0 0.0
    %2525 = vmatpush2.xpose.msra.mxu0 0.0
    %2526 = vmatprep.subr.mxu0 0.0
    %2527 = vmatpush2.xpose.msra.mxu0 0.0
    %2528 = vmatprep.subr.mxu0 0.0
    %2529 = vmatpush2.xpose.msra.mxu0 0.0
    %2530 = vmatprep.subr.mxu0 0.0
    %2531 = vmatpush2.xpose.msra.mxu0 0.0
    %2532 = vmatprep.mubr.f32.mxu0 0.0
    %2533 = vmatmul.mubr.f32.gmra.mxu0 %v2464
    %v2534 = vpop.f32.mrf.mxu0
    %v2535 = vadd.f32 0.0, %v2534
    %v2536 = vpop.f32.mrf.mxu0
    %2537 = vdwg.mxu0
    %v2538 = vmul.f32 %v2535, 0.35355338
    %v2539 = vadd.f32 %v2538, %v2292
    %v2540 = vsel %vm2296, %v2539, -inf
    %2541 = vmax.xlane.f32.xlu0 %v2540
    %v2542 = vpop.xlane.xlu0 %2541
    %v2543 = vsub.f32 %v2539, %v2542
    %v2544 = vmul.f32 %v2543, 1.442695
    %v2545 = vpow.pop %v2544
    %v2546 = vsel %vm2296, %v2545, 0.0
    %2547 = vadd.xlane.f32.xlu0 %v2546
    %v2548 = vpop.xlane.xlu0 %2547
    %v2549 = vrcp.pop %v2548
    %v2550 = vmul.f32 %v2545, %v2549
    %2551 = vrot.lane.b32.xlu0 %v2289, 56
    %v2552 = vpop.permute.xlu0 %2551
    %v2555 = vsel %vm2296, %v2550, 0
    %2557 = vmatprep.subr.mxu0 0.0
    %2558 = vmatpush1.msra.mxu0 0.0
    %2559 = vmatprep.subr.mxu0 0.0
    %2560 = vmatpush1.msra.mxu0 0.0
    %2561 = vmatprep.subr.mxu0 0.0
    %2562 = vmatpush1.msra.mxu0 0.0
    %2563 = vmatprep.subr.mxu0 0.0
    %2564 = vmatpush1.msra.mxu0 0.0
    %2565 = vmatprep.subr.mxu0 0.0
    %2566 = vmatpush1.msra.mxu0 0.0
    %2567 = vmatprep.subr.mxu0 0.0
    %2568 = vmatpush1.msra.mxu0 0.0
    %2569 = vmatprep.subr.mxu0 0.0
    %2570 = vmatpush1.msra.mxu0 0.0
    %2571 = vmatprep.subr.mxu0 0.0
    %2572 = vmatpush1.msra.mxu0 0.0
    %2573 = vmatprep.subr.mxu0 0.0
    %2574 = vmatpush1.msra.mxu0 0.0
    %2575 = vmatprep.subr.mxu0 0.0
    %2576 = vmatpush1.msra.mxu0 0.0
    %2577 = vmatprep.subr.mxu0 0.0
    %2578 = vmatpush1.msra.mxu0 0.0
    %2579 = vmatprep.subr.mxu0 0.0
    %2580 = vmatpush1.msra.mxu0 0.0
    %2581 = vmatprep.subr.mxu0 0.0
    %2582 = vmatpush1.msra.mxu0 0.0
    %2583 = vmatprep.subr.mxu0 0.0
    %2584 = vmatpush1.msra.mxu0 0.0
    %2585 = vmatprep.subr.mxu0 0.0
    %2586 = vmatpush1.msra.mxu0 0.0
    %2587 = vmatprep.subr.mxu0 0.0
    %2588 = vmatpush1.msra.mxu0 %v2552
    %2589 = vmatprep.subr.mxu0 0.0
    %2590 = vmatpush2.msra.mxu0 0.0
    %2591 = vmatprep.subr.mxu0 0.0
    %2592 = vmatpush2.msra.mxu0 0.0
    %2593 = vmatprep.subr.mxu0 0.0
    %2594 = vmatpush2.msra.mxu0 0.0
    %2595 = vmatprep.subr.mxu0 0.0
    %2596 = vmatpush2.msra.mxu0 0.0
    %2597 = vmatprep.subr.mxu0 0.0
    %2598 = vmatpush2.msra.mxu0 0.0
    %2599 = vmatprep.subr.mxu0 0.0
    %2600 = vmatpush2.msra.mxu0 0.0
    %2601 = vmatprep.subr.mxu0 0.0
    %2602 = vmatpush2.msra.mxu0 0.0
    %2603 = vmatprep.subr.mxu0 0.0
    %2604 = vmatpush2.msra.mxu0 0.0
    %2605 = vmatprep.subr.mxu0 0.0
    %2606 = vmatpush2.msra.mxu0 0.0
    %2607 = vmatprep.subr.mxu0 0.0
    %2608 = vmatpush2.msra.mxu0 0.0
    %2609 = vmatprep.subr.mxu0 0.0
    %2610 = vmatpush2.msra.mxu0 0.0
    %2611 = vmatprep.subr.mxu0 0.0
    %2612 = vmatpush2.msra.mxu0 0.0
    %2613 = vmatprep.subr.mxu0 0.0
    %2614 = vmatpush2.msra.mxu0 0.0
    %2615 = vmatprep.subr.mxu0 0.0
    %2616 = vmatpush2.msra.mxu0 0.0
    %2617 = vmatprep.subr.mxu0 0.0
    %2618 = vmatpush2.msra.mxu0 0.0
    %2619 = vmatprep.subr.mxu0 0.0
    %2620 = vmatpush2.msra.mxu0 0.0
    %2621 = vmatprep.mubr.f32.mxu0 0.0
    %2622 = vmatmul.mubr.f32.gmra.mxu0 %v2555
    %v2623 = vpop.f32.mrf.mxu0
    %v2624 = vadd.f32 0.0, %v2623
    %v2625 = vpop.f32.mrf.mxu0
    %2626 = vdwg.mxu0
    %2627 = vrot.lane.b32.xlu0 %v2289, 112
    %v2628 = vpop.permute.xlu0 %2627
    %2629 = vrot.lane.b32.xlu0 %v2289, 80
    %v2630 = vpop.permute.xlu0 %2629
    %v2631 = vsel %vm2296, %v2628, 0
    %v2633 = vsel %vm2296, %v2630, 0
    %2635 = vmatprep.subr.mxu0 0.0
    %2636 = vmatpush1.xpose.msra.mxu0 0.0
    %2637 = vmatprep.subr.mxu0 0.0
    %2638 = vmatpush1.xpose.msra.mxu0 0.0
    %2639 = vmatprep.subr.mxu0 0.0
    %2640 = vmatpush1.xpose.msra.mxu0 0.0
    %2641 = vmatprep.subr.mxu0 0.0
    %2642 = vmatpush1.xpose.msra.mxu0 0.0
    %2643 = vmatprep.subr.mxu0 0.0
    %2644 = vmatpush1.xpose.msra.mxu0 0.0
    %2645 = vmatprep.subr.mxu0 0.0
    %2646 = vmatpush1.xpose.msra.mxu0 0.0
    %2647 = vmatprep.subr.mxu0 0.0
    %2648 = vmatpush1.xpose.msra.mxu0 0.0
    %2649 = vmatprep.subr.mxu0 0.0
    %2650 = vmatpush1.xpose.msra.mxu0 0.0
    %2651 = vmatprep.subr.mxu0 0.0
    %2652 = vmatpush1.xpose.msra.mxu0 0.0
    %2653 = vmatprep.subr.mxu0 0.0
    %2654 = vmatpush1.xpose.msra.mxu0 0.0
    %2655 = vmatprep.subr.mxu0 0.0
    %2656 = vmatpush1.xpose.msra.mxu0 0.0
    %2657 = vmatprep.subr.mxu0 0.0
    %2658 = vmatpush1.xpose.msra.mxu0 0.0
    %2659 = vmatprep.subr.mxu0 0.0
    %2660 = vmatpush1.xpose.msra.mxu0 0.0
    %2661 = vmatprep.subr.mxu0 0.0
    %2662 = vmatpush1.xpose.msra.mxu0 0.0
    %2663 = vmatprep.subr.mxu0 0.0
    %2664 = vmatpush1.xpose.msra.mxu0 0.0
    %2665 = vmatprep.subr.mxu0 0.0
    %2666 = vmatpush1.xpose.msra.mxu0 %v2633
    %2667 = vmatprep.subr.mxu0 0.0
    %2668 = vmatpush2.xpose.msra.mxu0 0.0
    %2669 = vmatprep.subr.mxu0 0.0
    %2670 = vmatpush2.xpose.msra.mxu0 0.0
    %2671 = vmatprep.subr.mxu0 0.0
    %2672 = vmatpush2.xpose.msra.mxu0 0.0
    %2673 = vmatprep.subr.mxu0 0.0
    %2674 = vmatpush2.xpose.msra.mxu0 0.0
    %2675 = vmatprep.subr.mxu0 0.0
    %2676 = vmatpush2.xpose.msra.mxu0 0.0
    %2677 = vmatprep.subr.mxu0 0.0
    %2678 = vmatpush2.xpose.msra.mxu0 0.0
    %2679 = vmatprep.subr.mxu0 0.0
    %2680 = vmatpush2.xpose.msra.mxu0 0.0
    %2681 = vmatprep.subr.mxu0 0.0
    %2682 = vmatpush2.xpose.msra.mxu0 0.0
    %2683 = vmatprep.subr.mxu0 0.0
    %2684 = vmatpush2.xpose.msra.mxu0 0.0
    %2685 = vmatprep.subr.mxu0 0.0
    %2686 = vmatpush2.xpose.msra.mxu0 0.0
    %2687 = vmatprep.subr.mxu0 0.0
    %2688 = vmatpush2.xpose.msra.mxu0 0.0
    %2689 = vmatprep.subr.mxu0 0.0
    %2690 = vmatpush2.xpose.msra.mxu0 0.0
    %2691 = vmatprep.subr.mxu0 0.0
    %2692 = vmatpush2.xpose.msra.mxu0 0.0
    %2693 = vmatprep.subr.mxu0 0.0
    %2694 = vmatpush2.xpose.msra.mxu0 0.0
    %2695 = vmatprep.subr.mxu0 0.0
    %2696 = vmatpush2.xpose.msra.mxu0 0.0
    %2697 = vmatprep.subr.mxu0 0.0
    %2698 = vmatpush2.xpose.msra.mxu0 0.0
    %2699 = vmatprep.mubr.f32.mxu0 0.0
    %2700 = vmatmul.mubr.f32.gmra.mxu0 %v2631
    %v2701 = vpop.f32.mrf.mxu0
    %v2702 = vadd.f32 0.0, %v2701
    %v2703 = vpop.f32.mrf.mxu0
    %2704 = vdwg.mxu0
    %v2705 = vmul.f32 %v2702, 0.35355338
    %v2706 = vadd.f32 %v2705, %v2292
    %v2707 = vsel %vm2296, %v2706, -inf
    %2708 = vmax.xlane.f32.xlu0 %v2707
    %v2709 = vpop.xlane.xlu0 %2708
    %v2710 = vsub.f32 %v2706, %v2709
    %v2711 = vmul.f32 %v2710, 1.442695
    %v2712 = vpow.pop %v2711
    %v2713 = vsel %vm2296, %v2712, 0.0
    %2714 = vadd.xlane.f32.xlu0 %v2713
    %v2715 = vpop.xlane.xlu0 %2714
    %v2716 = vrcp.pop %v2715
    %v2717 = vmul.f32 %v2712, %v2716
    %2718 = vrot.lane.b32.xlu0 %v2289, 48
    %v2719 = vpop.permute.xlu0 %2718
    %v2722 = vsel %vm2296, %v2717, 0
    %2724 = vmatprep.subr.mxu0 0.0
    %2725 = vmatpush1.msra.mxu0 0.0
    %2726 = vmatprep.subr.mxu0 0.0
    %2727 = vmatpush1.msra.mxu0 0.0
    %2728 = vmatprep.subr.mxu0 0.0
    %2729 = vmatpush1.msra.mxu0 0.0
    %2730 = vmatprep.subr.mxu0 0.0
    %2731 = vmatpush1.msra.mxu0 0.0
    %2732 = vmatprep.subr.mxu0 0.0
    %2733 = vmatpush1.msra.mxu0 0.0
    %2734 = vmatprep.subr.mxu0 0.0
    %2735 = vmatpush1.msra.mxu0 0.0
    %2736 = vmatprep.subr.mxu0 0.0
    %2737 = vmatpush1.msra.mxu0 0.0
    %2738 = vmatprep.subr.mxu0 0.0
    %2739 = vmatpush1.msra.mxu0 0.0
    %2740 = vmatprep.subr.mxu0 0.0
    %2741 = vmatpush1.msra.mxu0 0.0
    %2742 = vmatprep.subr.mxu0 0.0
    %2743 = vmatpush1.msra.mxu0 0.0
    %2744 = vmatprep.subr.mxu0 0.0
    %2745 = vmatpush1.msra.mxu0 0.0
    %2746 = vmatprep.subr.mxu0 0.0
    %2747 = vmatpush1.msra.mxu0 0.0
    %2748 = vmatprep.subr.mxu0 0.0
    %2749 = vmatpush1.msra.mxu0 0.0
    %2750 = vmatprep.subr.mxu0 0.0
    %2751 = vmatpush1.msra.mxu0 0.0
    %2752 = vmatprep.subr.mxu0 0.0
    %2753 = vmatpush1.msra.mxu0 0.0
    %2754 = vmatprep.subr.mxu0 0.0
    %2755 = vmatpush1.msra.mxu0 %v2719
    %2756 = vmatprep.subr.mxu0 0.0
    %2757 = vmatpush2.msra.mxu0 0.0
    %2758 = vmatprep.subr.mxu0 0.0
    %2759 = vmatpush2.msra.mxu0 0.0
    %2760 = vmatprep.subr.mxu0 0.0
    %2761 = vmatpush2.msra.mxu0 0.0
    %2762 = vmatprep.subr.mxu0 0.0
    %2763 = vmatpush2.msra.mxu0 0.0
    %2764 = vmatprep.subr.mxu0 0.0
    %2765 = vmatpush2.msra.mxu0 0.0
    %2766 = vmatprep.subr.mxu0 0.0
    %2767 = vmatpush2.msra.mxu0 0.0
    %2768 = vmatprep.subr.mxu0 0.0
    %2769 = vmatpush2.msra.mxu0 0.0
    %2770 = vmatprep.subr.mxu0 0.0
    %2771 = vmatpush2.msra.mxu0 0.0
    %2772 = vmatprep.subr.mxu0 0.0
    %2773 = vmatpush2.msra.mxu0 0.0
    %2774 = vmatprep.subr.mxu0 0.0
    %2775 = vmatpush2.msra.mxu0 0.0
    %2776 = vmatprep.subr.mxu0 0.0
    %2777 = vmatpush2.msra.mxu0 0.0
    %2778 = vmatprep.subr.mxu0 0.0
    %2779 = vmatpush2.msra.mxu0 0.0
    %2780 = vmatprep.subr.mxu0 0.0
    %2781 = vmatpush2.msra.mxu0 0.0
    %2782 = vmatprep.subr.mxu0 0.0
    %2783 = vmatpush2.msra.mxu0 0.0
    %2784 = vmatprep.subr.mxu0 0.0
    %2785 = vmatpush2.msra.mxu0 0.0
    %2786 = vmatprep.subr.mxu0 0.0
    %2787 = vmatpush2.msra.mxu0 0.0
    %2788 = vmatprep.mubr.f32.mxu0 0.0
    %2789 = vmatmul.mubr.f32.gmra.mxu0 %v2722
    %v2790 = vpop.f32.mrf.mxu0
    %v2791 = vadd.f32 0.0, %v2790
    %v2792 = vpop.f32.mrf.mxu0
    %2793 = vdwg.mxu0
    %2794 = vrot.lane.b32.xlu0 %v2289, 104
    %v2795 = vpop.permute.xlu0 %2794
    %2796 = vrot.lane.b32.xlu0 %v2289, 72
    %v2797 = vpop.permute.xlu0 %2796
    %v2798 = vsel %vm2296, %v2795, 0
    %v2800 = vsel %vm2296, %v2797, 0
    %2802 = vmatprep.subr.mxu0 0.0
    %2803 = vmatpush1.xpose.msra.mxu0 0.0
    %2804 = vmatprep.subr.mxu0 0.0
    %2805 = vmatpush1.xpose.msra.mxu0 0.0
    %2806 = vmatprep.subr.mxu0 0.0
    %2807 = vmatpush1.xpose.msra.mxu0 0.0
    %2808 = vmatprep.subr.mxu0 0.0
    %2809 = vmatpush1.xpose.msra.mxu0 0.0
    %2810 = vmatprep.subr.mxu0 0.0
    %2811 = vmatpush1.xpose.msra.mxu0 0.0
    %2812 = vmatprep.subr.mxu0 0.0
    %2813 = vmatpush1.xpose.msra.mxu0 0.0
    %2814 = vmatprep.subr.mxu0 0.0
    %2815 = vmatpush1.xpose.msra.mxu0 0.0
    %2816 = vmatprep.subr.mxu0 0.0
    %2817 = vmatpush1.xpose.msra.mxu0 0.0
    %2818 = vmatprep.subr.mxu0 0.0
    %2819 = vmatpush1.xpose.msra.mxu0 0.0
    %2820 = vmatprep.subr.mxu0 0.0
    %2821 = vmatpush1.xpose.msra.mxu0 0.0
    %2822 = vmatprep.subr.mxu0 0.0
    %2823 = vmatpush1.xpose.msra.mxu0 0.0
    %2824 = vmatprep.subr.mxu0 0.0
    %2825 = vmatpush1.xpose.msra.mxu0 0.0
    %2826 = vmatprep.subr.mxu0 0.0
    %2827 = vmatpush1.xpose.msra.mxu0 0.0
    %2828 = vmatprep.subr.mxu0 0.0
    %2829 = vmatpush1.xpose.msra.mxu0 0.0
    %2830 = vmatprep.subr.mxu0 0.0
    %2831 = vmatpush1.xpose.msra.mxu0 0.0
    %2832 = vmatprep.subr.mxu0 0.0
    %2833 = vmatpush1.xpose.msra.mxu0 %v2800
    %2834 = vmatprep.subr.mxu0 0.0
    %2835 = vmatpush2.xpose.msra.mxu0 0.0
    %2836 = vmatprep.subr.mxu0 0.0
    %2837 = vmatpush2.xpose.msra.mxu0 0.0
    %2838 = vmatprep.subr.mxu0 0.0
    %2839 = vmatpush2.xpose.msra.mxu0 0.0
    %2840 = vmatprep.subr.mxu0 0.0
    %2841 = vmatpush2.xpose.msra.mxu0 0.0
    %2842 = vmatprep.subr.mxu0 0.0
    %2843 = vmatpush2.xpose.msra.mxu0 0.0
    %2844 = vmatprep.subr.mxu0 0.0
    %2845 = vmatpush2.xpose.msra.mxu0 0.0
    %2846 = vmatprep.subr.mxu0 0.0
    %2847 = vmatpush2.xpose.msra.mxu0 0.0
    %2848 = vmatprep.subr.mxu0 0.0
    %2849 = vmatpush2.xpose.msra.mxu0 0.0
    %2850 = vmatprep.subr.mxu0 0.0
    %2851 = vmatpush2.xpose.msra.mxu0 0.0
    %2852 = vmatprep.subr.mxu0 0.0
    %2853 = vmatpush2.xpose.msra.mxu0 0.0
    %2854 = vmatprep.subr.mxu0 0.0
    %2855 = vmatpush2.xpose.msra.mxu0 0.0
    %2856 = vmatprep.subr.mxu0 0.0
    %2857 = vmatpush2.xpose.msra.mxu0 0.0
    %2858 = vmatprep.subr.mxu0 0.0
    %2859 = vmatpush2.xpose.msra.mxu0 0.0
    %2860 = vmatprep.subr.mxu0 0.0
    %2861 = vmatpush2.xpose.msra.mxu0 0.0
    %2862 = vmatprep.subr.mxu0 0.0
    %2863 = vmatpush2.xpose.msra.mxu0 0.0
    %2864 = vmatprep.subr.mxu0 0.0
    %2865 = vmatpush2.xpose.msra.mxu0 0.0
    %2866 = vmatprep.mubr.f32.mxu0 0.0
    %2867 = vmatmul.mubr.f32.gmra.mxu0 %v2798
    %v2868 = vpop.f32.mrf.mxu0
    %v2869 = vadd.f32 0.0, %v2868
    %v2870 = vpop.f32.mrf.mxu0
    %2871 = vdwg.mxu0
    %v2872 = vmul.f32 %v2869, 0.35355338
    %v2873 = vadd.f32 %v2872, %v2292
    %v2874 = vsel %vm2296, %v2873, -inf
    %2875 = vmax.xlane.f32.xlu0 %v2874
    %v2876 = vpop.xlane.xlu0 %2875
    %v2877 = vsub.f32 %v2873, %v2876
    %v2878 = vmul.f32 %v2877, 1.442695
    %v2879 = vpow.pop %v2878
    %v2880 = vsel %vm2296, %v2879, 0.0
    %2881 = vadd.xlane.f32.xlu0 %v2880
    %v2882 = vpop.xlane.xlu0 %2881
    %v2883 = vrcp.pop %v2882
    %v2884 = vmul.f32 %v2879, %v2883
    %2885 = vrot.lane.b32.xlu0 %v2289, 40
    %v2886 = vpop.permute.xlu0 %2885
    %v2889 = vsel %vm2296, %v2884, 0
    %2891 = vmatprep.subr.mxu0 0.0
    %2892 = vmatpush1.msra.mxu0 0.0
    %2893 = vmatprep.subr.mxu0 0.0
    %2894 = vmatpush1.msra.mxu0 0.0
    %2895 = vmatprep.subr.mxu0 0.0
    %2896 = vmatpush1.msra.mxu0 0.0
    %2897 = vmatprep.subr.mxu0 0.0
    %2898 = vmatpush1.msra.mxu0 0.0
    %2899 = vmatprep.subr.mxu0 0.0
    %2900 = vmatpush1.msra.mxu0 0.0
    %2901 = vmatprep.subr.mxu0 0.0
    %2902 = vmatpush1.msra.mxu0 0.0
    %2903 = vmatprep.subr.mxu0 0.0
    %2904 = vmatpush1.msra.mxu0 0.0
    %2905 = vmatprep.subr.mxu0 0.0
    %2906 = vmatpush1.msra.mxu0 0.0
    %2907 = vmatprep.subr.mxu0 0.0
    %2908 = vmatpush1.msra.mxu0 0.0
    %2909 = vmatprep.subr.mxu0 0.0
    %2910 = vmatpush1.msra.mxu0 0.0
    %2911 = vmatprep.subr.mxu0 0.0
    %2912 = vmatpush1.msra.mxu0 0.0
    %2913 = vmatprep.subr.mxu0 0.0
    %2914 = vmatpush1.msra.mxu0 0.0
    %2915 = vmatprep.subr.mxu0 0.0
    %2916 = vmatpush1.msra.mxu0 0.0
    %2917 = vmatprep.subr.mxu0 0.0
    %2918 = vmatpush1.msra.mxu0 0.0
    %2919 = vmatprep.subr.mxu0 0.0
    %2920 = vmatpush1.msra.mxu0 0.0
    %2921 = vmatprep.subr.mxu0 0.0
    %2922 = vmatpush1.msra.mxu0 %v2886
    %2923 = vmatprep.subr.mxu0 0.0
    %2924 = vmatpush2.msra.mxu0 0.0
    %2925 = vmatprep.subr.mxu0 0.0
    %2926 = vmatpush2.msra.mxu0 0.0
    %2927 = vmatprep.subr.mxu0 0.0
    %2928 = vmatpush2.msra.mxu0 0.0
    %2929 = vmatprep.subr.mxu0 0.0
    %2930 = vmatpush2.msra.mxu0 0.0
    %2931 = vmatprep.subr.mxu0 0.0
    %2932 = vmatpush2.msra.mxu0 0.0
    %2933 = vmatprep.subr.mxu0 0.0
    %2934 = vmatpush2.msra.mxu0 0.0
    %2935 = vmatprep.subr.mxu0 0.0
    %2936 = vmatpush2.msra.mxu0 0.0
    %2937 = vmatprep.subr.mxu0 0.0
    %2938 = vmatpush2.msra.mxu0 0.0
    %2939 = vmatprep.subr.mxu0 0.0
    %2940 = vmatpush2.msra.mxu0 0.0
    %2941 = vmatprep.subr.mxu0 0.0
    %2942 = vmatpush2.msra.mxu0 0.0
    %2943 = vmatprep.subr.mxu0 0.0
    %2944 = vmatpush2.msra.mxu0 0.0
    %2945 = vmatprep.subr.mxu0 0.0
    %2946 = vmatpush2.msra.mxu0 0.0
    %2947 = vmatprep.subr.mxu0 0.0
    %2948 = vmatpush2.msra.mxu0 0.0
    %2949 = vmatprep.subr.mxu0 0.0
    %2950 = vmatpush2.msra.mxu0 0.0
    %2951 = vmatprep.subr.mxu0 0.0
    %2952 = vmatpush2.msra.mxu0 0.0
    %2953 = vmatprep.subr.mxu0 0.0
    %2954 = vmatpush2.msra.mxu0 0.0
    %2955 = vmatprep.mubr.f32.mxu0 0.0
    %2956 = vmatmul.mubr.f32.gmra.mxu0 %v2889
    %v2957 = vpop.f32.mrf.mxu0
    %v2958 = vadd.f32 0.0, %v2957
    %v2959 = vpop.f32.mrf.mxu0
    %2960 = vdwg.mxu0
    %2962 = vrot.lane.b32.xlu0 %v2624, 8
    %v2963 = vpop.permute.xlu0 %2962
    %2966 = vrot.lane.b32.xlu0 %v2791, 16
    %v2967 = vpop.permute.xlu0 %2966
    %2970 = vrot.lane.b32.xlu0 %v2958, 24
    %v2971 = vpop.permute.xlu0 %2970
    %v2973 = vsel %vm2296, %v2457, %v2963
    %v2974 = vsel %vm1890, %v2973, %v2967
    %vm2975 = vcmask 195584
    %v2976 = vsel %vm2975, %v2974, %v2971
    %v2977 = vld [vmem:[%s5] sm:$0xf]
    %2979 = vrot.lane.b32.xlu0 %v2977, 112
    %v2980 = vpop.permute.xlu0 %2979
    %v2981 = vsel %vm2296, %v2980, 0
    %2983 = vmatprep.subr.mxu0 0.0
    %2984 = vmatpush1.msra.mxu0 0.0
    %2985 = vmatprep.subr.mxu0 0.0
    %2986 = vmatpush1.msra.mxu0 0.0
    %2987 = vmatprep.subr.mxu0 0.0
    %2988 = vmatpush1.msra.mxu0 0.0
    %2989 = vmatprep.subr.mxu0 0.0
    %2990 = vmatpush1.msra.mxu0 0.0
    %2991 = vmatprep.subr.mxu0 0.0
    %2992 = vmatpush1.msra.mxu0 0.0
    %2993 = vmatprep.subr.mxu0 0.0
    %2994 = vmatpush1.msra.mxu0 0.0
    %2995 = vmatprep.subr.mxu0 0.0
    %2996 = vmatpush1.msra.mxu0 0.0
    %2997 = vmatprep.subr.mxu0 0.0
    %2998 = vmatpush1.msra.mxu0 0.0
    %2999 = vmatprep.subr.mxu0 0.0
    %3000 = vmatpush1.msra.mxu0 0.0
    %3001 = vmatprep.subr.mxu0 0.0
    %3002 = vmatpush1.msra.mxu0 0.0
    %3003 = vmatprep.subr.mxu0 0.0
    %3004 = vmatpush1.msra.mxu0 0.0
    %3005 = vmatprep.subr.mxu0 0.0
    %3006 = vmatpush1.msra.mxu0 0.0
    %3007 = vmatprep.subr.mxu0 0.0
    %3008 = vmatpush1.msra.mxu0 0.0
    %3009 = vmatprep.subr.mxu0 0.0
    %3010 = vmatpush1.msra.mxu0 0.0
    %3011 = vmatprep.subr.mxu0 0.0
    %3012 = vmatpush1.msra.mxu0 0.0
    %3013 = vmatprep.subr.mxu0 0.0
    %3014 = vmatpush1.msra.mxu0 %v2976
    %3015 = vmatprep.subr.mxu0 0.0
    %3016 = vmatpush2.msra.mxu0 0.0
    %3017 = vmatprep.subr.mxu0 0.0
    %3018 = vmatpush2.msra.mxu0 0.0
    %3019 = vmatprep.subr.mxu0 0.0
    %3020 = vmatpush2.msra.mxu0 0.0
    %3021 = vmatprep.subr.mxu0 0.0
    %3022 = vmatpush2.msra.mxu0 0.0
    %3023 = vmatprep.subr.mxu0 0.0
    %3024 = vmatpush2.msra.mxu0 0.0
    %3025 = vmatprep.subr.mxu0 0.0
    %3026 = vmatpush2.msra.mxu0 0.0
    %3027 = vmatprep.subr.mxu0 0.0
    %3028 = vmatpush2.msra.mxu0 0.0
    %3029 = vmatprep.subr.mxu0 0.0
    %3030 = vmatpush2.msra.mxu0 0.0
    %3031 = vmatprep.subr.mxu0 0.0
    %3032 = vmatpush2.msra.mxu0 0.0
    %3033 = vmatprep.subr.mxu0 0.0
    %3034 = vmatpush2.msra.mxu0 0.0
    %3035 = vmatprep.subr.mxu0 0.0
    %3036 = vmatpush2.msra.mxu0 0.0
    %3037 = vmatprep.subr.mxu0 0.0
    %3038 = vmatpush2.msra.mxu0 0.0
    %3039 = vmatprep.subr.mxu0 0.0
    %3040 = vmatpush2.msra.mxu0 0.0
    %3041 = vmatprep.subr.mxu0 0.0
    %3042 = vmatpush2.msra.mxu0 0.0
    %3043 = vmatprep.subr.mxu0 0.0
    %3044 = vmatpush2.msra.mxu0 0.0
    %3045 = vmatprep.subr.mxu0 0.0
    %3046 = vmatpush2.msra.mxu0 0.0
    %3047 = vmatprep.mubr.f32.mxu0 0.0
    %3048 = vmatmul.mubr.f32.gmra.mxu0 %v2981
    %v3049 = vpop.f32.mrf.mxu0
    %v3050 = vadd.f32 0.0, %v3049
    %v3051 = vpop.f32.mrf.mxu0
    %3052 = vdwg.mxu0
    %v3053 = vmul.f32 %v3050, 0.5
    %3055 = vrot.lane.b32.xlu0 %v2292, 104
    %v3056 = vpop.permute.xlu0 %3055
    %v3057 = vsel %vm104, %v3056, 0
    %v3060 = vsel %vm111, %v3053, 0
    %3062 = vmatprep.subr.mxu0 0.0
    %3063 = vmatpush1.msra.mxu0 0.0
    %3064 = vmatprep.subr.mxu0 0.0
    %3065 = vmatpush1.msra.mxu0 0.0
    %3066 = vmatprep.subr.mxu0 0.0
    %3067 = vmatpush1.msra.mxu0 0.0
    %3068 = vmatprep.subr.mxu0 0.0
    %3069 = vmatpush1.msra.mxu0 0.0
    %3070 = vmatprep.subr.mxu0 0.0
    %3071 = vmatpush1.msra.mxu0 0.0
    %3072 = vmatprep.subr.mxu0 0.0
    %3073 = vmatpush1.msra.mxu0 0.0
    %3074 = vmatprep.subr.mxu0 0.0
    %3075 = vmatpush1.msra.mxu0 0.0
    %3076 = vmatprep.subr.mxu0 0.0
    %3077 = vmatpush1.msra.mxu0 0.0
    %3078 = vmatprep.subr.mxu0 0.0
    %3079 = vmatpush1.msra.mxu0 0.0
    %3080 = vmatprep.subr.mxu0 0.0
    %3081 = vmatpush1.msra.mxu0 0.0
    %3082 = vmatprep.subr.mxu0 0.0
    %3083 = vmatpush1.msra.mxu0 0.0
    %3084 = vmatprep.subr.mxu0 0.0
    %3085 = vmatpush1.msra.mxu0 0.0
    %3086 = vmatprep.subr.mxu0 0.0
    %3087 = vmatpush1.msra.mxu0 0.0
    %3088 = vmatprep.subr.mxu0 0.0
    %3089 = vmatpush1.msra.mxu0 0.0
    %3090 = vmatprep.subr.mxu0 0.0
    %3091 = vmatpush1.msra.mxu0 0.0
    %3092 = vmatprep.subr.mxu0 0.0
    %3093 = vmatpush1.msra.mxu0 %v3060
    %3094 = vmatprep.subr.mxu0 0.0
    %3095 = vmatpush2.msra.mxu0 0.0
    %3096 = vmatprep.subr.mxu0 0.0
    %3097 = vmatpush2.msra.mxu0 0.0
    %3098 = vmatprep.subr.mxu0 0.0
    %3099 = vmatpush2.msra.mxu0 0.0
    %3100 = vmatprep.subr.mxu0 0.0
    %3101 = vmatpush2.msra.mxu0 0.0
    %3102 = vmatprep.subr.mxu0 0.0
    %3103 = vmatpush2.msra.mxu0 0.0
    %3104 = vmatprep.subr.mxu0 0.0
    %3105 = vmatpush2.msra.mxu0 0.0
    %3106 = vmatprep.subr.mxu0 0.0
    %3107 = vmatpush2.msra.mxu0 0.0
    %3108 = vmatprep.subr.mxu0 0.0
    %3109 = vmatpush2.msra.mxu0 0.0
    %3110 = vmatprep.subr.mxu0 0.0
    %3111 = vmatpush2.msra.mxu0 0.0
    %3112 = vmatprep.subr.mxu0 0.0
    %3113 = vmatpush2.msra.mxu0 0.0
    %3114 = vmatprep.subr.mxu0 0.0
    %3115 = vmatpush2.msra.mxu0 0.0
    %3116 = vmatprep.subr.mxu0 0.0
    %3117 = vmatpush2.msra.mxu0 0.0
    %3118 = vmatprep.subr.mxu0 0.0
    %3119 = vmatpush2.msra.mxu0 0.0
    %3120 = vmatprep.subr.mxu0 0.0
    %3121 = vmatpush2.msra.mxu0 0.0
    %3122 = vmatprep.subr.mxu0 0.0
    %3123 = vmatpush2.msra.mxu0 0.0
    %3124 = vmatprep.subr.mxu0 0.0
    %3125 = vmatpush2.msra.mxu0 0.0
    %3126 = vmatprep.mubr.f32.mxu0 0.0
    %3127 = vmatmul.mubr.f32.gmra.mxu0 %v3057
    %v3128 = vpop.f32.mrf.mxu0
    %v3129 = vadd.f32 0.0, %v3128
    %v3130 = vpop.f32.mrf.mxu0
    %3131 = vdwg.mxu0
    %v3132 = vsub.f32 %v2976, %v3129
    %v3134 = vsel %vm1639, %v3132, 0
    %3136 = vmatprep.subr.mxu0 0.0
    %3137 = vmatpush1.xpose.msra.mxu0 0.0
    %3138 = vmatprep.subr.mxu0 0.0
    %3139 = vmatpush1.xpose.msra.mxu0 0.0
    %3140 = vmatprep.subr.mxu0 0.0
    %3141 = vmatpush1.xpose.msra.mxu0 0.0
    %3142 = vmatprep.subr.mxu0 0.0
    %3143 = vmatpush1.xpose.msra.mxu0 0.0
    %3144 = vmatprep.subr.mxu0 0.0
    %3145 = vmatpush1.xpose.msra.mxu0 0.0
    %3146 = vmatprep.subr.mxu0 0.0
    %3147 = vmatpush1.xpose.msra.mxu0 0.0
    %3148 = vmatprep.subr.mxu0 0.0
    %3149 = vmatpush1.xpose.msra.mxu0 0.0
    %3150 = vmatprep.subr.mxu0 0.0
    %3151 = vmatpush1.xpose.msra.mxu0 0.0
    %3152 = vmatprep.subr.mxu0 0.0
    %3153 = vmatpush1.xpose.msra.mxu0 0.0
    %3154 = vmatprep.subr.mxu0 0.0
    %3155 = vmatpush1.xpose.msra.mxu0 0.0
    %3156 = vmatprep.subr.mxu0 0.0
    %3157 = vmatpush1.xpose.msra.mxu0 0.0
    %3158 = vmatprep.subr.mxu0 0.0
    %3159 = vmatpush1.xpose.msra.mxu0 0.0
    %3160 = vmatprep.subr.mxu0 0.0
    %3161 = vmatpush1.xpose.msra.mxu0 0.0
    %3162 = vmatprep.subr.mxu0 0.0
    %3163 = vmatpush1.xpose.msra.mxu0 0.0
    %3164 = vmatprep.subr.mxu0 0.0
    %3165 = vmatpush1.xpose.msra.mxu0 0.0
    %3166 = vmatprep.subr.mxu0 0.0
    %3167 = vmatpush1.xpose.msra.mxu0 %v3134
    %3168 = vmatprep.subr.mxu0 0.0
    %3169 = vmatpush2.xpose.msra.mxu0 0.0
    %3170 = vmatprep.subr.mxu0 0.0
    %3171 = vmatpush2.xpose.msra.mxu0 0.0
    %3172 = vmatprep.subr.mxu0 0.0
    %3173 = vmatpush2.xpose.msra.mxu0 0.0
    %3174 = vmatprep.subr.mxu0 0.0
    %3175 = vmatpush2.xpose.msra.mxu0 0.0
    %3176 = vmatprep.subr.mxu0 0.0
    %3177 = vmatpush2.xpose.msra.mxu0 0.0
    %3178 = vmatprep.subr.mxu0 0.0
    %3179 = vmatpush2.xpose.msra.mxu0 0.0
    %3180 = vmatprep.subr.mxu0 0.0
    %3181 = vmatpush2.xpose.msra.mxu0 0.0
    %3182 = vmatprep.subr.mxu0 0.0
    %3183 = vmatpush2.xpose.msra.mxu0 0.0
    %3184 = vmatprep.subr.mxu0 0.0
    %3185 = vmatpush2.xpose.msra.mxu0 0.0
    %3186 = vmatprep.subr.mxu0 0.0
    %3187 = vmatpush2.xpose.msra.mxu0 0.0
    %3188 = vmatprep.subr.mxu0 0.0
    %3189 = vmatpush2.xpose.msra.mxu0 0.0
    %3190 = vmatprep.subr.mxu0 0.0
    %3191 = vmatpush2.xpose.msra.mxu0 0.0
    %3192 = vmatprep.subr.mxu0 0.0
    %3193 = vmatpush2.xpose.msra.mxu0 0.0
    %3194 = vmatprep.subr.mxu0 0.0
    %3195 = vmatpush2.xpose.msra.mxu0 0.0
    %3196 = vmatprep.subr.mxu0 0.0
    %3197 = vmatpush2.xpose.msra.mxu0 0.0
    %3198 = vmatprep.subr.mxu0 0.0
    %3199 = vmatpush2.xpose.msra.mxu0 0.0
    %3200 = vmatprep.mubr.f32.mxu0 0.0
    %3201 = vmatmul.mubr.f32.gmra.mxu0 %v3134
    %v3202 = vpop.f32.mrf.mxu0
    %v3203 = vadd.f32 0.0, %v3202
    %v3204 = vpop.f32.mrf.mxu0
    %3205 = vdwg.mxu0
    %v3206 = vmul.f32 %v3203, %v3203
    %3207 = vrot.lane.b32.xlu0 %v2292, 100
    %v3208 = vpop.permute.xlu0 %3207
    %v3210 = vmul.f32 %v3206, %v3208
    %v3211 = vsel %vm2296, %v3210, 0.0
    %3212 = vadd.xlane.f32.xlu0 %v3211
    %v3213 = vpop.xlane.xlu0 %3212
    %v3214 = vrot.slane %v3213, 4
    %v3215 = vadd.f32 %v3213, %v3214
    %v3216 = vrot.slane %v3215, 2
    %v3217 = vadd.f32 %v3215, %v3216
    %v3218 = vrot.slane %v3217, 1
    %v3219 = vadd.f32 %v3217, %v3218
    %v3220 = vmul.f32 %v3132, %v3132
    %3221 = vmatprep.subr.mxu0 0.0
    %3222 = vmatpush1.msra.mxu0 0.0
    %3223 = vmatprep.subr.mxu0 0.0
    %3224 = vmatpush1.msra.mxu0 0.0
    %3225 = vmatprep.subr.mxu0 0.0
    %3226 = vmatpush1.msra.mxu0 0.0
    %3227 = vmatprep.subr.mxu0 0.0
    %3228 = vmatpush1.msra.mxu0 0.0
    %3229 = vmatprep.subr.mxu0 0.0
    %3230 = vmatpush1.msra.mxu0 0.0
    %3231 = vmatprep.subr.mxu0 0.0
    %3232 = vmatpush1.msra.mxu0 0.0
    %3233 = vmatprep.subr.mxu0 0.0
    %3234 = vmatpush1.msra.mxu0 0.0
    %3235 = vmatprep.subr.mxu0 0.0
    %3236 = vmatpush1.msra.mxu0 0.0
    %3237 = vmatprep.subr.mxu0 0.0
    %3238 = vmatpush1.msra.mxu0 0.0
    %3239 = vmatprep.subr.mxu0 0.0
    %3240 = vmatpush1.msra.mxu0 0.0
    %3241 = vmatprep.subr.mxu0 0.0
    %3242 = vmatpush1.msra.mxu0 0.0
    %3243 = vmatprep.subr.mxu0 0.0
    %3244 = vmatpush1.msra.mxu0 0.0
    %3245 = vmatprep.subr.mxu0 0.0
    %3246 = vmatpush1.msra.mxu0 0.0
    %3247 = vmatprep.subr.mxu0 0.0
    %3248 = vmatpush1.msra.mxu0 0.0
    %3249 = vmatprep.subr.mxu0 0.0
    %3250 = vmatpush1.msra.mxu0 0.0
    %3251 = vmatprep.subr.mxu0 0.0
    %3252 = vmatpush1.msra.mxu0 %v3220
    %3253 = vmatprep.subr.mxu0 0.0
    %3254 = vmatpush2.msra.mxu0 0.0
    %3255 = vmatprep.subr.mxu0 0.0
    %3256 = vmatpush2.msra.mxu0 0.0
    %3257 = vmatprep.subr.mxu0 0.0
    %3258 = vmatpush2.msra.mxu0 0.0
    %3259 = vmatprep.subr.mxu0 0.0
    %3260 = vmatpush2.msra.mxu0 0.0
    %3261 = vmatprep.subr.mxu0 0.0
    %3262 = vmatpush2.msra.mxu0 0.0
    %3263 = vmatprep.subr.mxu0 0.0
    %3264 = vmatpush2.msra.mxu0 0.0
    %3265 = vmatprep.subr.mxu0 0.0
    %3266 = vmatpush2.msra.mxu0 0.0
    %3267 = vmatprep.subr.mxu0 0.0
    %3268 = vmatpush2.msra.mxu0 0.0
    %3269 = vmatprep.subr.mxu0 0.0
    %3270 = vmatpush2.msra.mxu0 0.0
    %3271 = vmatprep.subr.mxu0 0.0
    %3272 = vmatpush2.msra.mxu0 0.0
    %3273 = vmatprep.subr.mxu0 0.0
    %3274 = vmatpush2.msra.mxu0 0.0
    %3275 = vmatprep.subr.mxu0 0.0
    %3276 = vmatpush2.msra.mxu0 0.0
    %3277 = vmatprep.subr.mxu0 0.0
    %3278 = vmatpush2.msra.mxu0 0.0
    %3279 = vmatprep.subr.mxu0 0.0
    %3280 = vmatpush2.msra.mxu0 0.0
    %3281 = vmatprep.subr.mxu0 0.0
    %3282 = vmatpush2.msra.mxu0 0.0
    %3283 = vmatprep.subr.mxu0 0.0
    %3284 = vmatpush2.msra.mxu0 0.0
    %3285 = vmatprep.mubr.f32.mxu0 0.0
    %3286 = vmatmul.mubr.f32.gmra.mxu0 %v2981
    %v3287 = vpop.f32.mrf.mxu0
    %v3288 = vadd.f32 0.0, %v3287
    %v3289 = vpop.f32.mrf.mxu0
    %3290 = vdwg.mxu0
    %v3291 = vmul.f32 %v3288, %v3288
    %vm3292 = vcmask 257024
    %v3293 = vsel %vm3292, %v3291, 0.0
    %3294 = vadd.xlane.f32.xlu0 %v3293
    %v3295 = vpop.xlane.xlu0 %3294
    %v3296 = vsel %vm111, %v3295, 0.0
    %v3297 = vrot.slane %v3296, 4
    %v3298 = vadd.f32 %v3296, %v3297
    %v3299 = vrot.slane %v3298, 2
    %v3300 = vadd.f32 %v3298, %v3299
    %v3301 = vrot.slane %v3300, 1
    %v3302 = vadd.f32 %v3300, %v3301
    %v3303 = vsub.f32 %v3219, %v3302
    %v3304 = vmul.f32 %v3303, 0.5
    %vm3305 = vcmask 0
    %3306 = vst.msk [vmem:[#allocation6] sm:$0x1] %vm3305, %v3304
    %v3307 = vld [vmem:[%s4 + $0x8] sm:$0xff]
    %v3308 = vld [vmem:[%s4 + $0x28] sm:$0xff]
    %v3309 = vld [vmem:[%s4 + $0x48] sm:$0xff]
    %v3310 = vld [vmem:[%s4 + $0x68] sm:$0xff]
    %3315 = vrot.lane.b32.xlu0 %v3307, 32
    %v3316 = vpop.permute.xlu0 %3315
    %3317 = vrot.lane.b32.xlu0 %v3308, 32
    %v3318 = vpop.permute.xlu0 %3317
    %3319 = vrot.lane.b32.xlu0 %v3309, 32
    %v3320 = vpop.permute.xlu0 %3319
    %3321 = vrot.lane.b32.xlu0 %v3310, 32
    %v3322 = vpop.permute.xlu0 %3321
    %v3328 = vsel %vm1639, %v2976, 0
    %3330 = vmatprep.subr.mxu0 0.0
    %3331 = vmatpush1.msra.mxu0 0.0
    %3332 = vmatprep.subr.mxu0 0.0
    %3333 = vmatpush1.msra.mxu0 0.0
    %3334 = vmatprep.subr.mxu0 0.0
    %3335 = vmatpush1.msra.mxu0 0.0
    %3336 = vmatprep.subr.mxu0 0.0
    %3337 = vmatpush1.msra.mxu0 0.0
    %3338 = vmatprep.subr.mxu0 0.0
    %3339 = vmatpush1.msra.mxu0 0.0
    %3340 = vmatprep.subr.mxu0 0.0
    %3341 = vmatpush1.msra.mxu0 0.0
    %3342 = vmatprep.subr.mxu0 0.0
    %3343 = vmatpush1.msra.mxu0 0.0
    %3344 = vmatprep.subr.mxu0 0.0
    %3345 = vmatpush1.msra.mxu0 0.0
    %3346 = vmatprep.subr.mxu0 0.0
    %3347 = vmatpush1.msra.mxu0 0.0
    %3348 = vmatprep.subr.mxu0 0.0
    %3349 = vmatpush1.msra.mxu0 0.0
    %3350 = vmatprep.subr.mxu0 0.0
    %3351 = vmatpush1.msra.mxu0 0.0
    %3352 = vmatprep.subr.mxu0 0.0
    %3353 = vmatpush1.msra.mxu0 0.0
    %3354 = vmatprep.subr.mxu0 0.0
    %3355 = vmatpush1.msra.mxu0 %v3322
    %3356 = vmatprep.subr.mxu0 0.0
    %3357 = vmatpush1.msra.mxu0 %v3320
    %3358 = vmatprep.subr.mxu0 0.0
    %3359 = vmatpush1.msra.mxu0 %v3318
    %3360 = vmatprep.subr.mxu0 0.0
    %3361 = vmatpush1.msra.mxu0 %v3316
    %3362 = vmatprep.subr.mxu0 0.0
    %3363 = vmatpush2.msra.mxu0 0.0
    %3364 = vmatprep.subr.mxu0 0.0
    %3365 = vmatpush2.msra.mxu0 0.0
    %3366 = vmatprep.subr.mxu0 0.0
    %3367 = vmatpush2.msra.mxu0 0.0
    %3368 = vmatprep.subr.mxu0 0.0
    %3369 = vmatpush2.msra.mxu0 0.0
    %3370 = vmatprep.subr.mxu0 0.0
    %3371 = vmatpush2.msra.mxu0 0.0
    %3372 = vmatprep.subr.mxu0 0.0
    %3373 = vmatpush2.msra.mxu0 0.0
    %3374 = vmatprep.subr.mxu0 0.0
    %3375 = vmatpush2.msra.mxu0 0.0
    %3376 = vmatprep.subr.mxu0 0.0
    %3377 = vmatpush2.msra.mxu0 0.0
    %3378 = vmatprep.subr.mxu0 0.0
    %3379 = vmatpush2.msra.mxu0 0.0
    %3380 = vmatprep.subr.mxu0 0.0
    %3381 = vmatpush2.msra.mxu0 0.0
    %3382 = vmatprep.subr.mxu0 0.0
    %3383 = vmatpush2.msra.mxu0 0.0
    %3384 = vmatprep.subr.mxu0 0.0
    %3385 = vmatpush2.msra.mxu0 0.0
    %3386 = vmatprep.subr.mxu0 0.0
    %3387 = vmatpush2.msra.mxu0 0.0
    %3388 = vmatprep.subr.mxu0 0.0
    %3389 = vmatpush2.msra.mxu0 0.0
    %3390 = vmatprep.subr.mxu0 0.0
    %3391 = vmatpush2.msra.mxu0 0.0
    %3392 = vmatprep.subr.mxu0 0.0
    %3393 = vmatpush2.msra.mxu0 0.0
    %3394 = vmatprep.mubr.f32.mxu0 0.0
    %3395 = vmatmul.mubr.f32.gmra.mxu0 %v3328
    %v3396 = vpop.f32.mrf.mxu0
    %v3397 = vadd.f32 0.0, %v3396
    %v3398 = vpop.f32.mrf.mxu0
    %3399 = vdwg.mxu0
    %v3400 = vadd.f32 %v2209, %v3397
    %v3401 = vld [vmem:[%s3 + $0x5] sm:$0x1]
    %v3402 = vlaneseq
    %v3403 = vshrl.u32 %v3402, 7
    %v3404 = vsub.s32 0, %v3403
    %v3405 = vrot.slane %v3401, %v3404
    %v3406 = vadd.f32 %v3400, %v3405
    %v3407 = vld [vmem:[%s4 + $0x10] sm:$0xff]
    %v3408 = vld [vmem:[%s4 + $0x30] sm:$0xff]
    %v3409 = vld [vmem:[%s4 + $0x50] sm:$0xff]
    %v3410 = vld [vmem:[%s4 + $0x70] sm:$0xff]
    %v3411 = vld [vmem:[%s3 + $0x6] sm:$0x1]
    %v3412 = vlaneseq
    %v3413 = vshrl.u32 %v3412, 7
    %v3414 = vsub.s32 0, %v3413
    %v3415 = vrot.slane %v3411, %v3414
    %v3417 = vsel %vm1639, %v3406, 0
    %3419 = vmatprep.subr.mxu0 0.0
    %3420 = vmatpush1.msra.mxu0 0.0
    %3421 = vmatprep.subr.mxu0 0.0
    %3422 = vmatpush1.msra.mxu0 0.0
    %3423 = vmatprep.subr.mxu0 0.0
    %3424 = vmatpush1.msra.mxu0 0.0
    %3425 = vmatprep.subr.mxu0 0.0
    %3426 = vmatpush1.msra.mxu0 0.0
    %3427 = vmatprep.subr.mxu0 0.0
    %3428 = vmatpush1.msra.mxu0 0.0
    %3429 = vmatprep.subr.mxu0 0.0
    %3430 = vmatpush1.msra.mxu0 0.0
    %3431 = vmatprep.subr.mxu0 0.0
    %3432 = vmatpush1.msra.mxu0 0.0
    %3433 = vmatprep.subr.mxu0 0.0
    %3434 = vmatpush1.msra.mxu0 0.0
    %3435 = vmatprep.subr.mxu0 0.0
    %3436 = vmatpush1.msra.mxu0 0.0
    %3437 = vmatprep.subr.mxu0 0.0
    %3438 = vmatpush1.msra.mxu0 0.0
    %3439 = vmatprep.subr.mxu0 0.0
    %3440 = vmatpush1.msra.mxu0 0.0
    %3441 = vmatprep.subr.mxu0 0.0
    %3442 = vmatpush1.msra.mxu0 0.0
    %3443 = vmatprep.subr.mxu0 0.0
    %3444 = vmatpush1.msra.mxu0 %v3410
    %3445 = vmatprep.subr.mxu0 0.0
    %3446 = vmatpush1.msra.mxu0 %v3409
    %3447 = vmatprep.subr.mxu0 0.0
    %3448 = vmatpush1.msra.mxu0 %v3408
    %3449 = vmatprep.subr.mxu0 0.0
    %3450 = vmatpush1.msra.mxu0 %v3407
    %3451 = vmatprep.subr.mxu0 0.0
    %3452 = vmatpush2.msra.mxu0 0.0
    %3453 = vmatprep.subr.mxu0 0.0
    %3454 = vmatpush2.msra.mxu0 0.0
    %3455 = vmatprep.subr.mxu0 0.0
    %3456 = vmatpush2.msra.mxu0 0.0
    %3457 = vmatprep.subr.mxu0 0.0
    %3458 = vmatpush2.msra.mxu0 0.0
    %3459 = vmatprep.subr.mxu0 0.0
    %3460 = vmatpush2.msra.mxu0 0.0
    %3461 = vmatprep.subr.mxu0 0.0
    %3462 = vmatpush2.msra.mxu0 0.0
    %3463 = vmatprep.subr.mxu0 0.0
    %3464 = vmatpush2.msra.mxu0 0.0
    %3465 = vmatprep.subr.mxu0 0.0
    %3466 = vmatpush2.msra.mxu0 0.0
    %3467 = vmatprep.subr.mxu0 0.0
    %3468 = vmatpush2.msra.mxu0 0.0
    %3469 = vmatprep.subr.mxu0 0.0
    %3470 = vmatpush2.msra.mxu0 0.0
    %3471 = vmatprep.subr.mxu0 0.0
    %3472 = vmatpush2.msra.mxu0 0.0
    %3473 = vmatprep.subr.mxu0 0.0
    %3474 = vmatpush2.msra.mxu0 0.0
    %3475 = vmatprep.subr.mxu0 0.0
    %3476 = vmatpush2.msra.mxu0 0.0
    %3477 = vmatprep.subr.mxu0 0.0
    %3478 = vmatpush2.msra.mxu0 0.0
    %3479 = vmatprep.subr.mxu0 0.0
    %3480 = vmatpush2.msra.mxu0 0.0
    %3481 = vmatprep.subr.mxu0 0.0
    %3482 = vmatpush2.msra.mxu0 0.0
    %3483 = vmatprep.mubr.f32.mxu0 0.0
    %3484 = vmatmul.mubr.f32.gmra.mxu0 %v3417
    %v3485 = vpop.f32.mrf.mxu0
    %v3486 = vadd.f32 %v3415, %v3485
    %v3487 = vpop.f32.mrf.mxu0
    %3488 = vdwg.mxu0
    %v3489 = vmax.f32 %v3486, 0.0
    %v3490 = vld [vmem:[%s4 + $0x10] sm:$0xff]
    %v3491 = vld [vmem:[%s4 + $0x30] sm:$0xff]
    %3494 = vrot.lane.b32.xlu0 %v3490, 112
    %v3495 = vpop.permute.xlu0 %3494
    %3496 = vrot.lane.b32.xlu0 %v3491, 112
    %v3497 = vpop.permute.xlu0 %3496
    %v3501 = vsel %vm1890, %v3489, 0
    %3503 = vmatprep.subr.mxu0 0.0
    %3504 = vmatpush1.msra.mxu0 0.0
    %3505 = vmatprep.subr.mxu0 0.0
    %3506 = vmatpush1.msra.mxu0 0.0
    %3507 = vmatprep.subr.mxu0 0.0
    %3508 = vmatpush1.msra.mxu0 0.0
    %3509 = vmatprep.subr.mxu0 0.0
    %3510 = vmatpush1.msra.mxu0 0.0
    %3511 = vmatprep.subr.mxu0 0.0
    %3512 = vmatpush1.msra.mxu0 0.0
    %3513 = vmatprep.subr.mxu0 0.0
    %3514 = vmatpush1.msra.mxu0 0.0
    %3515 = vmatprep.subr.mxu0 0.0
    %3516 = vmatpush1.msra.mxu0 0.0
    %3517 = vmatprep.subr.mxu0 0.0
    %3518 = vmatpush1.msra.mxu0 0.0
    %3519 = vmatprep.subr.mxu0 0.0
    %3520 = vmatpush1.msra.mxu0 0.0
    %3521 = vmatprep.subr.mxu0 0.0
    %3522 = vmatpush1.msra.mxu0 0.0
    %3523 = vmatprep.subr.mxu0 0.0
    %3524 = vmatpush1.msra.mxu0 0.0
    %3525 = vmatprep.subr.mxu0 0.0
    %3526 = vmatpush1.msra.mxu0 0.0
    %3527 = vmatprep.subr.mxu0 0.0
    %3528 = vmatpush1.msra.mxu0 0.0
    %3529 = vmatprep.subr.mxu0 0.0
    %3530 = vmatpush1.msra.mxu0 0.0
    %3531 = vmatprep.subr.mxu0 0.0
    %3532 = vmatpush1.msra.mxu0 %v3497
    %3533 = vmatprep.subr.mxu0 0.0
    %3534 = vmatpush1.msra.mxu0 %v3495
    %3535 = vmatprep.subr.mxu0 0.0
    %3536 = vmatpush2.msra.mxu0 0.0
    %3537 = vmatprep.subr.mxu0 0.0
    %3538 = vmatpush2.msra.mxu0 0.0
    %3539 = vmatprep.subr.mxu0 0.0
    %3540 = vmatpush2.msra.mxu0 0.0
    %3541 = vmatprep.subr.mxu0 0.0
    %3542 = vmatpush2.msra.mxu0 0.0
    %3543 = vmatprep.subr.mxu0 0.0
    %3544 = vmatpush2.msra.mxu0 0.0
    %3545 = vmatprep.subr.mxu0 0.0
    %3546 = vmatpush2.msra.mxu0 0.0
    %3547 = vmatprep.subr.mxu0 0.0
    %3548 = vmatpush2.msra.mxu0 0.0
    %3549 = vmatprep.subr.mxu0 0.0
    %3550 = vmatpush2.msra.mxu0 0.0
    %3551 = vmatprep.subr.mxu0 0.0
    %3552 = vmatpush2.msra.mxu0 0.0
    %3553 = vmatprep.subr.mxu0 0.0
    %3554 = vmatpush2.msra.mxu0 0.0
    %3555 = vmatprep.subr.mxu0 0.0
    %3556 = vmatpush2.msra.mxu0 0.0
    %3557 = vmatprep.subr.mxu0 0.0
    %3558 = vmatpush2.msra.mxu0 0.0
    %3559 = vmatprep.subr.mxu0 0.0
    %3560 = vmatpush2.msra.mxu0 0.0
    %3561 = vmatprep.subr.mxu0 0.0
    %3562 = vmatpush2.msra.mxu0 0.0
    %3563 = vmatprep.subr.mxu0 0.0
    %3564 = vmatpush2.msra.mxu0 0.0
    %3565 = vmatprep.subr.mxu0 0.0
    %3566 = vmatpush2.msra.mxu0 0.0
    %3567 = vmatprep.mubr.f32.mxu0 0.0
    %3568 = vmatmul.mubr.f32.gmra.mxu0 %v3501
    %v3569 = vpop.f32.mrf.mxu0
    %v3570 = vadd.f32 0.0, %v3569
    %v3571 = vpop.f32.mrf.mxu0
    %3572 = vdwg.mxu0
    %v3573 = vadd.f32 %v3406, %v3570
    %v3574 = vld [vmem:[%s3 + $0x7] sm:$0x1]
    %v3575 = vlaneseq
    %v3576 = vshrl.u32 %v3575, 7
    %v3577 = vsub.s32 0, %v3576
    %v3578 = vrot.slane %v3574, %v3577
    %v3579 = vadd.f32 %v3573, %v3578
    %v3580 = vld [vmem:[%s4 + $0x10] sm:$0xff]
    %v3581 = vld [vmem:[%s4 + $0x18] sm:$0xff]
    %v3582 = vld [vmem:[%s4 + $0x30] sm:$0xff]
    %v3583 = vld [vmem:[%s4 + $0x38] sm:$0xff]
    %v3584 = vld [vmem:[%s4 + $0x50] sm:$0xff]
    %v3585 = vld [vmem:[%s4 + $0x58] sm:$0xff]
    %v3586 = vld [vmem:[%s4 + $0x70] sm:$0xff]
    %v3587 = vld [vmem:[%s4 + $0x78] sm:$0xff]
    %v3588 = vld [vmem:[%s3 + $0x8] sm:$0x1]
    %v3589 = vlaneseq
    %v3590 = vshrl.u32 %v3589, 7
    %v3591 = vsub.s32 0, %v3590
    %v3592 = vrot.slane %v3588, %v3591
    %3601 = vrot.lane.b32.xlu0 %v3580, 80
    %v3602 = vpop.permute.xlu0 %3601
    %3603 = vrot.lane.b32.xlu0 %v3581, 80
    %v3604 = vpop.permute.xlu0 %3603
    %3605 = vrot.lane.b32.xlu0 %v3582, 80
    %v3606 = vpop.permute.xlu0 %3605
    %3607 = vrot.lane.b32.xlu0 %v3583, 80
    %v3608 = vpop.permute.xlu0 %3607
    %3609 = vrot.lane.b32.xlu0 %v3584, 80
    %v3610 = vpop.permute.xlu0 %3609
    %3611 = vrot.lane.b32.xlu0 %v3585, 80
    %v3612 = vpop.permute.xlu0 %3611
    %3613 = vrot.lane.b32.xlu0 %v3586, 80
    %v3614 = vpop.permute.xlu0 %3613
    %3615 = vrot.lane.b32.xlu0 %v3587, 80
    %v3616 = vpop.permute.xlu0 %3615
    %vm3617 = vcmask 654336
    %v3618 = vsel %vm3617, %v3602, %v3604
    %v3619 = vsel %vm3617, %v3606, %v3608
    %v3620 = vsel %vm3617, %v3610, %v3612
    %v3621 = vsel %vm3617, %v3614, %v3616
    %v3627 = vsel %vm1639, %v3579, 0
    %3629 = vmatprep.subr.mxu0 0.0
    %3630 = vmatpush1.msra.mxu0 0.0
    %3631 = vmatprep.subr.mxu0 0.0
    %3632 = vmatpush1.msra.mxu0 0.0
    %3633 = vmatprep.subr.mxu0 0.0
    %3634 = vmatpush1.msra.mxu0 0.0
    %3635 = vmatprep.subr.mxu0 0.0
    %3636 = vmatpush1.msra.mxu0 0.0
    %3637 = vmatprep.subr.mxu0 0.0
    %3638 = vmatpush1.msra.mxu0 0.0
    %3639 = vmatprep.subr.mxu0 0.0
    %3640 = vmatpush1.msra.mxu0 0.0
    %3641 = vmatprep.subr.mxu0 0.0
    %3642 = vmatpush1.msra.mxu0 0.0
    %3643 = vmatprep.subr.mxu0 0.0
    %3644 = vmatpush1.msra.mxu0 0.0
    %3645 = vmatprep.subr.mxu0 0.0
    %3646 = vmatpush1.msra.mxu0 0.0
    %3647 = vmatprep.subr.mxu0 0.0
    %3648 = vmatpush1.msra.mxu0 0.0
    %3649 = vmatprep.subr.mxu0 0.0
    %3650 = vmatpush1.msra.mxu0 0.0
    %3651 = vmatprep.subr.mxu0 0.0
    %3652 = vmatpush1.msra.mxu0 0.0
    %3653 = vmatprep.subr.mxu0 0.0
    %3654 = vmatpush1.msra.mxu0 %v3621
    %3655 = vmatprep.subr.mxu0 0.0
    %3656 = vmatpush1.msra.mxu0 %v3620
    %3657 = vmatprep.subr.mxu0 0.0
    %3658 = vmatpush1.msra.mxu0 %v3619
    %3659 = vmatprep.subr.mxu0 0.0
    %3660 = vmatpush1.msra.mxu0 %v3618
    %3661 = vmatprep.subr.mxu0 0.0
    %3662 = vmatpush2.msra.mxu0 0.0
    %3663 = vmatprep.subr.mxu0 0.0
    %3664 = vmatpush2.msra.mxu0 0.0
    %3665 = vmatprep.subr.mxu0 0.0
    %3666 = vmatpush2.msra.mxu0 0.0
    %3667 = vmatprep.subr.mxu0 0.0
    %3668 = vmatpush2.msra.mxu0 0.0
    %3669 = vmatprep.subr.mxu0 0.0
    %3670 = vmatpush2.msra.mxu0 0.0
    %3671 = vmatprep.subr.mxu0 0.0
    %3672 = vmatpush2.msra.mxu0 0.0
    %3673 = vmatprep.subr.mxu0 0.0
    %3674 = vmatpush2.msra.mxu0 0.0
    %3675 = vmatprep.subr.mxu0 0.0
    %3676 = vmatpush2.msra.mxu0 0.0
    %3677 = vmatprep.subr.mxu0 0.0
    %3678 = vmatpush2.msra.mxu0 0.0
    %3679 = vmatprep.subr.mxu0 0.0
    %3680 = vmatpush2.msra.mxu0 0.0
    %3681 = vmatprep.subr.mxu0 0.0
    %3682 = vmatpush2.msra.mxu0 0.0
    %3683 = vmatprep.subr.mxu0 0.0
    %3684 = vmatpush2.msra.mxu0 0.0
    %3685 = vmatprep.subr.mxu0 0.0
    %3686 = vmatpush2.msra.mxu0 0.0
    %3687 = vmatprep.subr.mxu0 0.0
    %3688 = vmatpush2.msra.mxu0 0.0
    %3689 = vmatprep.subr.mxu0 0.0
    %3690 = vmatpush2.msra.mxu0 0.0
    %3691 = vmatprep.subr.mxu0 0.0
    %3692 = vmatpush2.msra.mxu0 0.0
    %3693 = vmatprep.mubr.f32.mxu0 0.0
    %3694 = vmatmul.mubr.f32.gmra.mxu0 %v3627
    %v3695 = vpop.f32.mrf.mxu0
    %v3696 = vadd.f32 %v3592, %v3695
    %v3697 = vpop.f32.mrf.mxu0
    %3698 = vdwg.mxu0
    %v3699 = vld [vmem:[%s5] sm:$0x3]
    %v3701 = vrot.slane %v3696, 6
    %3702 = vrot.lane.b32.xlu0 %v3696, 96
    %v3703 = vpop.permute.xlu0 %3702
    %3705 = vrot.lane.b32.xlu0 %v3699, 120
    %v3706 = vpop.permute.xlu0 %3705
    %v3708 = vsel %vm1639, %v3701, 0
    %v3710 = vsel %vm1639, %v3703, 0
    %3712 = vmatprep.subr.mxu0 0.0
    %3713 = vmatpush1.xpose.msra.mxu0 0.0
    %3714 = vmatprep.subr.mxu0 0.0
    %3715 = vmatpush1.xpose.msra.mxu0 0.0
    %3716 = vmatprep.subr.mxu0 0.0
    %3717 = vmatpush1.xpose.msra.mxu0 0.0
    %3718 = vmatprep.subr.mxu0 0.0
    %3719 = vmatpush1.xpose.msra.mxu0 0.0
    %3720 = vmatprep.subr.mxu0 0.0
    %3721 = vmatpush1.xpose.msra.mxu0 0.0
    %3722 = vmatprep.subr.mxu0 0.0
    %3723 = vmatpush1.xpose.msra.mxu0 0.0
    %3724 = vmatprep.subr.mxu0 0.0
    %3725 = vmatpush1.xpose.msra.mxu0 0.0
    %3726 = vmatprep.subr.mxu0 0.0
    %3727 = vmatpush1.xpose.msra.mxu0 0.0
    %3728 = vmatprep.subr.mxu0 0.0
    %3729 = vmatpush1.xpose.msra.mxu0 0.0
    %3730 = vmatprep.subr.mxu0 0.0
    %3731 = vmatpush1.xpose.msra.mxu0 0.0
    %3732 = vmatprep.subr.mxu0 0.0
    %3733 = vmatpush1.xpose.msra.mxu0 0.0
    %3734 = vmatprep.subr.mxu0 0.0
    %3735 = vmatpush1.xpose.msra.mxu0 0.0
    %3736 = vmatprep.subr.mxu0 0.0
    %3737 = vmatpush1.xpose.msra.mxu0 0.0
    %3738 = vmatprep.subr.mxu0 0.0
    %3739 = vmatpush1.xpose.msra.mxu0 0.0
    %3740 = vmatprep.subr.mxu0 0.0
    %3741 = vmatpush1.xpose.msra.mxu0 0.0
    %3742 = vmatprep.subr.mxu0 0.0
    %3743 = vmatpush1.xpose.msra.mxu0 %v3710
    %3744 = vmatprep.subr.mxu0 0.0
    %3745 = vmatpush2.xpose.msra.mxu0 0.0
    %3746 = vmatprep.subr.mxu0 0.0
    %3747 = vmatpush2.xpose.msra.mxu0 0.0
    %3748 = vmatprep.subr.mxu0 0.0
    %3749 = vmatpush2.xpose.msra.mxu0 0.0
    %3750 = vmatprep.subr.mxu0 0.0
    %3751 = vmatpush2.xpose.msra.mxu0 0.0
    %3752 = vmatprep.subr.mxu0 0.0
    %3753 = vmatpush2.xpose.msra.mxu0 0.0
    %3754 = vmatprep.subr.mxu0 0.0
    %3755 = vmatpush2.xpose.msra.mxu0 0.0
    %3756 = vmatprep.subr.mxu0 0.0
    %3757 = vmatpush2.xpose.msra.mxu0 0.0
    %3758 = vmatprep.subr.mxu0 0.0
    %3759 = vmatpush2.xpose.msra.mxu0 0.0
    %3760 = vmatprep.subr.mxu0 0.0
    %3761 = vmatpush2.xpose.msra.mxu0 0.0
    %3762 = vmatprep.subr.mxu0 0.0
    %3763 = vmatpush2.xpose.msra.mxu0 0.0
    %3764 = vmatprep.subr.mxu0 0.0
    %3765 = vmatpush2.xpose.msra.mxu0 0.0
    %3766 = vmatprep.subr.mxu0 0.0
    %3767 = vmatpush2.xpose.msra.mxu0 0.0
    %3768 = vmatprep.subr.mxu0 0.0
    %3769 = vmatpush2.xpose.msra.mxu0 0.0
    %3770 = vmatprep.subr.mxu0 0.0
    %3771 = vmatpush2.xpose.msra.mxu0 0.0
    %3772 = vmatprep.subr.mxu0 0.0
    %3773 = vmatpush2.xpose.msra.mxu0 0.0
    %3774 = vmatprep.subr.mxu0 0.0
    %3775 = vmatpush2.xpose.msra.mxu0 0.0
    %3776 = vmatprep.mubr.f32.mxu0 0.0
    %3777 = vmatmul.mubr.f32.gmra.mxu0 %v3708
    %v3778 = vpop.f32.mrf.mxu0
    %v3779 = vadd.f32 %v3706, %v3778
    %v3780 = vpop.f32.mrf.mxu0
    %3781 = vdwg.mxu0
    %vm3782 = vcmask 58368
    %v3783 = vsel %vm3782, %v3779, -inf
    %3784 = vmax.xlane.f32.xlu0 %v3783
    %v3785 = vpop.xlane.xlu0 %3784
    %v3786 = vsub.f32 %v3779, %v3785
    %v3787 = vmul.f32 %v3786, 1.442695
    %v3788 = vpow.pop %v3787
    %v3789 = vsel %vm3782, %v3788, 0.0
    %3790 = vadd.xlane.f32.xlu0 %v3789
    %v3791 = vpop.xlane.xlu0 %3790
    %v3792 = vrcp.pop %v3791
    %v3793 = vmul.f32 %v3788, %v3792
    %3794 = vrot.lane.b32.xlu0 %v3696, 64
    %v3795 = vpop.permute.xlu0 %3794
    %v3798 = vsel %vm2296, %v3793, 0
    %3800 = vmatprep.subr.mxu0 0.0
    %3801 = vmatpush1.msra.mxu0 0.0
    %3802 = vmatprep.subr.mxu0 0.0
    %3803 = vmatpush1.msra.mxu0 0.0
    %3804 = vmatprep.subr.mxu0 0.0
    %3805 = vmatpush1.msra.mxu0 0.0
    %3806 = vmatprep.subr.mxu0 0.0
    %3807 = vmatpush1.msra.mxu0 0.0
    %3808 = vmatprep.subr.mxu0 0.0
    %3809 = vmatpush1.msra.mxu0 0.0
    %3810 = vmatprep.subr.mxu0 0.0
    %3811 = vmatpush1.msra.mxu0 0.0
    %3812 = vmatprep.subr.mxu0 0.0
    %3813 = vmatpush1.msra.mxu0 0.0
    %3814 = vmatprep.subr.mxu0 0.0
    %3815 = vmatpush1.msra.mxu0 0.0
    %3816 = vmatprep.subr.mxu0 0.0
    %3817 = vmatpush1.msra.mxu0 0.0
    %3818 = vmatprep.subr.mxu0 0.0
    %3819 = vmatpush1.msra.mxu0 0.0
    %3820 = vmatprep.subr.mxu0 0.0
    %3821 = vmatpush1.msra.mxu0 0.0
    %3822 = vmatprep.subr.mxu0 0.0
    %3823 = vmatpush1.msra.mxu0 0.0
    %3824 = vmatprep.subr.mxu0 0.0
    %3825 = vmatpush1.msra.mxu0 0.0
    %3826 = vmatprep.subr.mxu0 0.0
    %3827 = vmatpush1.msra.mxu0 0.0
    %3828 = vmatprep.subr.mxu0 0.0
    %3829 = vmatpush1.msra.mxu0 0.0
    %3830 = vmatprep.subr.mxu0 0.0
    %3831 = vmatpush1.msra.mxu0 %v3795
    %3832 = vmatprep.subr.mxu0 0.0
    %3833 = vmatpush2.msra.mxu0 0.0
    %3834 = vmatprep.subr.mxu0 0.0
    %3835 = vmatpush2.msra.mxu0 0.0
    %3836 = vmatprep.subr.mxu0 0.0
    %3837 = vmatpush2.msra.mxu0 0.0
    %3838 = vmatprep.subr.mxu0 0.0
    %3839 = vmatpush2.msra.mxu0 0.0
    %3840 = vmatprep.subr.mxu0 0.0
    %3841 = vmatpush2.msra.mxu0 0.0
    %3842 = vmatprep.subr.mxu0 0.0
    %3843 = vmatpush2.msra.mxu0 0.0
    %3844 = vmatprep.subr.mxu0 0.0
    %3845 = vmatpush2.msra.mxu0 0.0
    %3846 = vmatprep.subr.mxu0 0.0
    %3847 = vmatpush2.msra.mxu0 0.0
    %3848 = vmatprep.subr.mxu0 0.0
    %3849 = vmatpush2.msra.mxu0 0.0
    %3850 = vmatprep.subr.mxu0 0.0
    %3851 = vmatpush2.msra.mxu0 0.0
    %3852 = vmatprep.subr.mxu0 0.0
    %3853 = vmatpush2.msra.mxu0 0.0
    %3854 = vmatprep.subr.mxu0 0.0
    %3855 = vmatpush2.msra.mxu0 0.0
    %3856 = vmatprep.subr.mxu0 0.0
    %3857 = vmatpush2.msra.mxu0 0.0
    %3858 = vmatprep.subr.mxu0 0.0
    %3859 = vmatpush2.msra.mxu0 0.0
    %3860 = vmatprep.subr.mxu0 0.0
    %3861 = vmatpush2.msra.mxu0 0.0
    %3862 = vmatprep.subr.mxu0 0.0
    %3863 = vmatpush2.msra.mxu0 0.0
    %3864 = vmatprep.mubr.f32.mxu0 0.0
    %3865 = vmatmul.mubr.f32.gmra.mxu0 %v3798
    %v3866 = vpop.f32.mrf.mxu0
    %v3867 = vadd.f32 0.0, %v3866
    %v3868 = vpop.f32.mrf.mxu0
    %3869 = vdwg.mxu0
    %vm3870 = vcmask 254976
    %3871 = vst.msk [vmem:[#allocation2] sm:$0x3] %vm3870, %v3867
    %3873 = vmatprep.subr.mxu0 0.0
    %3874 = vmatpush1.msra.mxu0 0.0
    %3875 = vmatprep.subr.mxu0 0.0
    %3876 = vmatpush1.msra.mxu0 0.0
    %3877 = vmatprep.subr.mxu0 0.0
    %3878 = vmatpush1.msra.mxu0 0.0
    %3879 = vmatprep.subr.mxu0 0.0
    %3880 = vmatpush1.msra.mxu0 0.0
    %3881 = vmatprep.subr.mxu0 0.0
    %3882 = vmatpush1.msra.mxu0 0.0
    %3883 = vmatprep.subr.mxu0 0.0
    %3884 = vmatpush1.msra.mxu0 0.0
    %3885 = vmatprep.subr.mxu0 0.0
    %3886 = vmatpush1.msra.mxu0 0.0
    %3887 = vmatprep.subr.mxu0 0.0
    %3888 = vmatpush1.msra.mxu0 0.0
    %3889 = vmatprep.subr.mxu0 0.0
    %3890 = vmatpush1.msra.mxu0 0.0
    %3891 = vmatprep.subr.mxu0 0.0
    %3892 = vmatpush1.msra.mxu0 0.0
    %3893 = vmatprep.subr.mxu0 0.0
    %3894 = vmatpush1.msra.mxu0 0.0
    %3895 = vmatprep.subr.mxu0 0.0
    %3896 = vmatpush1.msra.mxu0 0.0
    %3897 = vmatprep.subr.mxu0 0.0
    %3898 = vmatpush1.msra.mxu0 0.0
    %3899 = vmatprep.subr.mxu0 0.0
    %3900 = vmatpush1.msra.mxu0 0.0
    %3901 = vmatprep.subr.mxu0 0.0
    %3902 = vmatpush1.msra.mxu0 0.0
    %3903 = vmatprep.subr.mxu0 0.0
    %3904 = vmatpush1.msra.mxu0 %v3056
    %3905 = vmatprep.subr.mxu0 0.0
    %3906 = vmatpush2.msra.mxu0 0.0
    %3907 = vmatprep.subr.mxu0 0.0
    %3908 = vmatpush2.msra.mxu0 0.0
    %3909 = vmatprep.subr.mxu0 0.0
    %3910 = vmatpush2.msra.mxu0 0.0
    %3911 = vmatprep.subr.mxu0 0.0
    %3912 = vmatpush2.msra.mxu0 0.0
    %3913 = vmatprep.subr.mxu0 0.0
    %3914 = vmatpush2.msra.mxu0 0.0
    %3915 = vmatprep.subr.mxu0 0.0
    %3916 = vmatpush2.msra.mxu0 0.0
    %3917 = vmatprep.subr.mxu0 0.0
    %3918 = vmatpush2.msra.mxu0 0.0
    %3919 = vmatprep.subr.mxu0 0.0
    %3920 = vmatpush2.msra.mxu0 0.0
    %3921 = vmatprep.subr.mxu0 0.0
    %3922 = vmatpush2.msra.mxu0 0.0
    %3923 = vmatprep.subr.mxu0 0.0
    %3924 = vmatpush2.msra.mxu0 0.0
    %3925 = vmatprep.subr.mxu0 0.0
    %3926 = vmatpush2.msra.mxu0 0.0
    %3927 = vmatprep.subr.mxu0 0.0
    %3928 = vmatpush2.msra.mxu0 0.0
    %3929 = vmatprep.subr.mxu0 0.0
    %3930 = vmatpush2.msra.mxu0 0.0
    %3931 = vmatprep.subr.mxu0 0.0
    %3932 = vmatpush2.msra.mxu0 0.0
    %3933 = vmatprep.subr.mxu0 0.0
    %3934 = vmatpush2.msra.mxu0 0.0
    %3935 = vmatprep.subr.mxu0 0.0
    %3936 = vmatpush2.msra.mxu0 0.0
    %3937 = vmatprep.mubr.f32.mxu0 0.0
    %3938 = vmatmul.mubr.f32.gmra.mxu0 %v3798
    %v3939 = vpop.f32.mrf.mxu0
    %v3940 = vadd.f32 0.0, %v3939
    %v3941 = vpop.f32.mrf.mxu0
    %3942 = vdwg.mxu0
    %vm3943 = vcmask 25600
    %3944 = vst.msk [vmem:[#allocation4] sm:$0x3] %vm3943, %v3940
    // Predicated region
    $region26: #{concare_forward.1} parent=1 // pred_check
      _
    $region27: #{concare_forward.1} parent=1 // pred_check_branch
      %3946 = sbr.rel (0) target = $region29
    $region28: #{concare_forward.1} parent=1 // pred_region
      %s3948 = ssub.s32 32, 32
      %3949 = vsyncadd [#allocation3], %s3948
      %s3951 = sshll.u32 [#allocation2], 4
      %s3952 = int_to_ptr.vmem [resolvable:$true] %s3951
      %3954 = dma.vmem_to_hbm [thread:$0]  %s3952, 32, %s6, [#allocation3]
    $region29: #{concare_forward.1} parent=1 // pred_fallthru
      _
    // Predicated region
    $region30: #{concare_forward.1} parent=1 // pred_check
      _
    $region31: #{concare_forward.1} parent=1 // pred_check_branch
      %3956 = sbr.rel (0) target = $region33
    $region32: #{concare_forward.1} parent=1 // pred_region
      %s3958 = ssub.s32 32, 32
      %3959 = vsyncadd [#allocation5], %s3958
      %s3961 = sshll.u32 [#allocation4], 4
      %s3962 = int_to_ptr.vmem [resolvable:$true] %s3961
      %3964 = dma.vmem_to_hbm [thread:$0]  %s3962, 32, %s7, [#allocation5]
    $region33: #{concare_forward.1} parent=1 // pred_fallthru
      _
    // Predicated region
    $region34: #{concare_forward.1} parent=1 // pred_check
      _
    $region35: #{concare_forward.1} parent=1 // pred_check_branch
      %3966 = sbr.rel (0) target = $region37
    $region36: #{concare_forward.1} parent=1 // pred_region
      %s3968 = ssub.s32 16, 16
      %3969 = vsyncadd [#allocation5], %s3968
      %s3971 = sshll.u32 [#allocation6], 4
      %s3972 = int_to_ptr.vmem [resolvable:$true] %s3971
      %3974 = dma.vmem_to_hbm [thread:$0]  %s3972, 16, %s8, [#allocation5]
    $region37: #{concare_forward.1} parent=1 // pred_fallthru
      _
    // Predicated region
    $region38: #{concare_forward.1} parent=1 // pred_check
      _
    $region39: #{concare_forward.1} parent=1 // pred_check_branch
      %3976 = sbr.rel (0) target = $region41
    $region40: #{concare_forward.1} parent=1 // pred_region
      %3977 = dma.done [#allocation3], 32
    $region41: #{concare_forward.1} parent=1 // pred_fallthru
      _
    // Predicated region
    $region42: #{concare_forward.1} parent=1 // pred_check
      _
    $region43: #{concare_forward.1} parent=1 // pred_check_branch
      %3979 = sbr.rel (0) target = $region45
    $region44: #{concare_forward.1} parent=1 // pred_region
      %3980 = dma.done [#allocation5], 32
    $region45: #{concare_forward.1} parent=1 // pred_fallthru
      _
    // Predicated region
    $region46: #{concare_forward.1} parent=1 // pred_check
      _
    $region47: #{concare_forward.1} parent=1 // pred_check_branch
      %3982 = sbr.rel (0) target = $region49
    $region48: #{concare_forward.1} parent=1 // pred_region
      %3983 = dma.done [#allocation5], 16
    $region49: #{concare_forward.1} parent=1 // pred_fallthru
      _
    %3984 = vsyncpa [#allocation3], 1
    %3985 = vsyncpa [#allocation5], 1

</llo_original>
